<compile_context>
chip_gen: v5e
topology: v5e:2x2
jax: 0.10.0
libtpu: 0.0.40
codegen_flags: <defaults>
</compile_context>

<pallas_src>
import functools

import jax
import jax.numpy as jnp
from jax.experimental import pallas as pl
from jax.experimental.pallas import tpu as pltpu


# ----------------------------- in-kernel helpers -----------------------------

def _layernorm(x, eps=1e-6):
    # nn.LayerNorm(elementwise_affine=False, eps=1e-6): biased variance.
    mu = jnp.mean(x, axis=-1, keepdims=True)
    var = jnp.mean((x - mu) ** 2, axis=-1, keepdims=True)
    return (x - mu) * jax.lax.rsqrt(var + eps)


def _gelu_tanh(x):
    # nn.GELU(approximate='tanh')
    c = 0.7978845608028654  # sqrt(2/pi)
    return 0.5 * x * (1.0 + jnp.tanh(c * (x + 0.044715 * x * x * x)))


# --------------------- kernel 1: LN + modulate + QKV proj --------------------

def _qkv_kernel(x_ref, shift_ref, scale_ref,
                wq_ref, wk_ref, wv_ref, bq_ref, bk_ref, bv_ref,
                q_ref, k_ref, v_ref, *, sm_scale):
    x = x_ref[0].astype(jnp.float32)                       # (TQ, D)
    shift = shift_ref[0].astype(jnp.float32)               # (1, D)
    scale = scale_ref[0].astype(jnp.float32)               # (1, D)

    h = _layernorm(x) * (1.0 + scale) + shift              # modulate(norm1(x))
    hc = h.astype(wq_ref.dtype)                            # bf16 MXU operand

    q = jnp.dot(hc, wq_ref[...], preferred_element_type=jnp.float32) + bq_ref[...]
    k = jnp.dot(hc, wk_ref[...], preferred_element_type=jnp.float32) + bk_ref[...]
    v = jnp.dot(hc, wv_ref[...], preferred_element_type=jnp.float32) + bv_ref[...]

    # Fold the softmax scale into q once (saves an (N, N)-sized multiply later).
    q_ref[0] = (q * sm_scale).astype(q_ref.dtype)
    k_ref[0] = k.astype(k_ref.dtype)
    v_ref[0] = v.astype(v_ref.dtype)


# ------ kernel 2: flash attention + out-proj + first residual (fused) --------

def _attn_proj_kernel(x_ref, gate_ref, q_ref, k_ref, v_ref, pw_ref, pb_ref,
                      o_ref, m_sc, l_sc, acc_sc, *, num_heads):
    ki = pl.program_id(2)
    D = q_ref.shape[2]
    hd = D // num_heads

    @pl.when(ki == 0)
    def _():
        m_sc[...] = jnp.full(m_sc.shape, -jnp.inf, dtype=jnp.float32)
        l_sc[...] = jnp.zeros(l_sc.shape, dtype=jnp.float32)
        acc_sc[...] = jnp.zeros(acc_sc.shape, dtype=jnp.float32)

    q = q_ref[0]                                           # (TQ, D), scale folded in
    k = k_ref[0]                                           # (TK, D)
    v = v_ref[0]                                           # (TK, D)

    # Head split in-VMEM via lane slices; online softmax per head with a
    # merged (TQ, D) f32 numerator so the epilogue store is lane-dense.
    for h in range(num_heads):
        sl = slice(h * hd, (h + 1) * hd)
        s = jax.lax.dot_general(q[:, sl], k[:, sl],
                                (((1,), (1,)), ((), ())),
                                preferred_element_type=jnp.float32)   # (TQ, TK)
        m_prev = m_sc[h]                                   # (TQ, 1)
        m_new = jnp.maximum(m_prev, jnp.max(s, axis=-1, keepdims=True))
        alpha = jnp.exp(m_prev - m_new)
        p = jnp.exp(s - m_new)
        l_sc[h] = alpha * l_sc[h] + jnp.sum(p, axis=-1, keepdims=True)
        acc_sc[:, sl] = alpha * acc_sc[:, sl] + jnp.dot(
            p.astype(v.dtype), v[:, sl], preferred_element_type=jnp.float32)
        m_sc[h] = m_new

    @pl.when(ki == pl.num_programs(2) - 1)
    def _():
        # Per-head softmax normalization in place, then merged lane-dense out.
        for h in range(num_heads):
            sl = slice(h * hd, (h + 1) * hd)
            acc_sc[:, sl] = acc_sc[:, sl] / l_sc[h]
        attn = acc_sc[...].astype(pw_ref.dtype)            # (TQ, D) bf16
        proj = jnp.dot(attn, pw_ref[...],
                       preferred_element_type=jnp.float32) + pb_ref[...]
        x = x_ref[0].astype(jnp.float32)
        gate = gate_ref[0].astype(jnp.float32)
        o_ref[0] = (x + gate * proj).astype(o_ref.dtype)   # first residual


# ------------ kernel 3: LN + modulate + MLP + second residual ----------------

def _mlp_kernel(x_ref, shift_ref, scale_ref, gate_ref,
                fc1_w_ref, fc1_b_ref, fc2_w_ref, fc2_b_ref, o_ref):
    x = x_ref[0].astype(jnp.float32)                       # (TQ, D) = x1 tile
    shift = shift_ref[0].astype(jnp.float32)
    scale = scale_ref[0].astype(jnp.float32)
    gate = gate_ref[0].astype(jnp.float32)

    h = _layernorm(x) * (1.0 + scale) + shift              # modulate(norm2(x1))
    h1 = jnp.dot(h.astype(fc1_w_ref.dtype), fc1_w_ref[...],
                 preferred_element_type=jnp.float32) + fc1_b_ref[...]
    h1 = _gelu_tanh(h1)
    h2 = jnp.dot(h1.astype(fc2_w_ref.dtype), fc2_w_ref[...],
                 preferred_element_type=jnp.float32) + fc2_b_ref[...]
    o_ref[0] = (x + gate * h2).astype(o_ref.dtype)         # second residual


# --------------------------------- wrapper -----------------------------------

_HAS_BUFFERED = hasattr(pl, "Buffered")
_WEIGHT_BUFS = 1 if _HAS_BUFFERED else 2


def _const_spec(shape):
    """Constant-index (resident) block spec; single-buffered if supported."""
    zero = (0,) * len(shape)
    index_map = lambda *_: zero
    if _HAS_BUFFERED:
        try:
            return pl.BlockSpec(shape, index_map, pipeline_mode=pl.Buffered(1))
        except TypeError:
            pass  # older BlockSpec signature without pipeline_mode
    return pl.BlockSpec(shape, index_map)


def _physical_vmem_bytes():
    try:
        return int(pltpu.get_tpu_info().vmem_capacity_bytes)
    except Exception:
        return 64 << 20    # conservative: v7x per-TensorCore VMEM


def _vmem_limit(stream_bytes, resident_bytes):
    # stream_bytes: per-step pipelined blocks (double-buffered by Pallas).
    # resident_bytes: constant-index weights (x buffer count) + scratch.
    phys = _physical_vmem_bytes()
    cap = max(phys - (12 << 20), 32 << 20)                 # headroom for compiler scratch
    need = 2 * stream_bytes + resident_bytes + (8 << 20)
    return int(min(max(need, 32 << 20), cap))


def _pick_tile(n, candidates):
    for t in candidates:
        if t <= n and n % t == 0:
            return t
    return n   # full extent is always a legal block


def dit_block(x, c, params, num_heads, *, tq_mlp=None, tq_attn=None, tk=None,
              compute_dtype=jnp.bfloat16):
    """DiTBlock forward: x (B, N, D), c (B, D) -> (B, N, D)."""
    B, N, D = x.shape
    assert D % num_heads == 0, "hidden_size must be divisible by num_heads"
    hd = D // num_heads
    Hm = params["fc1_w"].shape[1]
    sm_scale = float(hd) ** -0.5

    # Decoupled token tiles: streaming (QKV/MLP) vs attention.
    tq_mlp = tq_mlp or _pick_tile(N, (512, 256, 128, 64, 32, 16, 8))
    tq_attn = tq_attn or _pick_tile(N, (256, 128, 64, 32, 16, 8))
    tk = tk or _pick_tile(N, (256, 128, 64, 32, 16, 8))
    nq1 = N // tq_mlp
    nqa, nk = N // tq_attn, N // tk

    it_x = jnp.dtype(x.dtype).itemsize
    it_c = jnp.dtype(compute_dtype).itemsize

    # ---- adaLN modulation: tiny (B, D) x (D, 6D) matmul, hoisted to XLA ------
    ada = (jax.nn.silu(c.astype(jnp.float32))
           @ params["ada_w"].astype(jnp.float32)
           + params["ada_b"].astype(jnp.float32))                      # (B, 6D)
    (shift_msa, scale_msa, gate_msa,
     shift_mlp, scale_mlp, gate_mlp) = [m.reshape(B, 1, D)
                                        for m in jnp.split(ada, 6, axis=-1)]

    # ---- weights: split fused QKV, cast matmul weights to compute dtype -----
    wq, wk, wv = [w.astype(compute_dtype)
                  for w in jnp.split(params["qkv_w"], 3, axis=1)]
    bq, bk, bv = [b.astype(jnp.float32)
                  for b in jnp.split(params["qkv_b"], 3, axis=1)]
    proj_w = params["proj_w"].astype(compute_dtype)
    proj_b = params["proj_b"].astype(jnp.float32)
    fc1_w = params["fc1_w"].astype(compute_dtype)
    fc1_b = params["fc1_b"].astype(jnp.float32)
    fc2_w = params["fc2_w"].astype(compute_dtype)
    fc2_b = params["fc2_b"].astype(jnp.float32)

    # ------------------- kernel 1: LN + modulate + QKV -----------------------
    k1_stream = tq_mlp * D * (it_x + 3 * it_c) + 2 * D * 4
    k1_res = 3 * (D * D * it_c + D * 4) * _WEIGHT_BUFS
    q, k, v = pl.pallas_call(
        functools.partial(_qkv_kernel, sm_scale=sm_scale),
        out_shape=[jax.ShapeDtypeStruct((B, N, D), compute_dtype)] * 3,
        grid_spec=pltpu.PrefetchScalarGridSpec(
            num_scalar_prefetch=0,
            grid=(B, nq1),
            in_specs=[
                pl.BlockSpec((1, tq_mlp, D), lambda b, i: (b, i, 0)),   # x tile
                pl.BlockSpec((1, 1, D), lambda b, i: (b, 0, 0)),        # shift_msa
                pl.BlockSpec((1, 1, D), lambda b, i: (b, 0, 0)),        # scale_msa
                _const_spec(wq.shape), _const_spec(wk.shape), _const_spec(wv.shape),
                _const_spec(bq.shape), _const_spec(bk.shape), _const_spec(bv.shape),
            ],
            out_specs=[pl.BlockSpec((1, tq_mlp, D), lambda b, i: (b, i, 0))] * 3,
        ),
        compiler_params=pltpu.CompilerParams(
            dimension_semantics=("parallel", "parallel"),
            vmem_limit_bytes=_vmem_limit(k1_stream, k1_res)),
    )(x, shift_msa, scale_msa, wq, wk, wv, bq, bk, bv)

    # ----- kernel 2: flash attention + out-proj + first residual (fused) -----
    k2_stream = tq_attn * D * (2 * it_x + it_c) + 2 * tk * D * it_c + D * 4
    k2_res = ((D * D * it_c + D * 4) * _WEIGHT_BUFS
              + tq_attn * D * 4                              # merged numerator
              + 2 * num_heads * tq_attn * 128 * 4)           # m/l (lane-padded)
    x1 = pl.pallas_call(
        functools.partial(_attn_proj_kernel, num_heads=num_heads),
        out_shape=jax.ShapeDtypeStruct((B, N, D), x.dtype),
        grid_spec=pltpu.PrefetchScalarGridSpec(
            num_scalar_prefetch=0,
            grid=(B, nqa, nk),
            in_specs=[
                pl.BlockSpec((1, tq_attn, D), lambda b, i, j: (b, i, 0)),  # x
                pl.BlockSpec((1, 1, D), lambda b, i, j: (b, 0, 0)),        # gate_msa
                pl.BlockSpec((1, tq_attn, D), lambda b, i, j: (b, i, 0)),  # q
                pl.BlockSpec((1, tk, D), lambda b, i, j: (b, j, 0)),       # k
                pl.BlockSpec((1, tk, D), lambda b, i, j: (b, j, 0)),       # v
                _const_spec(proj_w.shape), _const_spec(proj_b.shape),
            ],
            out_specs=pl.BlockSpec((1, tq_attn, D), lambda b, i, j: (b, i, 0)),
            scratch_shapes=[
                pltpu.VMEM((num_heads, tq_attn, 1), jnp.float32),  # running max
                pltpu.VMEM((num_heads, tq_attn, 1), jnp.float32),  # running denom
                pltpu.VMEM((tq_attn, D), jnp.float32),             # merged numerator
            ],
        ),
        compiler_params=pltpu.CompilerParams(
            dimension_semantics=("parallel", "parallel", "arbitrary"),
            vmem_limit_bytes=_vmem_limit(k2_stream, k2_res)),
    )(x, gate_msa, q, k, v, proj_w, proj_b)

    # ----------- kernel 3: LN + modulate + MLP + second residual -------------
    k3_stream = tq_mlp * D * 2 * it_x + 3 * D * 4
    k3_res = (((D * Hm + Hm * D) * it_c + (Hm + D) * 4) * _WEIGHT_BUFS
              + tq_mlp * Hm * 4)                             # f32 hidden temp
    out = pl.pallas_call(
        _mlp_kernel,
        out_shape=jax.ShapeDtypeStruct((B, N, D), x.dtype),
        grid_spec=pltpu.PrefetchScalarGridSpec(
            num_scalar_prefetch=0,
            grid=(B, nq1),
            in_specs=[
                pl.BlockSpec((1, tq_mlp, D), lambda b, i: (b, i, 0)),   # x1 tile
                pl.BlockSpec((1, 1, D), lambda b, i: (b, 0, 0)),        # shift_mlp
                pl.BlockSpec((1, 1, D), lambda b, i: (b, 0, 0)),        # scale_mlp
                pl.BlockSpec((1, 1, D), lambda b, i: (b, 0, 0)),        # gate_mlp
                _const_spec(fc1_w.shape), _const_spec(fc1_b.shape),
                _const_spec(fc2_w.shape), _const_spec(fc2_b.shape),
            ],
            out_specs=pl.BlockSpec((1, tq_mlp, D), lambda b, i: (b, i, 0)),
        ),
        compiler_params=pltpu.CompilerParams(
            dimension_semantics=("parallel", "parallel"),
            vmem_limit_bytes=_vmem_limit(k3_stream, k3_res)),
    )(x1, shift_mlp, scale_mlp, gate_mlp, fc1_w, fc1_b, fc2_w, fc2_b)
    return out


# ---------------------------- pure-JAX reference ------------------------------

def dit_block_ref(x, c, p, num_heads):
    B, N, D = x.shape
    hd = D // num_heads
    ada = jax.nn.silu(c) @ p["ada_w"] + p["ada_b"]
    (shift_msa, scale_msa, gate_msa,
     shift_mlp, scale_mlp, gate_mlp) = jnp.split(ada, 6, axis=-1)

    def modulate(xx, shift, scale):
        return xx * (1.0 + scale[:, None, :]) + shift[:, None, :]

    h = modulate(_layernorm(x), shift_msa, scale_msa)
    qkv = h @ p["qkv_w"] + p["qkv_b"]
    q, k, v = jnp.split(qkv, 3, axis=-1)
    q = q.reshape(B, N, num_heads, hd).transpose(0, 2, 1, 3)
    k = k.reshape(B, N, num_heads, hd).transpose(0, 2, 1, 3)
    v = v.reshape(B, N, num_heads, hd).transpose(0, 2, 1, 3)
    logits = jnp.einsum("bhqd,bhkd->bhqk", q, k) * (hd ** -0.5)
    attn = jax.nn.softmax(logits, axis=-1)
    o = jnp.einsum("bhqk,bhkd->bhqd", attn, v).transpose(0, 2, 1, 3).reshape(B, N, D)
    o = o @ p["proj_w"] + p["proj_b"]
    x1 = x + gate_msa[:, None, :] * o

    h2 = modulate(_layernorm(x1), shift_mlp, scale_mlp)
    h2 = _gelu_tanh(h2 @ p["fc1_w"] + p["fc1_b"])
    h2 = h2 @ p["fc2_w"] + p["fc2_b"]
    return x1 + gate_mlp[:, None, :] * h2


# ----------------------------------- main -------------------------------------

if __name__ == "__main__":
    B, N, D = 2, 512, 128          # small, but big enough to exercise tiling
    num_heads = 4
    mlp_ratio = 4.0
    Hm = int(D * mlp_ratio)

    key = jax.random.PRNGKey(0)
    ks = jax.random.split(key, 12)

    def w(kk, shape, s=0.02):
        return (s * jax.random.normal(kk, shape)).astype(jnp.float32)

    params = {
        "ada_w":  w(ks[0], (D, 6 * D)),
        "ada_b":  w(ks[1], (1, 6 * D)),
        "qkv_w":  w(ks[2], (D, 3 * D)),
        "qkv_b":  w(ks[3], (1, 3 * D)),
        "proj_w": w(ks[4], (D, D)),
        "proj_b": w(ks[5], (1, D)),
        "fc1_w":  w(ks[6], (D, Hm)),
        "fc1_b":  w(ks[7], (1, Hm)),
        "fc2_w":  w(ks[8], (Hm, D)),
        "fc2_b":  w(ks[9], (1, D)),
    }

    x = jax.random.normal(ks[10], (B, N, D), dtype=jnp.float32)
    c = jax.random.normal(ks[11], (B, D), dtype=jnp.float32)

    out = dit_block(x, c, params, num_heads)
    out = jax.block_until_ready(out)

    ref = dit_block_ref(x, c, params, num_heads)
    assert out.shape == (B, N, D)
    err = float(jnp.max(jnp.abs(out - ref)))
    assert jnp.allclose(out, ref, atol=3e-3, rtol=3e-3), f"max abs diff {err}"

    print("KERNEL_OK")
</pallas_src>

<mosaic_0001>
module attributes {stable_mosaic.version = 11 : i64} {
  func.func @_qkv_kernel(%arg0: i32, %arg1: i32, %arg2: memref<1x512x128xf32, #tpu.memory_space<vmem>>, %arg3: memref<1x1x128xf32, #tpu.memory_space<vmem>>, %arg4: memref<1x1x128xf32, #tpu.memory_space<vmem>>, %arg5: memref<128x128xbf16, #tpu.memory_space<vmem>>, %arg6: memref<128x128xbf16, #tpu.memory_space<vmem>>, %arg7: memref<128x128xbf16, #tpu.memory_space<vmem>>, %arg8: memref<1x128xf32, #tpu.memory_space<vmem>>, %arg9: memref<1x128xf32, #tpu.memory_space<vmem>>, %arg10: memref<1x128xf32, #tpu.memory_space<vmem>>, %arg11: memref<1x512x128xbf16, #tpu.memory_space<vmem>>, %arg12: memref<1x512x128xbf16, #tpu.memory_space<vmem>>, %arg13: memref<1x512x128xbf16, #tpu.memory_space<vmem>>) attributes {dimension_semantics = [#tpu.dimension_semantics<parallel>, #tpu.dimension_semantics<parallel>], iteration_bounds = array<i64: 2, 1>, scalar_prefetch = 0 : i64, scratch_operands = 0 : i64, tpu.core_type = #tpu.core_type<tc>, window_params = [{transform_indices = @transform_0, window_bounds = array<i64: 1, 512, 128>}, {transform_indices = @transform_1, window_bounds = array<i64: 1, 1, 128>}, {transform_indices = @transform_2, window_bounds = array<i64: 1, 1, 128>}, {pipeline_mode = #tpu.pipeline_mode<synchronous>, transform_indices = @transform_3, window_bounds = array<i64: 128, 128>}, {pipeline_mode = #tpu.pipeline_mode<synchronous>, transform_indices = @transform_4, window_bounds = array<i64: 128, 128>}, {pipeline_mode = #tpu.pipeline_mode<synchronous>, transform_indices = @transform_5, window_bounds = array<i64: 128, 128>}, {pipeline_mode = #tpu.pipeline_mode<synchronous>, transform_indices = @transform_6, window_bounds = array<i64: 1, 128>}, {pipeline_mode = #tpu.pipeline_mode<synchronous>, transform_indices = @transform_7, window_bounds = array<i64: 1, 128>}, {pipeline_mode = #tpu.pipeline_mode<synchronous>, transform_indices = @transform_8, window_bounds = array<i64: 1, 128>}, {transform_indices = @transform_9, window_bounds = array<i64: 1, 512, 128>}, {transform_indices = @transform_10, window_bounds = array<i64: 1, 512, 128>}, {transform_indices = @transform_11, window_bounds = array<i64: 1, 512, 128>}]} {
    %c0 = arith.constant 0 : index
    %c0_0 = arith.constant 0 : index
    %c0_1 = arith.constant 0 : index
    %0 = vector.load %arg2[%c0, %c0_0, %c0_1] : memref<1x512x128xf32, #tpu.memory_space<vmem>>, vector<1x512x128xf32>
    %1 = vector.shape_cast %0 : vector<1x512x128xf32> to vector<512x128xf32>
    %c0_2 = arith.constant 0 : index
    %c0_3 = arith.constant 0 : index
    %c0_4 = arith.constant 0 : index
    %2 = vector.load %arg3[%c0_2, %c0_3, %c0_4] : memref<1x1x128xf32, #tpu.memory_space<vmem>>, vector<1x1x128xf32>
    %3 = vector.shape_cast %2 : vector<1x1x128xf32> to vector<1x128xf32>
    %c0_5 = arith.constant 0 : index
    %c0_6 = arith.constant 0 : index
    %c0_7 = arith.constant 0 : index
    %4 = vector.load %arg4[%c0_5, %c0_6, %c0_7] : memref<1x1x128xf32, #tpu.memory_space<vmem>>, vector<1x1x128xf32>
    %5 = vector.shape_cast %4 : vector<1x1x128xf32> to vector<1x128xf32>
    %cst = arith.constant dense<0.000000e+00> : vector<512xf32>
    %6 = vector.multi_reduction <add>, %1, %cst [1] : vector<512x128xf32> to vector<512xf32>
    %7 = vector.shape_cast %6 : vector<512xf32> to vector<512x1xf32>
    %cst_8 = arith.constant 1.280000e+02 : f32
    %8 = vector.broadcast %cst_8 : f32 to vector<512x1xf32>
    %9 = arith.divf %7, %8 : vector<512x1xf32>
    %10 = vector.broadcast %9 : vector<512x1xf32> to vector<512x128xf32>
    %11 = arith.subf %1, %10 : vector<512x128xf32>
    %12 = arith.mulf %11, %11 : vector<512x128xf32>
    %cst_9 = arith.constant dense<0.000000e+00> : vector<512xf32>
    %13 = vector.multi_reduction <add>, %12, %cst_9 [1] : vector<512x128xf32> to vector<512xf32>
    %14 = vector.shape_cast %13 : vector<512xf32> to vector<512x1xf32>
    %cst_10 = arith.constant 1.280000e+02 : f32
    %15 = vector.broadcast %cst_10 : f32 to vector<512x1xf32>
    %16 = arith.divf %14, %15 : vector<512x1xf32>
    %17 = vector.broadcast %9 : vector<512x1xf32> to vector<512x128xf32>
    %18 = arith.subf %1, %17 : vector<512x128xf32>
    %cst_11 = arith.constant 9.99999997E-7 : f32
    %19 = vector.broadcast %cst_11 : f32 to vector<512x1xf32>
    %20 = arith.addf %16, %19 : vector<512x1xf32>
    %21 = math.rsqrt %20 : vector<512x1xf32>
    %22 = vector.broadcast %21 : vector<512x1xf32> to vector<512x128xf32>
    %23 = arith.mulf %18, %22 : vector<512x128xf32>
    %cst_12 = arith.constant 1.000000e+00 : f32
    %24 = vector.broadcast %cst_12 : f32 to vector<1x128xf32>
    %25 = arith.addf %24, %5 : vector<1x128xf32>
    %26 = vector.broadcast %25 : vector<1x128xf32> to vector<512x128xf32>
    %27 = arith.mulf %23, %26 : vector<512x128xf32>
    %28 = vector.broadcast %3 : vector<1x128xf32> to vector<512x128xf32>
    %29 = arith.addf %27, %28 : vector<512x128xf32>
    %30 = arith.truncf %29 : vector<512x128xf32> to vector<512x128xbf16>
    %c0_13 = arith.constant 0 : index
    %c0_14 = arith.constant 0 : index
    %31 = vector.load %arg5[%c0_13, %c0_14] : memref<128x128xbf16, #tpu.memory_space<vmem>>, vector<128x128xbf16>
    %cst_15 = arith.constant dense<0.000000e+00> : vector<512x128xf32>
    %32 = tpu.matmul %30, %31, %cst_15 {dimension_numbers = #tpu.dot_dimension_numbers<[1], [0], [0], [1], [0, 0, 1, 1], [], []>} : vector<512x128xbf16>, vector<128x128xbf16>, vector<512x128xf32> -> vector<512x128xf32>
    %c0_16 = arith.constant 0 : index
    %c0_17 = arith.constant 0 : index
    %33 = vector.load %arg8[%c0_16, %c0_17] : memref<1x128xf32, #tpu.memory_space<vmem>>, vector<1x128xf32>
    %34 = vector.broadcast %33 : vector<1x128xf32> to vector<512x128xf32>
    %35 = arith.addf %32, %34 : vector<512x128xf32>
    %c0_18 = arith.constant 0 : index
    %c0_19 = arith.constant 0 : index
    %36 = vector.load %arg6[%c0_18, %c0_19] : memref<128x128xbf16, #tpu.memory_space<vmem>>, vector<128x128xbf16>
    %cst_20 = arith.constant dense<0.000000e+00> : vector<512x128xf32>
    %37 = tpu.matmul %30, %36, %cst_20 {dimension_numbers = #tpu.dot_dimension_numbers<[1], [0], [0], [1], [0, 0, 1, 1], [], []>} : vector<512x128xbf16>, vector<128x128xbf16>, vector<512x128xf32> -> vector<512x128xf32>
    %c0_21 = arith.constant 0 : index
    %c0_22 = arith.constant 0 : index
    %38 = vector.load %arg9[%c0_21, %c0_22] : memref<1x128xf32, #tpu.memory_space<vmem>>, vector<1x128xf32>
    %39 = vector.broadcast %38 : vector<1x128xf32> to vector<512x128xf32>
    %40 = arith.addf %37, %39 : vector<512x128xf32>
    %c0_23 = arith.constant 0 : index
    %c0_24 = arith.constant 0 : index
    %41 = vector.load %arg7[%c0_23, %c0_24] : memref<128x128xbf16, #tpu.memory_space<vmem>>, vector<128x128xbf16>
    %cst_25 = arith.constant dense<0.000000e+00> : vector<512x128xf32>
    %42 = tpu.matmul %30, %41, %cst_25 {dimension_numbers = #tpu.dot_dimension_numbers<[1], [0], [0], [1], [0, 0, 1, 1], [], []>} : vector<512x128xbf16>, vector<128x128xbf16>, vector<512x128xf32> -> vector<512x128xf32>
    %c0_26 = arith.constant 0 : index
    %c0_27 = arith.constant 0 : index
    %43 = vector.load %arg10[%c0_26, %c0_27] : memref<1x128xf32, #tpu.memory_space<vmem>>, vector<1x128xf32>
    %44 = vector.broadcast %43 : vector<1x128xf32> to vector<512x128xf32>
    %45 = arith.addf %42, %44 : vector<512x128xf32>
    %cst_28 = arith.constant 0.176776692 : f32
    %46 = vector.broadcast %cst_28 : f32 to vector<512x128xf32>
    %47 = arith.mulf %35, %46 : vector<512x128xf32>
    %48 = arith.truncf %47 : vector<512x128xf32> to vector<512x128xbf16>
    %c0_29 = arith.constant 0 : index
    %c0_30 = arith.constant 0 : index
    %c0_31 = arith.constant 0 : index
    %49 = vector.load %arg11[%c0_29, %c0_30, %c0_31] : memref<1x512x128xbf16, #tpu.memory_space<vmem>>, vector<1x512x128xbf16>
    %50 = vector.shape_cast %49 : vector<1x512x128xbf16> to vector<512x128xbf16>
    %51 = vector.shape_cast %48 : vector<512x128xbf16> to vector<1x512x128xbf16>
    tpu.vector_store %arg11[%c0_29, %c0_30, %c0_31], %51 {strides = array<i32>} : memref<1x512x128xbf16, #tpu.memory_space<vmem>>, vector<1x512x128xbf16>,
    %52 = arith.truncf %40 : vector<512x128xf32> to vector<512x128xbf16>
    %c0_32 = arith.constant 0 : index
    %c0_33 = arith.constant 0 : index
    %c0_34 = arith.constant 0 : index
    %53 = vector.load %arg12[%c0_32, %c0_33, %c0_34] : memref<1x512x128xbf16, #tpu.memory_space<vmem>>, vector<1x512x128xbf16>
    %54 = vector.shape_cast %53 : vector<1x512x128xbf16> to vector<512x128xbf16>
    %55 = vector.shape_cast %52 : vector<512x128xbf16> to vector<1x512x128xbf16>
    tpu.vector_store %arg12[%c0_32, %c0_33, %c0_34], %55 {strides = array<i32>} : memref<1x512x128xbf16, #tpu.memory_space<vmem>>, vector<1x512x128xbf16>,
    %56 = arith.truncf %45 : vector<512x128xf32> to vector<512x128xbf16>
    %c0_35 = arith.constant 0 : index
    %c0_36 = arith.constant 0 : index
    %c0_37 = arith.constant 0 : index
    %57 = vector.load %arg13[%c0_35, %c0_36, %c0_37] : memref<1x512x128xbf16, #tpu.memory_space<vmem>>, vector<1x512x128xbf16>
    %58 = vector.shape_cast %57 : vector<1x512x128xbf16> to vector<512x128xbf16>
    %59 = vector.shape_cast %56 : vector<512x128xbf16> to vector<1x512x128xbf16>
    tpu.vector_store %arg13[%c0_35, %c0_36, %c0_37], %59 {strides = array<i32>} : memref<1x512x128xbf16, #tpu.memory_space<vmem>>, vector<1x512x128xbf16>,
    return
  }
  func.func @transform_0(%arg0: i32, %arg1: i32) -> (i32, i32, i32) {
    %c0_i32 = arith.constant 0 : i32
    %c0_i32_0 = arith.constant 0 : i32
    return %arg0, %arg1, %c0_i32 : i32, i32, i32
  }
  func.func @transform_1(%arg0: i32, %arg1: i32) -> (i32, i32, i32) {
    %c0_i32 = arith.constant 0 : i32
    %c0_i32_0 = arith.constant 0 : i32
    %c0_i32_1 = arith.constant 0 : i32
    return %arg0, %c0_i32, %c0_i32_0 : i32, i32, i32
  }
  func.func @transform_2(%arg0: i32, %arg1: i32) -> (i32, i32, i32) {
    %c0_i32 = arith.constant 0 : i32
    %c0_i32_0 = arith.constant 0 : i32
    %c0_i32_1 = arith.constant 0 : i32
    return %arg0, %c0_i32, %c0_i32_0 : i32, i32, i32
  }
  func.func @transform_3(%arg0: i32, %arg1: i32) -> (i32, i32) {
    %c0_i32 = arith.constant 0 : i32
    %c0_i32_0 = arith.constant 0 : i32
    %c0_i32_1 = arith.constant 0 : i32
    return %c0_i32, %c0_i32_0 : i32, i32
  }
  func.func @transform_4(%arg0: i32, %arg1: i32) -> (i32, i32) {
    %c0_i32 = arith.constant 0 : i32
    %c0_i32_0 = arith.constant 0 : i32
    %c0_i32_1 = arith.constant 0 : i32
    return %c0_i32, %c0_i32_0 : i32, i32
  }
  func.func @transform_5(%arg0: i32, %arg1: i32) -> (i32, i32) {
    %c0_i32 = arith.constant 0 : i32
    %c0_i32_0 = arith.constant 0 : i32
    %c0_i32_1 = arith.constant 0 : i32
    return %c0_i32, %c0_i32_0 : i32, i32
  }
  func.func @transform_6(%arg0: i32, %arg1: i32) -> (i32, i32) {
    %c0_i32 = arith.constant 0 : i32
    %c0_i32_0 = arith.constant 0 : i32
    %c0_i32_1 = arith.constant 0 : i32
    return %c0_i32, %c0_i32_0 : i32, i32
  }
  func.func @transform_7(%arg0: i32, %arg1: i32) -> (i32, i32) {
    %c0_i32 = arith.constant 0 : i32
    %c0_i32_0 = arith.constant 0 : i32
    %c0_i32_1 = arith.constant 0 : i32
    return %c0_i32, %c0_i32_0 : i32, i32
  }
  func.func @transform_8(%arg0: i32, %arg1: i32) -> (i32, i32) {
    %c0_i32 = arith.constant 0 : i32
    %c0_i32_0 = arith.constant 0 : i32
    %c0_i32_1 = arith.constant 0 : i32
    return %c0_i32, %c0_i32_0 : i32, i32
  }
  func.func @transform_9(%arg0: i32, %arg1: i32) -> (i32, i32, i32) {
    %c0_i32 = arith.constant 0 : i32
    %c0_i32_0 = arith.constant 0 : i32
    return %arg0, %arg1, %c0_i32 : i32, i32, i32
  }
  func.func @transform_10(%arg0: i32, %arg1: i32) -> (i32, i32, i32) {
    %c0_i32 = arith.constant 0 : i32
    %c0_i32_0 = arith.constant 0 : i32
    return %arg0, %arg1, %c0_i32 : i32, i32, i32
  }
  func.func @transform_11(%arg0: i32, %arg1: i32) -> (i32, i32, i32) {
    %c0_i32 = arith.constant 0 : i32
    %c0_i32_0 = arith.constant 0 : i32
    return %arg0, %arg1, %c0_i32 : i32, i32, i32
  }
}

</mosaic_0001>

<llo_original>
// kernel: tpu_custom_call.1
$region0: #{tpu_custom_call.1}
  #allocation0 [shape = 'u32[]', space=smem, size = 0x4, offset = 0x4, fixed_abs, tag = 'smem constant byte address 0x4 - core index']
  #allocation1 [shape = 'u32[72,128]{1,0:T(1,128)}', space=vmem, size = 0x9000, scoped, tag = 'internal scratch']
  %s0 = inlined_call_operand.hbm [shape: f32[2,512,128], index: 0, kind: input, shape index: {}]
  %s1 = inlined_call_operand.hbm [shape: f32[2,1,128], index: 1, kind: input, shape index: {}]
  %s2 = inlined_call_operand.hbm [shape: f32[2,1,128], index: 2, kind: input, shape index: {}]
  %s3 = inlined_call_operand.hbm [shape: bf16[128,128], index: 3, kind: input, shape index: {}]
  %s4 = inlined_call_operand.hbm [shape: bf16[128,128], index: 4, kind: input, shape index: {}]
  %s5 = inlined_call_operand.hbm [shape: bf16[128,128], index: 5, kind: input, shape index: {}]
  %s6 = inlined_call_operand.vmem [shape: f32[1,128], index: 6, kind: input, shape index: {}]
  %s7 = inlined_call_operand.vmem [shape: f32[1,128], index: 7, kind: input, shape index: {}]
  %s8 = inlined_call_operand.vmem [shape: f32[1,128], index: 8, kind: input, shape index: {}]
  %s9 = inlined_call_operand.hbm [shape: bf16[2,512,128], index: 9, kind: output, shape index: {0}]
  %s10 = inlined_call_operand.hbm [shape: bf16[2,512,128], index: 10, kind: output, shape index: {1}]
  %s11 = inlined_call_operand.hbm [shape: bf16[2,512,128], index: 11, kind: output, shape index: {2}]
  %12 = xla_tuple %s9, %s10, %s11
  %s13 = sld [smem:[#allocation0]]
  $region109: #{tpu_custom_call.1} parent=0
    _
  %s15 = ssub.s32 1, %s13
  %s16 = scalar_select 0, %s15, %s13
  $region1: #{tpu_custom_call.1} parent=0
    #allocation2 [shape = 'u8[524288]{0}', space=vmem, size = 0x80000, scoped, tag = 'input window, operand 0']
    #allocation3 [shape = 's32[2]{0}', space=sflag, size = 0x8, scoped, tag = 'scoped memory for tpu_custom_call.1']
    #allocation4 [shape = 's32[2]{0}', space=sflag, size = 0x8, scoped, tag = 'scoped memory for tpu_custom_call.1']
    #allocation5 [shape = 'u8[1024]{0}', space=vmem, size = 0x400, scoped, tag = 'input window, operand 1']
    #allocation6 [shape = 's32[2]{0}', space=sflag, size = 0x8, scoped, tag = 'scoped memory for tpu_custom_call.1']
    #allocation7 [shape = 'u8[1024]{0}', space=vmem, size = 0x400, scoped, tag = 'input window, operand 2']
    #allocation8 [shape = 'u8[32768]{0}', space=vmem, size = 0x8000, scoped, tag = 'input window, operand 3, single buffered']
    #allocation9 [shape = 's32[1]{0}', space=sflag, size = 0x4, scoped, tag = 'scoped memory for tpu_custom_call.1']
    #allocation10 [shape = 'u8[32768]{0}', space=vmem, size = 0x8000, scoped, tag = 'input window, operand 4, single buffered']
    #allocation11 [shape = 'u8[32768]{0}', space=vmem, size = 0x8000, scoped, tag = 'input window, operand 5, single buffered']
    #allocation12 [shape = 's32[1]{0}', space=sflag, size = 0x4, scoped, tag = 'scoped memory for tpu_custom_call.1']
    #allocation13 [shape = 'u8[262144]{0}', space=vmem, size = 0x40000, scoped, tag = 'output window, operand 0']
    #allocation14 [shape = 'u8[262144]{0}', space=vmem, size = 0x40000, scoped, tag = 'output window, operand 1']
    #allocation15 [shape = 's32[2]{0}', space=sflag, size = 0x8, scoped, tag = 'scoped memory for tpu_custom_call.1']
    #allocation16 [shape = 'u8[262144]{0}', space=vmem, size = 0x40000, scoped, tag = 'output window, operand 2']
    %17 = vsyncpa [#allocation3], 0
    %s18 = scalar_lea.sflag [#allocation3], 1
    %19 = vsyncpa %s18, 0
    %20 = vsyncpa [#allocation6], 0
    %s21 = scalar_lea.sflag [#allocation6], 1
    %22 = vsyncpa %s21, 0
    %23 = vsyncpa [#allocation9], 0
    %24 = vsyncpa [#allocation12], 0
    %25 = vsyncpa [#allocation4], 0
    %s26 = scalar_lea.sflag [#allocation4], 1
    %27 = vsyncpa %s26, 0
    %28 = vsyncpa [#allocation15], 0
    %s29 = scalar_lea.sflag [#allocation15], 1
    %30 = vsyncpa %s29, 0
    loop: start=0, step=1, limit=4
    $region2: #{tpu_custom_call.1} parent=1 // loop_pre_header
      _
    $region3: #{tpu_custom_call.1} parent=1 // loop_header
      %s32 = sphi 0, %s36
      %p33 = scmp.ge.s32.totalorder %s32, 4
      %s39 = sphi 0, %s51
      %s40 = sphi 0, %s47
      %s41 = sphi 0, %s39
      %s42 = sphi 0, %s40
      %s43 = sphi 0, %s41
      %s44 = sphi 0, %s42
      %s56 = sphi 0, %s58
      %s59 = sphi 0, %s56
      %s60 = sphi 0, %s59
      %s76 = sphi 0, %s60
      %s82 = sphi 0, %s84
      %s85 = sphi 0, %s82
      %s86 = sphi 0, %s85
      %s102 = sphi 0, %s86
      %s108 = sphi 0, %s110
      %s111 = sphi 0, %s108
      %s112 = sphi 0, %s111
      %s128 = sphi 0, %s112
      %s132 = sphi 0, %s132
      %s134 = sphi 0, %s132
      %s135 = sphi 0, %s134
      %s149 = sphi 0, %s135
      %s153 = sphi 0, %s153
      %s155 = sphi 0, %s153
      %s156 = sphi 0, %s155
      %s170 = sphi 0, %s156
      %s174 = sphi 0, %s174
      %s176 = sphi 0, %s174
      %s177 = sphi 0, %s176
      %s191 = sphi 0, %s177
      %s195 = sphi 0, %s195
      %s197 = sphi 0, %s195
      %s198 = sphi 0, %s197
      %s212 = sphi 0, %s198
      %s216 = sphi 0, %s216
      %s218 = sphi 0, %s216
      %s219 = sphi 0, %s218
      %s233 = sphi 0, %s219
      %s237 = sphi 0, %s237
      %s239 = sphi 0, %s237
      %s240 = sphi 0, %s239
      %s254 = sphi 0, %s240
      %s262 = sphi 0, %s264
      %s265 = sphi 0, %s262
      %s266 = sphi 0, %s265
      %s282 = sphi 0, %s266
      %s290 = sphi 0, %s292
      %s293 = sphi 0, %s290
      %s294 = sphi 0, %s293
      %s310 = sphi 0, %s294
      %s318 = sphi 0, %s320
      %s321 = sphi 0, %s318
      %s322 = sphi 0, %s321
      %s338 = sphi 0, %s322
    $region4: #{tpu_custom_call.1} parent=1 // loop_header_branch
      %35 = sbr.rel (%p33) target = $region8
    $region5: #{tpu_custom_call.1} parent=1 // loop_body
      %s37 = ssub.s32 %s32, 1
      %s38 = ssub.s32 %s32, 2
      %s45 = sadd.s32 1, %s40
      %p46 = scmp.ge.s32.totalorder %s45, 1
      %s47 = scalar_select %p46, 0, %s45
      %s48 = sadd.s32 1, %s39
      %s49 = scalar_select %p46, %s48, %s39
      %p50 = scmp.ge.s32.totalorder %s49, 2
      %s51 = scalar_select %p50, 0, %s49
      %s52 = ssub.s32 %s39, %s51
      %s53 = ssub.s32 %s40, %s47
      %s54 = sor.u32 %s52, %s53
      %p55 = scmp.eq.s32.totalorder %s54, 0
      %s57 = sadd.s32 %s56, 1
      %s58 = scalar_select %p55, %s56, %s57
      %p61 = pneg %p55
      %p62 = scmp.eq.s32.totalorder %s32, 1
      %p63 = por %p61, %p62
      %p64 = scmp.ne.s32.totalorder %s56, %s59
      %p65 = scmp.eq.s32.totalorder %s32, 0
      %p66 = por %p64, %p65
      %p67 = scmp.ne.s32.totalorder %s56, %s59
      %p68 = scmp.eq.s32.totalorder %s37, 1
      %p69 = por %p67, %p68
      %p70 = scmp.ne.s32.totalorder %s59, %s60
      %p71 = scmp.eq.s32.totalorder %s37, 0
      %p72 = por %p70, %p71
      %p73 = scmp.ne.s32.totalorder %s59, %s60
      %p74 = scmp.eq.s32.totalorder %s38, 1
      %p75 = por %p73, %p74
      %p77 = scmp.ne.s32.totalorder %s60, %s76
      %p78 = scmp.eq.s32.totalorder %s38, 0
      %p79 = por %p77, %p78
      %s80 = ssub.s32 %s39, %s51
      %p81 = scmp.eq.s32.totalorder %s80, 0
      %s83 = sadd.s32 %s82, 1
      %s84 = scalar_select %p81, %s82, %s83
      %p87 = pneg %p81
      %p88 = scmp.eq.s32.totalorder %s32, 1
      %p89 = por %p87, %p88
      %p90 = scmp.ne.s32.totalorder %s82, %s85
      %p91 = scmp.eq.s32.totalorder %s32, 0
      %p92 = por %p90, %p91
      %p93 = scmp.ne.s32.totalorder %s82, %s85
      %p94 = scmp.eq.s32.totalorder %s37, 1
      %p95 = por %p93, %p94
      %p96 = scmp.ne.s32.totalorder %s85, %s86
      %p97 = scmp.eq.s32.totalorder %s37, 0
      %p98 = por %p96, %p97
      %p99 = scmp.ne.s32.totalorder %s85, %s86
      %p100 = scmp.eq.s32.totalorder %s38, 1
      %p101 = por %p99, %p100
      %p103 = scmp.ne.s32.totalorder %s86, %s102
      %p104 = scmp.eq.s32.totalorder %s38, 0
      %p105 = por %p103, %p104
      %s106 = ssub.s32 %s39, %s51
      %p107 = scmp.eq.s32.totalorder %s106, 0
      %s109 = sadd.s32 %s108, 1
      %s110 = scalar_select %p107, %s108, %s109
      %p113 = pneg %p107
      %p114 = scmp.eq.s32.totalorder %s32, 1
      %p115 = por %p113, %p114
      %p116 = scmp.ne.s32.totalorder %s108, %s111
      %p117 = scmp.eq.s32.totalorder %s32, 0
      %p118 = por %p116, %p117
      %p119 = scmp.ne.s32.totalorder %s108, %s111
      %p120 = scmp.eq.s32.totalorder %s37, 1
      %p121 = por %p119, %p120
      %p122 = scmp.ne.s32.totalorder %s111, %s112
      %p123 = scmp.eq.s32.totalorder %s37, 0
      %p124 = por %p122, %p123
      %p125 = scmp.ne.s32.totalorder %s111, %s112
      %p126 = scmp.eq.s32.totalorder %s38, 1
      %p127 = por %p125, %p126
      %p129 = scmp.ne.s32.totalorder %s112, %s128
      %p130 = scmp.eq.s32.totalorder %s38, 0
      %p131 = por %p129, %p130
      %s133 = sadd.s32 %s132, 1
      %p136 = scmp.eq.s32.totalorder %s32, 1
      %p137 = scmp.ne.s32.totalorder %s132, %s134
      %p138 = scmp.eq.s32.totalorder %s32, 0
      %p139 = por %p137, %p138
      %p140 = scmp.ne.s32.totalorder %s132, %s134
      %p141 = scmp.eq.s32.totalorder %s37, 1
      %p142 = por %p140, %p141
      %p143 = scmp.ne.s32.totalorder %s134, %s135
      %p144 = scmp.eq.s32.totalorder %s37, 0
      %p145 = por %p143, %p144
      %p146 = scmp.ne.s32.totalorder %s134, %s135
      %p147 = scmp.eq.s32.totalorder %s38, 1
      %p148 = por %p146, %p147
      %p150 = scmp.ne.s32.totalorder %s135, %s149
      %p151 = scmp.eq.s32.totalorder %s38, 0
      %p152 = por %p150, %p151
      %s154 = sadd.s32 %s153, 1
      %p157 = scmp.eq.s32.totalorder %s32, 1
      %p158 = scmp.ne.s32.totalorder %s153, %s155
      %p159 = scmp.eq.s32.totalorder %s32, 0
      %p160 = por %p158, %p159
      %p161 = scmp.ne.s32.totalorder %s153, %s155
      %p162 = scmp.eq.s32.totalorder %s37, 1
      %p163 = por %p161, %p162
      %p164 = scmp.ne.s32.totalorder %s155, %s156
      %p165 = scmp.eq.s32.totalorder %s37, 0
      %p166 = por %p164, %p165
      %p167 = scmp.ne.s32.totalorder %s155, %s156
      %p168 = scmp.eq.s32.totalorder %s38, 1
      %p169 = por %p167, %p168
      %p171 = scmp.ne.s32.totalorder %s156, %s170
      %p172 = scmp.eq.s32.totalorder %s38, 0
      %p173 = por %p171, %p172
      %s175 = sadd.s32 %s174, 1
      %p178 = scmp.eq.s32.totalorder %s32, 1
      %p179 = scmp.ne.s32.totalorder %s174, %s176
      %p180 = scmp.eq.s32.totalorder %s32, 0
      %p181 = por %p179, %p180
      %p182 = scmp.ne.s32.totalorder %s174, %s176
      %p183 = scmp.eq.s32.totalorder %s37, 1
      %p184 = por %p182, %p183
      %p185 = scmp.ne.s32.totalorder %s176, %s177
      %p186 = scmp.eq.s32.totalorder %s37, 0
      %p187 = por %p185, %p186
      %p188 = scmp.ne.s32.totalorder %s176, %s177
      %p189 = scmp.eq.s32.totalorder %s38, 1
      %p190 = por %p188, %p189
      %p192 = scmp.ne.s32.totalorder %s177, %s191
      %p193 = scmp.eq.s32.totalorder %s38, 0
      %p194 = por %p192, %p193
      %s196 = sadd.s32 %s195, 1
      %p199 = scmp.eq.s32.totalorder %s32, 1
      %p200 = scmp.ne.s32.totalorder %s195, %s197
      %p201 = scmp.eq.s32.totalorder %s32, 0
      %p202 = por %p200, %p201
      %p203 = scmp.ne.s32.totalorder %s195, %s197
      %p204 = scmp.eq.s32.totalorder %s37, 1
      %p205 = por %p203, %p204
      %p206 = scmp.ne.s32.totalorder %s197, %s198
      %p207 = scmp.eq.s32.totalorder %s37, 0
      %p208 = por %p206, %p207
      %p209 = scmp.ne.s32.totalorder %s197, %s198
      %p210 = scmp.eq.s32.totalorder %s38, 1
      %p211 = por %p209, %p210
      %p213 = scmp.ne.s32.totalorder %s198, %s212
      %p214 = scmp.eq.s32.totalorder %s38, 0
      %p215 = por %p213, %p214
      %s217 = sadd.s32 %s216, 1
      %p220 = scmp.eq.s32.totalorder %s32, 1
      %p221 = scmp.ne.s32.totalorder %s216, %s218
      %p222 = scmp.eq.s32.totalorder %s32, 0
      %p223 = por %p221, %p222
      %p224 = scmp.ne.s32.totalorder %s216, %s218
      %p225 = scmp.eq.s32.totalorder %s37, 1
      %p226 = por %p224, %p225
      %p227 = scmp.ne.s32.totalorder %s218, %s219
      %p228 = scmp.eq.s32.totalorder %s37, 0
      %p229 = por %p227, %p228
      %p230 = scmp.ne.s32.totalorder %s218, %s219
      %p231 = scmp.eq.s32.totalorder %s38, 1
      %p232 = por %p230, %p231
      %p234 = scmp.ne.s32.totalorder %s219, %s233
      %p235 = scmp.eq.s32.totalorder %s38, 0
      %p236 = por %p234, %p235
      %s238 = sadd.s32 %s237, 1
      %p241 = scmp.eq.s32.totalorder %s32, 1
      %p242 = scmp.ne.s32.totalorder %s237, %s239
      %p243 = scmp.eq.s32.totalorder %s32, 0
      %p244 = por %p242, %p243
      %p245 = scmp.ne.s32.totalorder %s237, %s239
      %p246 = scmp.eq.s32.totalorder %s37, 1
      %p247 = por %p245, %p246
      %p248 = scmp.ne.s32.totalorder %s239, %s240
      %p249 = scmp.eq.s32.totalorder %s37, 0
      %p250 = por %p248, %p249
      %p251 = scmp.ne.s32.totalorder %s239, %s240
      %p252 = scmp.eq.s32.totalorder %s38, 1
      %p253 = por %p251, %p252
      %p255 = scmp.ne.s32.totalorder %s240, %s254
      %p256 = scmp.eq.s32.totalorder %s38, 0
      %p257 = por %p255, %p256
      %s258 = ssub.s32 %s39, %s51
      %s259 = ssub.s32 %s40, %s47
      %s260 = sor.u32 %s258, %s259
      %p261 = scmp.eq.s32.totalorder %s260, 0
      %s263 = sadd.s32 %s262, 1
      %s264 = scalar_select %p261, %s262, %s263
      %p267 = pneg %p261
      %p268 = scmp.eq.s32.totalorder %s32, 1
      %p269 = por %p267, %p268
      %p270 = scmp.ne.s32.totalorder %s262, %s265
      %p271 = scmp.eq.s32.totalorder %s32, 0
      %p272 = por %p270, %p271
      %p273 = scmp.ne.s32.totalorder %s262, %s265
      %p274 = scmp.eq.s32.totalorder %s37, 1
      %p275 = por %p273, %p274
      %p276 = scmp.ne.s32.totalorder %s265, %s266
      %p277 = scmp.eq.s32.totalorder %s37, 0
      %p278 = por %p276, %p277
      %p279 = scmp.ne.s32.totalorder %s265, %s266
      %p280 = scmp.eq.s32.totalorder %s38, 1
      %p281 = por %p279, %p280
      %p283 = scmp.ne.s32.totalorder %s266, %s282
      %p284 = scmp.eq.s32.totalorder %s38, 0
      %p285 = por %p283, %p284
      %s286 = ssub.s32 %s39, %s51
      %s287 = ssub.s32 %s40, %s47
      %s288 = sor.u32 %s286, %s287
      %p289 = scmp.eq.s32.totalorder %s288, 0
      %s291 = sadd.s32 %s290, 1
      %s292 = scalar_select %p289, %s290, %s291
      %p295 = pneg %p289
      %p296 = scmp.eq.s32.totalorder %s32, 1
      %p297 = por %p295, %p296
      %p298 = scmp.ne.s32.totalorder %s290, %s293
      %p299 = scmp.eq.s32.totalorder %s32, 0
      %p300 = por %p298, %p299
      %p301 = scmp.ne.s32.totalorder %s290, %s293
      %p302 = scmp.eq.s32.totalorder %s37, 1
      %p303 = por %p301, %p302
      %p304 = scmp.ne.s32.totalorder %s293, %s294
      %p305 = scmp.eq.s32.totalorder %s37, 0
      %p306 = por %p304, %p305
      %p307 = scmp.ne.s32.totalorder %s293, %s294
      %p308 = scmp.eq.s32.totalorder %s38, 1
      %p309 = por %p307, %p308
      %p311 = scmp.ne.s32.totalorder %s294, %s310
      %p312 = scmp.eq.s32.totalorder %s38, 0
      %p313 = por %p311, %p312
      %s314 = ssub.s32 %s39, %s51
      %s315 = ssub.s32 %s40, %s47
      %s316 = sor.u32 %s314, %s315
      %p317 = scmp.eq.s32.totalorder %s316, 0
      %s319 = sadd.s32 %s318, 1
      %s320 = scalar_select %p317, %s318, %s319
      %p323 = pneg %p317
      %p324 = scmp.eq.s32.totalorder %s32, 1
      %p325 = por %p323, %p324
      %p326 = scmp.ne.s32.totalorder %s318, %s321
      %p327 = scmp.eq.s32.totalorder %s32, 0
      %p328 = por %p326, %p327
      %p329 = scmp.ne.s32.totalorder %s318, %s321
      %p330 = scmp.eq.s32.totalorder %s37, 1
      %p331 = por %p329, %p330
      %p332 = scmp.ne.s32.totalorder %s321, %s322
      %p333 = scmp.eq.s32.totalorder %s37, 0
      %p334 = por %p332, %p333
      %p335 = scmp.ne.s32.totalorder %s321, %s322
      %p336 = scmp.eq.s32.totalorder %s38, 1
      %p337 = por %p335, %p336
      %p339 = scmp.ne.s32.totalorder %s322, %s338
      %p340 = scmp.eq.s32.totalorder %s38, 0
      %p341 = por %p339, %p340
      %p342 = scmp.le.s32.totalorder 1, %s32
      %p343 = scmp.lt.s32.totalorder %s32, 3
      %p344 = pnand %p342, %p343
      %p345 = pneg %p344
      // Predicated region
      $region9: #{tpu_custom_call.1} parent=5 // pred_check
        _
      $region10: #{tpu_custom_call.1} parent=5 // pred_check_branch
        %347 = sbr.rel (%p344) target = $region12
      $region11: #{tpu_custom_call.1} parent=5 // pred_region
        %s348 = ssub.s32 %s32, 1
        // Predicated region
        $region13: #{tpu_custom_call.1} parent=11 // pred_check
          %p349 = pneg %p145
        $region14: #{tpu_custom_call.1} parent=11 // pred_check_branch
          %351 = sbr.rel (%p349) target = $region16
        $region15: #{tpu_custom_call.1} parent=11 // pred_region
          %353 = vsyncadd [#allocation9], 0
          %s354 = sshll.u32 %s3, 4
          %s355 = int_to_ptr.hbm [resolvable:$true] %s354
          %s356 = sshll.u32 [#allocation8], 4
          %s357 = int_to_ptr.vmem [resolvable:$true] %s356
          %362 = dma.hbm_to_vmem [thread:$0]  %s355, 1024, %s357, [#allocation9], 64, 64, 4
        $region16: #{tpu_custom_call.1} parent=11 // pred_fallthru
          _
        // Predicated region
        $region17: #{tpu_custom_call.1} parent=11 // pred_check
          %p363 = pneg %p166
        $region18: #{tpu_custom_call.1} parent=11 // pred_check_branch
          %365 = sbr.rel (%p363) target = $region20
        $region19: #{tpu_custom_call.1} parent=11 // pred_region
          %367 = vsyncadd [#allocation9], 0
          %s368 = sshll.u32 %s4, 4
          %s369 = int_to_ptr.hbm [resolvable:$true] %s368
          %s370 = sshll.u32 [#allocation10], 4
          %s371 = int_to_ptr.vmem [resolvable:$true] %s370
          %376 = dma.hbm_to_vmem [thread:$0]  %s369, 1024, %s371, [#allocation9], 64, 64, 4
        $region20: #{tpu_custom_call.1} parent=11 // pred_fallthru
          _
        // Predicated region
        $region21: #{tpu_custom_call.1} parent=11 // pred_check
          %p377 = pneg %p187
        $region22: #{tpu_custom_call.1} parent=11 // pred_check_branch
          %379 = sbr.rel (%p377) target = $region24
        $region23: #{tpu_custom_call.1} parent=11 // pred_region
          %381 = vsyncadd [#allocation12], 0
          %s382 = sshll.u32 %s5, 4
          %s383 = int_to_ptr.hbm [resolvable:$true] %s382
          %s384 = sshll.u32 [#allocation11], 4
          %s385 = int_to_ptr.vmem [resolvable:$true] %s384
          %390 = dma.hbm_to_vmem [thread:$0]  %s383, 1024, %s385, [#allocation12], 64, 64, 4
        $region24: #{tpu_custom_call.1} parent=11 // pred_fallthru
          _
        // Predicated region
        $region25: #{tpu_custom_call.1} parent=11 // pred_check
          %p391 = pneg %p208
        $region26: #{tpu_custom_call.1} parent=11 // pred_check_branch
          %393 = sbr.rel (%p391) target = $region28
        $region27: #{tpu_custom_call.1} parent=11 // pred_region
          _
        $region28: #{tpu_custom_call.1} parent=11 // pred_fallthru
          _
        // Predicated region
        $region29: #{tpu_custom_call.1} parent=11 // pred_check
          %p394 = pneg %p229
        $region30: #{tpu_custom_call.1} parent=11 // pred_check_branch
          %396 = sbr.rel (%p394) target = $region32
        $region31: #{tpu_custom_call.1} parent=11 // pred_region
          _
        $region32: #{tpu_custom_call.1} parent=11 // pred_fallthru
          _
        // Predicated region
        $region33: #{tpu_custom_call.1} parent=11 // pred_check
          %p397 = pneg %p250
        $region34: #{tpu_custom_call.1} parent=11 // pred_check_branch
          %399 = sbr.rel (%p397) target = $region36
        $region35: #{tpu_custom_call.1} parent=11 // pred_region
          _
        $region36: #{tpu_custom_call.1} parent=11 // pred_fallthru
          _
      $region12: #{tpu_custom_call.1} parent=5 // pred_fallthru
        _
      %p400 = scmp.lt.s32.totalorder %s32, 2
      // Predicated region
      $region37: #{tpu_custom_call.1} parent=5 // pred_check
        %p401 = pneg %p400
      $region38: #{tpu_custom_call.1} parent=5 // pred_check_branch
        %403 = sbr.rel (%p401) target = $region40
      $region39: #{tpu_custom_call.1} parent=5 // pred_region
        // Predicated region
        $region41: #{tpu_custom_call.1} parent=39 // pred_check
          %p404 = pneg %p66
        $region42: #{tpu_custom_call.1} parent=39 // pred_check_branch
          %406 = sbr.rel (%p404) target = $region44
        $region43: #{tpu_custom_call.1} parent=39 // pred_region
          %s407 = sand.u32 %s56, 1
          %s408 = scalar_lea.sflag [#allocation3], %s407
          %s409 = sand.u32 %s56, 1
          %s410 = smul.addr %s409, 512
          %s411 = scalar_lea.vmem [#allocation2], %s410
          %s412 = smul.u32 64, %s40
          %414 = vsyncadd %s408, 0
          %s415 = smul.addr %s39, 64
          %s416 = sadd.s32 %s412, %s415
          %s417 = smul.addr %s416, 8
          %s418 = scalar_lea.hbm %s0, %s417
          %s419 = sshll.u32 %s418, 4
          %s420 = int_to_ptr.hbm [resolvable:$true] %s419
          %s421 = sshll.u32 %s411, 4
          %s422 = int_to_ptr.vmem [resolvable:$true] %s421
          %427 = dma.hbm_to_vmem [thread:$0]  %s420, 8192, %s422, %s408, 128, 128, 8
        $region44: #{tpu_custom_call.1} parent=39 // pred_fallthru
          _
        // Predicated region
        $region45: #{tpu_custom_call.1} parent=39 // pred_check
          %p428 = pneg %p92
        $region46: #{tpu_custom_call.1} parent=39 // pred_check_branch
          %430 = sbr.rel (%p428) target = $region48
        $region47: #{tpu_custom_call.1} parent=39 // pred_region
          %s431 = sand.u32 %s32, 1
          %s432 = scalar_lea.sflag [#allocation6], %s431
          %s433 = sand.u32 %s82, 1
          %s434 = scalar_lea.vmem [#allocation5], %s433
          %436 = vsyncadd %s432, 0
          %s437 = scalar_lea.hbm %s1, %s39
          %s439 = sshll.u32 %s437, 4
          %s440 = int_to_ptr.hbm [resolvable:$true] %s439
          %s441 = sshll.u32 %s434, 4
          %s442 = int_to_ptr.vmem [resolvable:$true] %s441
          %444 = dma.hbm_to_vmem [thread:$0]  %s440, 16, %s442, %s432
        $region48: #{tpu_custom_call.1} parent=39 // pred_fallthru
          _
        // Predicated region
        $region49: #{tpu_custom_call.1} parent=39 // pred_check
          %p445 = pneg %p118
        $region50: #{tpu_custom_call.1} parent=39 // pred_check_branch
          %447 = sbr.rel (%p445) target = $region52
        $region51: #{tpu_custom_call.1} parent=39 // pred_region
          %s448 = sand.u32 %s32, 1
          %s449 = scalar_lea.sflag [#allocation6], %s448
          %s450 = sand.u32 %s108, 1
          %s451 = scalar_lea.vmem [#allocation7], %s450
          %453 = vsyncadd %s449, 0
          %s454 = scalar_lea.hbm %s2, %s39
          %s456 = sshll.u32 %s454, 4
          %s457 = int_to_ptr.hbm [resolvable:$true] %s456
          %s458 = sshll.u32 %s451, 4
          %s459 = int_to_ptr.vmem [resolvable:$true] %s458
          %461 = dma.hbm_to_vmem [thread:$0]  %s457, 16, %s459, %s449
        $region52: #{tpu_custom_call.1} parent=39 // pred_fallthru
          _
      $region40: #{tpu_custom_call.1} parent=5 // pred_fallthru
        _
      %p462 = scmp.le.s32.totalorder 1, %s32
      %p463 = scmp.lt.s32.totalorder %s32, 3
      %p464 = pnand %p462, %p463
      %p465 = pneg %p464
      // Predicated region
      $region53: #{tpu_custom_call.1} parent=5 // pred_check
        _
      $region54: #{tpu_custom_call.1} parent=5 // pred_check_branch
        %467 = sbr.rel (%p464) target = $region56
      $region55: #{tpu_custom_call.1} parent=5 // pred_region
        %s468 = ssub.s32 %s32, 1
        %s469 = sand.u32 %s59, 1
        %s470 = scalar_lea.sflag [#allocation3], %s469
        %s471 = sand.u32 %s59, 1
        %s472 = smul.addr %s471, 512
        %s473 = scalar_lea.vmem [#allocation2], %s472
        // Predicated region
        $region57: #{tpu_custom_call.1} parent=55 // pred_check
          %p474 = pneg %p72
        $region58: #{tpu_custom_call.1} parent=55 // pred_check_branch
          %476 = sbr.rel (%p474) target = $region60
        $region59: #{tpu_custom_call.1} parent=55 // pred_region
          %478 = dma.done %s470, 8192
        $region60: #{tpu_custom_call.1} parent=55 // pred_fallthru
          _
        %s479 = sand.u32 %s37, 1
        %s480 = scalar_lea.sflag [#allocation6], %s479
        %s481 = sand.u32 %s85, 1
        %s482 = scalar_lea.vmem [#allocation5], %s481
        // Predicated region
        $region61: #{tpu_custom_call.1} parent=55 // pred_check
          %p483 = pneg %p98
        $region62: #{tpu_custom_call.1} parent=55 // pred_check_branch
          %485 = sbr.rel (%p483) target = $region64
        $region63: #{tpu_custom_call.1} parent=55 // pred_region
          %487 = dma.done %s480, 16
        $region64: #{tpu_custom_call.1} parent=55 // pred_fallthru
          _
        %s488 = sand.u32 %s37, 1
        %s489 = scalar_lea.sflag [#allocation6], %s488
        %s490 = sand.u32 %s111, 1
        %s491 = scalar_lea.vmem [#allocation7], %s490
        // Predicated region
        $region65: #{tpu_custom_call.1} parent=55 // pred_check
          %p492 = pneg %p124
        $region66: #{tpu_custom_call.1} parent=55 // pred_check_branch
          %494 = sbr.rel (%p492) target = $region68
        $region67: #{tpu_custom_call.1} parent=55 // pred_region
          %496 = dma.done %s489, 16
        $region68: #{tpu_custom_call.1} parent=55 // pred_fallthru
          _
        // Predicated region
        $region69: #{tpu_custom_call.1} parent=55 // pred_check
          %p497 = pneg %p145
        $region70: #{tpu_custom_call.1} parent=55 // pred_check_branch
          %499 = sbr.rel (%p497) target = $region72
        $region71: #{tpu_custom_call.1} parent=55 // pred_region
          %501 = dma.done [#allocation9], 1024
        $region72: #{tpu_custom_call.1} parent=55 // pred_fallthru
          _
        // Predicated region
        $region73: #{tpu_custom_call.1} parent=55 // pred_check
          %p502 = pneg %p166
        $region74: #{tpu_custom_call.1} parent=55 // pred_check_branch
          %504 = sbr.rel (%p502) target = $region76
        $region75: #{tpu_custom_call.1} parent=55 // pred_region
          %506 = dma.done [#allocation9], 1024
        $region76: #{tpu_custom_call.1} parent=55 // pred_fallthru
          _
        // Predicated region
        $region77: #{tpu_custom_call.1} parent=55 // pred_check
          %p507 = pneg %p187
        $region78: #{tpu_custom_call.1} parent=55 // pred_check_branch
          %509 = sbr.rel (%p507) target = $region80
        $region79: #{tpu_custom_call.1} parent=55 // pred_region
          %511 = dma.done [#allocation12], 1024
        $region80: #{tpu_custom_call.1} parent=55 // pred_fallthru
          _
        %s512 = sand.u32 %s59, 1
        %s513 = scalar_lea.sflag [#allocation3], %s512
        %s514 = sand.u32 %s59, 1
        %s515 = smul.addr %s514, 512
        %s516 = scalar_lea.vmem [#allocation2], %s515
        %p517 = pneg %p72
        %p518 = pneg %p69
        %s519 = sand.u32 %s37, 1
        %s520 = scalar_lea.sflag [#allocation6], %s519
        %s521 = sand.u32 %s85, 1
        %s522 = scalar_lea.vmem [#allocation5], %s521
        %p523 = pneg %p98
        %p524 = pneg %p95
        %s525 = sand.u32 %s37, 1
        %s526 = scalar_lea.sflag [#allocation6], %s525
        %s527 = sand.u32 %s111, 1
        %s528 = scalar_lea.vmem [#allocation7], %s527
        %p529 = pneg %p124
        %p530 = pneg %p121
        %p531 = pneg %p145
        %p532 = pneg %p142
        %p533 = pneg %p166
        %p534 = pneg %p163
        %p535 = pneg %p187
        %p536 = pneg %p184
        %p537 = pneg %p208
        %p538 = pneg %p205
        %p539 = pneg %p229
        %p540 = pneg %p226
        %p541 = pneg %p250
        %p542 = pneg %p247
        %p543 = pneg %p278
        %p544 = pneg %p275
        %s545 = sand.u32 %s265, 1
        %s546 = scalar_lea.sflag [#allocation4], %s545
        %s547 = sand.u32 %s265, 1
        %s548 = smul.addr %s547, 256
        %s549 = scalar_lea.vmem [#allocation13], %s548
        %p550 = pneg %p306
        %p551 = pneg %p303
        %s552 = sand.u32 %s37, 1
        %s553 = scalar_lea.sflag [#allocation15], %s552
        %s554 = sand.u32 %s293, 1
        %s555 = smul.addr %s554, 256
        %s556 = scalar_lea.vmem [#allocation14], %s555
        %p557 = pneg %p334
        %p558 = pneg %p331
        %s559 = sand.u32 %s37, 1
        %s560 = scalar_lea.sflag [#allocation15], %s559
        %s561 = sand.u32 %s321, 1
        %s562 = smul.addr %s561, 256
        %s563 = scalar_lea.vmem [#allocation16], %s562
        %s564 = smul.u32 64, %s42
        %s565 = smul.u32 64, %s42
        %s566 = smul.u32 64, %s42
        %s567 = smul.u32 64, %s42
        %v568 = vld [vmem:[%s473] sm:$0xff]
        %v569 = vld [vmem:[%s473 + $0x8] sm:$0xff]
        %v570 = vld [vmem:[%s473 + $0x10] sm:$0xff]
        %v571 = vld [vmem:[%s473 + $0x18] sm:$0xff]
        %v572 = vld [vmem:[%s473 + $0x20] sm:$0xff]
        %v573 = vld [vmem:[%s473 + $0x28] sm:$0xff]
        %v574 = vld [vmem:[%s473 + $0x30] sm:$0xff]
        %v575 = vld [vmem:[%s473 + $0x38] sm:$0xff]
        %v576 = vld [vmem:[%s473 + $0x40] sm:$0xff]
        %v577 = vld [vmem:[%s473 + $0x48] sm:$0xff]
        %v578 = vld [vmem:[%s473 + $0x50] sm:$0xff]
        %v579 = vld [vmem:[%s473 + $0x58] sm:$0xff]
        %v580 = vld [vmem:[%s473 + $0x60] sm:$0xff]
        %v581 = vld [vmem:[%s473 + $0x68] sm:$0xff]
        %v582 = vld [vmem:[%s473 + $0x70] sm:$0xff]
        %v583 = vld [vmem:[%s473 + $0x78] sm:$0xff]
        %v584 = vld [vmem:[%s473 + $0x80] sm:$0xff]
        %v585 = vld [vmem:[%s473 + $0x88] sm:$0xff]
        %v586 = vld [vmem:[%s473 + $0x90] sm:$0xff]
        %v587 = vld [vmem:[%s473 + $0x98] sm:$0xff]
        %v588 = vld [vmem:[%s473 + $0xa0] sm:$0xff]
        %v589 = vld [vmem:[%s473 + $0xa8] sm:$0xff]
        %v590 = vld [vmem:[%s473 + $0xb0] sm:$0xff]
        %v591 = vld [vmem:[%s473 + $0xb8] sm:$0xff]
        %v592 = vld [vmem:[%s473 + $0xc0] sm:$0xff]
        %v593 = vld [vmem:[%s473 + $0xc8] sm:$0xff]
        %v594 = vld [vmem:[%s473 + $0xd0] sm:$0xff]
        %v595 = vld [vmem:[%s473 + $0xd8] sm:$0xff]
        %v596 = vld [vmem:[%s473 + $0xe0] sm:$0xff]
        %v597 = vld [vmem:[%s473 + $0xe8] sm:$0xff]
        %v598 = vld [vmem:[%s473 + $0xf0] sm:$0xff]
        %v599 = vld [vmem:[%s473 + $0xf8] sm:$0xff]
        %v600 = vld [vmem:[%s473 + $0x100] sm:$0xff]
        %v601 = vld [vmem:[%s473 + $0x108] sm:$0xff]
        %v602 = vld [vmem:[%s473 + $0x110] sm:$0xff]
        %v603 = vld [vmem:[%s473 + $0x118] sm:$0xff]
        %v604 = vld [vmem:[%s473 + $0x120] sm:$0xff]
        %v605 = vld [vmem:[%s473 + $0x128] sm:$0xff]
        %v606 = vld [vmem:[%s473 + $0x130] sm:$0xff]
        %v607 = vld [vmem:[%s473 + $0x138] sm:$0xff]
        %v608 = vld [vmem:[%s473 + $0x140] sm:$0xff]
        %v609 = vld [vmem:[%s473 + $0x148] sm:$0xff]
        %v610 = vld [vmem:[%s473 + $0x150] sm:$0xff]
        %v611 = vld [vmem:[%s473 + $0x158] sm:$0xff]
        %v612 = vld [vmem:[%s473 + $0x160] sm:$0xff]
        %v613 = vld [vmem:[%s473 + $0x168] sm:$0xff]
        %v614 = vld [vmem:[%s473 + $0x170] sm:$0xff]
        %v615 = vld [vmem:[%s473 + $0x178] sm:$0xff]
        %v616 = vld [vmem:[%s473 + $0x180] sm:$0xff]
        %v617 = vld [vmem:[%s473 + $0x188] sm:$0xff]
        %v618 = vld [vmem:[%s473 + $0x190] sm:$0xff]
        %v619 = vld [vmem:[%s473 + $0x198] sm:$0xff]
        %v620 = vld [vmem:[%s473 + $0x1a0] sm:$0xff]
        %v621 = vld [vmem:[%s473 + $0x1a8] sm:$0xff]
        %v622 = vld [vmem:[%s473 + $0x1b0] sm:$0xff]
        %v623 = vld [vmem:[%s473 + $0x1b8] sm:$0xff]
        %v624 = vld [vmem:[%s473 + $0x1c0] sm:$0xff]
        %v625 = vld [vmem:[%s473 + $0x1c8] sm:$0xff]
        %v626 = vld [vmem:[%s473 + $0x1d0] sm:$0xff]
        %v627 = vld [vmem:[%s473 + $0x1d8] sm:$0xff]
        %v628 = vld [vmem:[%s473 + $0x1e0] sm:$0xff]
        %v629 = vld [vmem:[%s473 + $0x1e8] sm:$0xff]
        %v630 = vld [vmem:[%s473 + $0x1f0] sm:$0xff]
        %v631 = vld [vmem:[%s473 + $0x1f8] sm:$0xff]
        %v632 = vld [vmem:[%s482] sm:$0x1]
        %v633 = vld [vmem:[%s491] sm:$0x1]
        %634 = vadd.xlane.f32.xlu0 %v568
        %v635 = vpop.xlane.xlu0 %634
        %636 = vadd.xlane.f32.xlu0 %v569
        %v637 = vpop.xlane.xlu0 %636
        %638 = vadd.xlane.f32.xlu0 %v570
        %v639 = vpop.xlane.xlu0 %638
        %640 = vadd.xlane.f32.xlu0 %v571
        %v641 = vpop.xlane.xlu0 %640
        %642 = vadd.xlane.f32.xlu0 %v572
        %v643 = vpop.xlane.xlu0 %642
        %644 = vadd.xlane.f32.xlu0 %v573
        %v645 = vpop.xlane.xlu0 %644
        %646 = vadd.xlane.f32.xlu0 %v574
        %v647 = vpop.xlane.xlu0 %646
        %648 = vadd.xlane.f32.xlu0 %v575
        %v649 = vpop.xlane.xlu0 %648
        %650 = vadd.xlane.f32.xlu0 %v576
        %v651 = vpop.xlane.xlu0 %650
        %652 = vadd.xlane.f32.xlu0 %v577
        %v653 = vpop.xlane.xlu0 %652
        %654 = vadd.xlane.f32.xlu0 %v578
        %v655 = vpop.xlane.xlu0 %654
        %656 = vadd.xlane.f32.xlu0 %v579
        %v657 = vpop.xlane.xlu0 %656
        %658 = vadd.xlane.f32.xlu0 %v580
        %v659 = vpop.xlane.xlu0 %658
        %660 = vadd.xlane.f32.xlu0 %v581
        %v661 = vpop.xlane.xlu0 %660
        %662 = vadd.xlane.f32.xlu0 %v582
        %v663 = vpop.xlane.xlu0 %662
        %664 = vadd.xlane.f32.xlu0 %v583
        %v665 = vpop.xlane.xlu0 %664
        %666 = vadd.xlane.f32.xlu0 %v584
        %v667 = vpop.xlane.xlu0 %666
        %668 = vadd.xlane.f32.xlu0 %v585
        %v669 = vpop.xlane.xlu0 %668
        %670 = vadd.xlane.f32.xlu0 %v586
        %v671 = vpop.xlane.xlu0 %670
        %672 = vadd.xlane.f32.xlu0 %v587
        %v673 = vpop.xlane.xlu0 %672
        %674 = vadd.xlane.f32.xlu0 %v588
        %v675 = vpop.xlane.xlu0 %674
        %676 = vadd.xlane.f32.xlu0 %v589
        %v677 = vpop.xlane.xlu0 %676
        %678 = vadd.xlane.f32.xlu0 %v590
        %v679 = vpop.xlane.xlu0 %678
        %680 = vadd.xlane.f32.xlu0 %v591
        %v681 = vpop.xlane.xlu0 %680
        %682 = vadd.xlane.f32.xlu0 %v592
        %v683 = vpop.xlane.xlu0 %682
        %684 = vadd.xlane.f32.xlu0 %v593
        %v685 = vpop.xlane.xlu0 %684
        %686 = vadd.xlane.f32.xlu0 %v594
        %v687 = vpop.xlane.xlu0 %686
        %688 = vadd.xlane.f32.xlu0 %v595
        %v689 = vpop.xlane.xlu0 %688
        %690 = vadd.xlane.f32.xlu0 %v596
        %v691 = vpop.xlane.xlu0 %690
        %692 = vadd.xlane.f32.xlu0 %v597
        %v693 = vpop.xlane.xlu0 %692
        %694 = vadd.xlane.f32.xlu0 %v598
        %v695 = vpop.xlane.xlu0 %694
        %696 = vadd.xlane.f32.xlu0 %v599
        %v697 = vpop.xlane.xlu0 %696
        %698 = vadd.xlane.f32.xlu0 %v600
        %v699 = vpop.xlane.xlu0 %698
        %700 = vadd.xlane.f32.xlu0 %v601
        %v701 = vpop.xlane.xlu0 %700
        %702 = vadd.xlane.f32.xlu0 %v602
        %v703 = vpop.xlane.xlu0 %702
        %704 = vadd.xlane.f32.xlu0 %v603
        %v705 = vpop.xlane.xlu0 %704
        %706 = vadd.xlane.f32.xlu0 %v604
        %v707 = vpop.xlane.xlu0 %706
        %708 = vadd.xlane.f32.xlu0 %v605
        %v709 = vpop.xlane.xlu0 %708
        %710 = vadd.xlane.f32.xlu0 %v606
        %v711 = vpop.xlane.xlu0 %710
        %712 = vadd.xlane.f32.xlu0 %v607
        %v713 = vpop.xlane.xlu0 %712
        %714 = vadd.xlane.f32.xlu0 %v608
        %v715 = vpop.xlane.xlu0 %714
        %716 = vadd.xlane.f32.xlu0 %v609
        %v717 = vpop.xlane.xlu0 %716
        %718 = vadd.xlane.f32.xlu0 %v610
        %v719 = vpop.xlane.xlu0 %718
        %720 = vadd.xlane.f32.xlu0 %v611
        %v721 = vpop.xlane.xlu0 %720
        %722 = vadd.xlane.f32.xlu0 %v612
        %v723 = vpop.xlane.xlu0 %722
        %724 = vadd.xlane.f32.xlu0 %v613
        %v725 = vpop.xlane.xlu0 %724
        %726 = vadd.xlane.f32.xlu0 %v614
        %v727 = vpop.xlane.xlu0 %726
        %728 = vadd.xlane.f32.xlu0 %v615
        %v729 = vpop.xlane.xlu0 %728
        %730 = vadd.xlane.f32.xlu0 %v616
        %v731 = vpop.xlane.xlu0 %730
        %732 = vadd.xlane.f32.xlu0 %v617
        %v733 = vpop.xlane.xlu0 %732
        %734 = vadd.xlane.f32.xlu0 %v618
        %v735 = vpop.xlane.xlu0 %734
        %736 = vadd.xlane.f32.xlu0 %v619
        %v737 = vpop.xlane.xlu0 %736
        %738 = vadd.xlane.f32.xlu0 %v620
        %v739 = vpop.xlane.xlu0 %738
        %740 = vadd.xlane.f32.xlu0 %v621
        %v741 = vpop.xlane.xlu0 %740
        %742 = vadd.xlane.f32.xlu0 %v622
        %v743 = vpop.xlane.xlu0 %742
        %744 = vadd.xlane.f32.xlu0 %v623
        %v745 = vpop.xlane.xlu0 %744
        %746 = vadd.xlane.f32.xlu0 %v624
        %v747 = vpop.xlane.xlu0 %746
        %748 = vadd.xlane.f32.xlu0 %v625
        %v749 = vpop.xlane.xlu0 %748
        %750 = vadd.xlane.f32.xlu0 %v626
        %v751 = vpop.xlane.xlu0 %750
        %752 = vadd.xlane.f32.xlu0 %v627
        %v753 = vpop.xlane.xlu0 %752
        %754 = vadd.xlane.f32.xlu0 %v628
        %v755 = vpop.xlane.xlu0 %754
        %756 = vadd.xlane.f32.xlu0 %v629
        %v757 = vpop.xlane.xlu0 %756
        %758 = vadd.xlane.f32.xlu0 %v630
        %v759 = vpop.xlane.xlu0 %758
        %760 = vadd.xlane.f32.xlu0 %v631
        %v761 = vpop.xlane.xlu0 %760
        %v762 = vrcp.pop 128.0
        %v763 = vmul.f32 128.0, %v762
        %v764 = vsub.f32 1.0, %v763
        %v765 = vmul.f32 %v762, %v764
        %v766 = vadd.f32 %v762, %v765
        %vm767 = vweird.f32 %v762
        %v768 = vsel %vm767, %v762, %v766
        %v769 = vmul.f32 %v635, %v768
        %v770 = vmul.f32 %v637, %v768
        %v771 = vmul.f32 %v639, %v768
        %v772 = vmul.f32 %v641, %v768
        %v773 = vmul.f32 %v643, %v768
        %v774 = vmul.f32 %v645, %v768
        %v775 = vmul.f32 %v647, %v768
        %v776 = vmul.f32 %v649, %v768
        %v777 = vmul.f32 %v651, %v768
        %v778 = vmul.f32 %v653, %v768
        %v779 = vmul.f32 %v655, %v768
        %v780 = vmul.f32 %v657, %v768
        %v781 = vmul.f32 %v659, %v768
        %v782 = vmul.f32 %v661, %v768
        %v783 = vmul.f32 %v663, %v768
        %v784 = vmul.f32 %v665, %v768
        %v785 = vmul.f32 %v667, %v768
        %v786 = vmul.f32 %v669, %v768
        %v787 = vmul.f32 %v671, %v768
        %v788 = vmul.f32 %v673, %v768
        %v789 = vmul.f32 %v675, %v768
        %v790 = vmul.f32 %v677, %v768
        %v791 = vmul.f32 %v679, %v768
        %v792 = vmul.f32 %v681, %v768
        %v793 = vmul.f32 %v683, %v768
        %v794 = vmul.f32 %v685, %v768
        %v795 = vmul.f32 %v687, %v768
        %v796 = vmul.f32 %v689, %v768
        %v797 = vmul.f32 %v691, %v768
        %v798 = vmul.f32 %v693, %v768
        %v799 = vmul.f32 %v695, %v768
        %v800 = vmul.f32 %v697, %v768
        %v801 = vmul.f32 %v699, %v768
        %v802 = vmul.f32 %v701, %v768
        %v803 = vmul.f32 %v703, %v768
        %v804 = vmul.f32 %v705, %v768
        %v805 = vmul.f32 %v707, %v768
        %v806 = vmul.f32 %v709, %v768
        %v807 = vmul.f32 %v711, %v768
        %v808 = vmul.f32 %v713, %v768
        %v809 = vmul.f32 %v715, %v768
        %v810 = vmul.f32 %v717, %v768
        %v811 = vmul.f32 %v719, %v768
        %v812 = vmul.f32 %v721, %v768
        %v813 = vmul.f32 %v723, %v768
        %v814 = vmul.f32 %v725, %v768
        %v815 = vmul.f32 %v727, %v768
        %v816 = vmul.f32 %v729, %v768
        %v817 = vmul.f32 %v731, %v768
        %v818 = vmul.f32 %v733, %v768
        %v819 = vmul.f32 %v735, %v768
        %v820 = vmul.f32 %v737, %v768
        %v821 = vmul.f32 %v739, %v768
        %v822 = vmul.f32 %v741, %v768
        %v823 = vmul.f32 %v743, %v768
        %v824 = vmul.f32 %v745, %v768
        %v825 = vmul.f32 %v747, %v768
        %v826 = vmul.f32 %v749, %v768
        %v827 = vmul.f32 %v751, %v768
        %v828 = vmul.f32 %v753, %v768
        %v829 = vmul.f32 %v755, %v768
        %v830 = vmul.f32 %v757, %v768
        %v831 = vmul.f32 %v759, %v768
        %v832 = vmul.f32 %v761, %v768
        %v833 = vsub.f32 %v568, %v769
        %v834 = vsub.f32 %v569, %v770
        %v835 = vsub.f32 %v570, %v771
        %v836 = vsub.f32 %v571, %v772
        %v837 = vsub.f32 %v572, %v773
        %v838 = vsub.f32 %v573, %v774
        %v839 = vsub.f32 %v574, %v775
        %v840 = vsub.f32 %v575, %v776
        %v841 = vsub.f32 %v576, %v777
        %v842 = vsub.f32 %v577, %v778
        %v843 = vsub.f32 %v578, %v779
        %v844 = vsub.f32 %v579, %v780
        %v845 = vsub.f32 %v580, %v781
        %v846 = vsub.f32 %v581, %v782
        %v847 = vsub.f32 %v582, %v783
        %v848 = vsub.f32 %v583, %v784
        %v849 = vsub.f32 %v584, %v785
        %v850 = vsub.f32 %v585, %v786
        %v851 = vsub.f32 %v586, %v787
        %v852 = vsub.f32 %v587, %v788
        %v853 = vsub.f32 %v588, %v789
        %v854 = vsub.f32 %v589, %v790
        %v855 = vsub.f32 %v590, %v791
        %v856 = vsub.f32 %v591, %v792
        %v857 = vsub.f32 %v592, %v793
        %v858 = vsub.f32 %v593, %v794
        %v859 = vsub.f32 %v594, %v795
        %v860 = vsub.f32 %v595, %v796
        %v861 = vsub.f32 %v596, %v797
        %v862 = vsub.f32 %v597, %v798
        %v863 = vsub.f32 %v598, %v799
        %v864 = vsub.f32 %v599, %v800
        %v865 = vsub.f32 %v600, %v801
        %v866 = vsub.f32 %v601, %v802
        %v867 = vsub.f32 %v602, %v803
        %v868 = vsub.f32 %v603, %v804
        %v869 = vsub.f32 %v604, %v805
        %v870 = vsub.f32 %v605, %v806
        %v871 = vsub.f32 %v606, %v807
        %v872 = vsub.f32 %v607, %v808
        %v873 = vsub.f32 %v608, %v809
        %v874 = vsub.f32 %v609, %v810
        %v875 = vsub.f32 %v610, %v811
        %v876 = vsub.f32 %v611, %v812
        %v877 = vsub.f32 %v612, %v813
        %v878 = vsub.f32 %v613, %v814
        %v879 = vsub.f32 %v614, %v815
        %v880 = vsub.f32 %v615, %v816
        %v881 = vsub.f32 %v616, %v817
        %v882 = vsub.f32 %v617, %v818
        %v883 = vsub.f32 %v618, %v819
        %v884 = vsub.f32 %v619, %v820
        %v885 = vsub.f32 %v620, %v821
        %v886 = vsub.f32 %v621, %v822
        %v887 = vsub.f32 %v622, %v823
        %v888 = vsub.f32 %v623, %v824
        %v889 = vsub.f32 %v624, %v825
        %v890 = vsub.f32 %v625, %v826
        %v891 = vsub.f32 %v626, %v827
        %v892 = vsub.f32 %v627, %v828
        %v893 = vsub.f32 %v628, %v829
        %v894 = vsub.f32 %v629, %v830
        %v895 = vsub.f32 %v630, %v831
        %v896 = vsub.f32 %v631, %v832
        %v897 = vmul.f32 %v833, %v833
        %v898 = vmul.f32 %v834, %v834
        %v899 = vmul.f32 %v835, %v835
        %v900 = vmul.f32 %v836, %v836
        %v901 = vmul.f32 %v837, %v837
        %v902 = vmul.f32 %v838, %v838
        %v903 = vmul.f32 %v839, %v839
        %v904 = vmul.f32 %v840, %v840
        %v905 = vmul.f32 %v841, %v841
        %v906 = vmul.f32 %v842, %v842
        %v907 = vmul.f32 %v843, %v843
        %v908 = vmul.f32 %v844, %v844
        %v909 = vmul.f32 %v845, %v845
        %v910 = vmul.f32 %v846, %v846
        %v911 = vmul.f32 %v847, %v847
        %v912 = vmul.f32 %v848, %v848
        %v913 = vmul.f32 %v849, %v849
        %v914 = vmul.f32 %v850, %v850
        %v915 = vmul.f32 %v851, %v851
        %v916 = vmul.f32 %v852, %v852
        %v917 = vmul.f32 %v853, %v853
        %v918 = vmul.f32 %v854, %v854
        %v919 = vmul.f32 %v855, %v855
        %v920 = vmul.f32 %v856, %v856
        %v921 = vmul.f32 %v857, %v857
        %v922 = vmul.f32 %v858, %v858
        %v923 = vmul.f32 %v859, %v859
        %v924 = vmul.f32 %v860, %v860
        %v925 = vmul.f32 %v861, %v861
        %v926 = vmul.f32 %v862, %v862
        %v927 = vmul.f32 %v863, %v863
        %v928 = vmul.f32 %v864, %v864
        %v929 = vmul.f32 %v865, %v865
        %v930 = vmul.f32 %v866, %v866
        %v931 = vmul.f32 %v867, %v867
        %v932 = vmul.f32 %v868, %v868
        %v933 = vmul.f32 %v869, %v869
        %v934 = vmul.f32 %v870, %v870
        %v935 = vmul.f32 %v871, %v871
        %v936 = vmul.f32 %v872, %v872
        %v937 = vmul.f32 %v873, %v873
        %v938 = vmul.f32 %v874, %v874
        %v939 = vmul.f32 %v875, %v875
        %v940 = vmul.f32 %v876, %v876
        %v941 = vmul.f32 %v877, %v877
        %v942 = vmul.f32 %v878, %v878
        %v943 = vmul.f32 %v879, %v879
        %v944 = vmul.f32 %v880, %v880
        %v945 = vmul.f32 %v881, %v881
        %v946 = vmul.f32 %v882, %v882
        %v947 = vmul.f32 %v883, %v883
        %v948 = vmul.f32 %v884, %v884
        %v949 = vmul.f32 %v885, %v885
        %v950 = vmul.f32 %v886, %v886
        %v951 = vmul.f32 %v887, %v887
        %v952 = vmul.f32 %v888, %v888
        %v953 = vmul.f32 %v889, %v889
        %v954 = vmul.f32 %v890, %v890
        %v955 = vmul.f32 %v891, %v891
        %v956 = vmul.f32 %v892, %v892
        %v957 = vmul.f32 %v893, %v893
        %v958 = vmul.f32 %v894, %v894
        %v959 = vmul.f32 %v895, %v895
        %v960 = vmul.f32 %v896, %v896
        %961 = vadd.xlane.f32.xlu0 %v897
        %v962 = vpop.xlane.xlu0 %961
        %963 = vadd.xlane.f32.xlu0 %v898
        %v964 = vpop.xlane.xlu0 %963
        %965 = vadd.xlane.f32.xlu0 %v899
        %v966 = vpop.xlane.xlu0 %965
        %967 = vadd.xlane.f32.xlu0 %v900
        %v968 = vpop.xlane.xlu0 %967
        %969 = vadd.xlane.f32.xlu0 %v901
        %v970 = vpop.xlane.xlu0 %969
        %971 = vadd.xlane.f32.xlu0 %v902
        %v972 = vpop.xlane.xlu0 %971
        %973 = vadd.xlane.f32.xlu0 %v903
        %v974 = vpop.xlane.xlu0 %973
        %975 = vadd.xlane.f32.xlu0 %v904
        %v976 = vpop.xlane.xlu0 %975
        %977 = vadd.xlane.f32.xlu0 %v905
        %v978 = vpop.xlane.xlu0 %977
        %979 = vadd.xlane.f32.xlu0 %v906
        %v980 = vpop.xlane.xlu0 %979
        %981 = vadd.xlane.f32.xlu0 %v907
        %v982 = vpop.xlane.xlu0 %981
        %983 = vadd.xlane.f32.xlu0 %v908
        %v984 = vpop.xlane.xlu0 %983
        %985 = vadd.xlane.f32.xlu0 %v909
        %v986 = vpop.xlane.xlu0 %985
        %987 = vadd.xlane.f32.xlu0 %v910
        %v988 = vpop.xlane.xlu0 %987
        %989 = vadd.xlane.f32.xlu0 %v911
        %v990 = vpop.xlane.xlu0 %989
        %991 = vadd.xlane.f32.xlu0 %v912
        %v992 = vpop.xlane.xlu0 %991
        %993 = vadd.xlane.f32.xlu0 %v913
        %v994 = vpop.xlane.xlu0 %993
        %995 = vadd.xlane.f32.xlu0 %v914
        %v996 = vpop.xlane.xlu0 %995
        %997 = vadd.xlane.f32.xlu0 %v915
        %v998 = vpop.xlane.xlu0 %997
        %999 = vadd.xlane.f32.xlu0 %v916
        %v1000 = vpop.xlane.xlu0 %999
        %1001 = vadd.xlane.f32.xlu0 %v917
        %v1002 = vpop.xlane.xlu0 %1001
        %1003 = vadd.xlane.f32.xlu0 %v918
        %v1004 = vpop.xlane.xlu0 %1003
        %1005 = vadd.xlane.f32.xlu0 %v919
        %v1006 = vpop.xlane.xlu0 %1005
        %1007 = vadd.xlane.f32.xlu0 %v920
        %v1008 = vpop.xlane.xlu0 %1007
        %1009 = vadd.xlane.f32.xlu0 %v921
        %v1010 = vpop.xlane.xlu0 %1009
        %1011 = vadd.xlane.f32.xlu0 %v922
        %v1012 = vpop.xlane.xlu0 %1011
        %1013 = vadd.xlane.f32.xlu0 %v923
        %v1014 = vpop.xlane.xlu0 %1013
        %1015 = vadd.xlane.f32.xlu0 %v924
        %v1016 = vpop.xlane.xlu0 %1015
        %1017 = vadd.xlane.f32.xlu0 %v925
        %v1018 = vpop.xlane.xlu0 %1017
        %1019 = vadd.xlane.f32.xlu0 %v926
        %v1020 = vpop.xlane.xlu0 %1019
        %1021 = vadd.xlane.f32.xlu0 %v927
        %v1022 = vpop.xlane.xlu0 %1021
        %1023 = vadd.xlane.f32.xlu0 %v928
        %v1024 = vpop.xlane.xlu0 %1023
        %1025 = vadd.xlane.f32.xlu0 %v929
        %v1026 = vpop.xlane.xlu0 %1025
        %1027 = vadd.xlane.f32.xlu0 %v930
        %v1028 = vpop.xlane.xlu0 %1027
        %1029 = vadd.xlane.f32.xlu0 %v931
        %v1030 = vpop.xlane.xlu0 %1029
        %1031 = vadd.xlane.f32.xlu0 %v932
        %v1032 = vpop.xlane.xlu0 %1031
        %1033 = vadd.xlane.f32.xlu0 %v933
        %v1034 = vpop.xlane.xlu0 %1033
        %1035 = vadd.xlane.f32.xlu0 %v934
        %v1036 = vpop.xlane.xlu0 %1035
        %1037 = vadd.xlane.f32.xlu0 %v935
        %v1038 = vpop.xlane.xlu0 %1037
        %1039 = vadd.xlane.f32.xlu0 %v936
        %v1040 = vpop.xlane.xlu0 %1039
        %1041 = vadd.xlane.f32.xlu0 %v937
        %v1042 = vpop.xlane.xlu0 %1041
        %1043 = vadd.xlane.f32.xlu0 %v938
        %v1044 = vpop.xlane.xlu0 %1043
        %1045 = vadd.xlane.f32.xlu0 %v939
        %v1046 = vpop.xlane.xlu0 %1045
        %1047 = vadd.xlane.f32.xlu0 %v940
        %v1048 = vpop.xlane.xlu0 %1047
        %1049 = vadd.xlane.f32.xlu0 %v941
        %v1050 = vpop.xlane.xlu0 %1049
        %1051 = vadd.xlane.f32.xlu0 %v942
        %v1052 = vpop.xlane.xlu0 %1051
        %1053 = vadd.xlane.f32.xlu0 %v943
        %v1054 = vpop.xlane.xlu0 %1053
        %1055 = vadd.xlane.f32.xlu0 %v944
        %v1056 = vpop.xlane.xlu0 %1055
        %1057 = vadd.xlane.f32.xlu0 %v945
        %v1058 = vpop.xlane.xlu0 %1057
        %1059 = vadd.xlane.f32.xlu0 %v946
        %v1060 = vpop.xlane.xlu0 %1059
        %1061 = vadd.xlane.f32.xlu0 %v947
        %v1062 = vpop.xlane.xlu0 %1061
        %1063 = vadd.xlane.f32.xlu0 %v948
        %v1064 = vpop.xlane.xlu0 %1063
        %1065 = vadd.xlane.f32.xlu0 %v949
        %v1066 = vpop.xlane.xlu0 %1065
        %1067 = vadd.xlane.f32.xlu0 %v950
        %v1068 = vpop.xlane.xlu0 %1067
        %1069 = vadd.xlane.f32.xlu0 %v951
        %v1070 = vpop.xlane.xlu0 %1069
        %1071 = vadd.xlane.f32.xlu0 %v952
        %v1072 = vpop.xlane.xlu0 %1071
        %1073 = vadd.xlane.f32.xlu0 %v953
        %v1074 = vpop.xlane.xlu0 %1073
        %1075 = vadd.xlane.f32.xlu0 %v954
        %v1076 = vpop.xlane.xlu0 %1075
        %1077 = vadd.xlane.f32.xlu0 %v955
        %v1078 = vpop.xlane.xlu0 %1077
        %1079 = vadd.xlane.f32.xlu0 %v956
        %v1080 = vpop.xlane.xlu0 %1079
        %1081 = vadd.xlane.f32.xlu0 %v957
        %v1082 = vpop.xlane.xlu0 %1081
        %1083 = vadd.xlane.f32.xlu0 %v958
        %v1084 = vpop.xlane.xlu0 %1083
        %1085 = vadd.xlane.f32.xlu0 %v959
        %v1086 = vpop.xlane.xlu0 %1085
        %1087 = vadd.xlane.f32.xlu0 %v960
        %v1088 = vpop.xlane.xlu0 %1087
        %v1089 = vmul.f32 %v962, %v768
        %v1090 = vmul.f32 %v964, %v768
        %v1091 = vmul.f32 %v966, %v768
        %v1092 = vmul.f32 %v968, %v768
        %v1093 = vmul.f32 %v970, %v768
        %v1094 = vmul.f32 %v972, %v768
        %v1095 = vmul.f32 %v974, %v768
        %v1096 = vmul.f32 %v976, %v768
        %v1097 = vmul.f32 %v978, %v768
        %v1098 = vmul.f32 %v980, %v768
        %v1099 = vmul.f32 %v982, %v768
        %v1100 = vmul.f32 %v984, %v768
        %v1101 = vmul.f32 %v986, %v768
        %v1102 = vmul.f32 %v988, %v768
        %v1103 = vmul.f32 %v990, %v768
        %v1104 = vmul.f32 %v992, %v768
        %v1105 = vmul.f32 %v994, %v768
        %v1106 = vmul.f32 %v996, %v768
        %v1107 = vmul.f32 %v998, %v768
        %v1108 = vmul.f32 %v1000, %v768
        %v1109 = vmul.f32 %v1002, %v768
        %v1110 = vmul.f32 %v1004, %v768
        %v1111 = vmul.f32 %v1006, %v768
        %v1112 = vmul.f32 %v1008, %v768
        %v1113 = vmul.f32 %v1010, %v768
        %v1114 = vmul.f32 %v1012, %v768
        %v1115 = vmul.f32 %v1014, %v768
        %v1116 = vmul.f32 %v1016, %v768
        %v1117 = vmul.f32 %v1018, %v768
        %v1118 = vmul.f32 %v1020, %v768
        %v1119 = vmul.f32 %v1022, %v768
        %v1120 = vmul.f32 %v1024, %v768
        %v1121 = vmul.f32 %v1026, %v768
        %v1122 = vmul.f32 %v1028, %v768
        %v1123 = vmul.f32 %v1030, %v768
        %v1124 = vmul.f32 %v1032, %v768
        %v1125 = vmul.f32 %v1034, %v768
        %v1126 = vmul.f32 %v1036, %v768
        %v1127 = vmul.f32 %v1038, %v768
        %v1128 = vmul.f32 %v1040, %v768
        %v1129 = vmul.f32 %v1042, %v768
        %v1130 = vmul.f32 %v1044, %v768
        %v1131 = vmul.f32 %v1046, %v768
        %v1132 = vmul.f32 %v1048, %v768
        %v1133 = vmul.f32 %v1050, %v768
        %v1134 = vmul.f32 %v1052, %v768
        %v1135 = vmul.f32 %v1054, %v768
        %v1136 = vmul.f32 %v1056, %v768
        %v1137 = vmul.f32 %v1058, %v768
        %v1138 = vmul.f32 %v1060, %v768
        %v1139 = vmul.f32 %v1062, %v768
        %v1140 = vmul.f32 %v1064, %v768
        %v1141 = vmul.f32 %v1066, %v768
        %v1142 = vmul.f32 %v1068, %v768
        %v1143 = vmul.f32 %v1070, %v768
        %v1144 = vmul.f32 %v1072, %v768
        %v1145 = vmul.f32 %v1074, %v768
        %v1146 = vmul.f32 %v1076, %v768
        %v1147 = vmul.f32 %v1078, %v768
        %v1148 = vmul.f32 %v1080, %v768
        %v1149 = vmul.f32 %v1082, %v768
        %v1150 = vmul.f32 %v1084, %v768
        %v1151 = vmul.f32 %v1086, %v768
        %v1152 = vmul.f32 %v1088, %v768
        %v1153 = vadd.f32 %v1089, 1e-06
        %v1154 = vadd.f32 %v1090, 1e-06
        %v1155 = vadd.f32 %v1091, 1e-06
        %v1156 = vadd.f32 %v1092, 1e-06
        %v1157 = vadd.f32 %v1093, 1e-06
        %v1158 = vadd.f32 %v1094, 1e-06
        %v1159 = vadd.f32 %v1095, 1e-06
        %v1160 = vadd.f32 %v1096, 1e-06
        %v1161 = vadd.f32 %v1097, 1e-06
        %v1162 = vadd.f32 %v1098, 1e-06
        %v1163 = vadd.f32 %v1099, 1e-06
        %v1164 = vadd.f32 %v1100, 1e-06
        %v1165 = vadd.f32 %v1101, 1e-06
        %v1166 = vadd.f32 %v1102, 1e-06
        %v1167 = vadd.f32 %v1103, 1e-06
        %v1168 = vadd.f32 %v1104, 1e-06
        %v1169 = vadd.f32 %v1105, 1e-06
        %v1170 = vadd.f32 %v1106, 1e-06
        %v1171 = vadd.f32 %v1107, 1e-06
        %v1172 = vadd.f32 %v1108, 1e-06
        %v1173 = vadd.f32 %v1109, 1e-06
        %v1174 = vadd.f32 %v1110, 1e-06
        %v1175 = vadd.f32 %v1111, 1e-06
        %v1176 = vadd.f32 %v1112, 1e-06
        %v1177 = vadd.f32 %v1113, 1e-06
        %v1178 = vadd.f32 %v1114, 1e-06
        %v1179 = vadd.f32 %v1115, 1e-06
        %v1180 = vadd.f32 %v1116, 1e-06
        %v1181 = vadd.f32 %v1117, 1e-06
        %v1182 = vadd.f32 %v1118, 1e-06
        %v1183 = vadd.f32 %v1119, 1e-06
        %v1184 = vadd.f32 %v1120, 1e-06
        %v1185 = vadd.f32 %v1121, 1e-06
        %v1186 = vadd.f32 %v1122, 1e-06
        %v1187 = vadd.f32 %v1123, 1e-06
        %v1188 = vadd.f32 %v1124, 1e-06
        %v1189 = vadd.f32 %v1125, 1e-06
        %v1190 = vadd.f32 %v1126, 1e-06
        %v1191 = vadd.f32 %v1127, 1e-06
        %v1192 = vadd.f32 %v1128, 1e-06
        %v1193 = vadd.f32 %v1129, 1e-06
        %v1194 = vadd.f32 %v1130, 1e-06
        %v1195 = vadd.f32 %v1131, 1e-06
        %v1196 = vadd.f32 %v1132, 1e-06
        %v1197 = vadd.f32 %v1133, 1e-06
        %v1198 = vadd.f32 %v1134, 1e-06
        %v1199 = vadd.f32 %v1135, 1e-06
        %v1200 = vadd.f32 %v1136, 1e-06
        %v1201 = vadd.f32 %v1137, 1e-06
        %v1202 = vadd.f32 %v1138, 1e-06
        %v1203 = vadd.f32 %v1139, 1e-06
        %v1204 = vadd.f32 %v1140, 1e-06
        %v1205 = vadd.f32 %v1141, 1e-06
        %v1206 = vadd.f32 %v1142, 1e-06
        %v1207 = vadd.f32 %v1143, 1e-06
        %v1208 = vadd.f32 %v1144, 1e-06
        %v1209 = vadd.f32 %v1145, 1e-06
        %v1210 = vadd.f32 %v1146, 1e-06
        %v1211 = vadd.f32 %v1147, 1e-06
        %v1212 = vadd.f32 %v1148, 1e-06
        %v1213 = vadd.f32 %v1149, 1e-06
        %v1214 = vadd.f32 %v1150, 1e-06
        %v1215 = vadd.f32 %v1151, 1e-06
        %v1216 = vadd.f32 %v1152, 1e-06
        %v1217 = vrsqrt.pop %v1153
        %v1218 = vmul.f32 %v1217, %v1153
        %v1219 = vmul.f32 %v1218, %v1217
        %v1220 = vmul.f32 0.5, %v1219
        %v1221 = vsub.f32 1.5, %v1220
        %v1222 = vmul.f32 %v1217, %v1221
        %vm1223 = vweird.f32 %v1153
        %vm1224 = vweird.f32 %v1217
        %vm1225 = vmor %vm1223, %vm1224
        %v1226 = vsel %vm1225, %v1217, %v1222
        %v1227 = vrsqrt.pop %v1154
        %v1228 = vmul.f32 %v1227, %v1154
        %v1229 = vmul.f32 %v1228, %v1227
        %v1230 = vmul.f32 0.5, %v1229
        %v1231 = vsub.f32 1.5, %v1230
        %v1232 = vmul.f32 %v1227, %v1231
        %vm1233 = vweird.f32 %v1154
        %vm1234 = vweird.f32 %v1227
        %vm1235 = vmor %vm1233, %vm1234
        %v1236 = vsel %vm1235, %v1227, %v1232
        %v1237 = vrsqrt.pop %v1155
        %v1238 = vmul.f32 %v1237, %v1155
        %v1239 = vmul.f32 %v1238, %v1237
        %v1240 = vmul.f32 0.5, %v1239
        %v1241 = vsub.f32 1.5, %v1240
        %v1242 = vmul.f32 %v1237, %v1241
        %vm1243 = vweird.f32 %v1155
        %vm1244 = vweird.f32 %v1237
        %vm1245 = vmor %vm1243, %vm1244
        %v1246 = vsel %vm1245, %v1237, %v1242
        %v1247 = vrsqrt.pop %v1156
        %v1248 = vmul.f32 %v1247, %v1156
        %v1249 = vmul.f32 %v1248, %v1247
        %v1250 = vmul.f32 0.5, %v1249
        %v1251 = vsub.f32 1.5, %v1250
        %v1252 = vmul.f32 %v1247, %v1251
        %vm1253 = vweird.f32 %v1156
        %vm1254 = vweird.f32 %v1247
        %vm1255 = vmor %vm1253, %vm1254
        %v1256 = vsel %vm1255, %v1247, %v1252
        %v1257 = vrsqrt.pop %v1157
        %v1258 = vmul.f32 %v1257, %v1157
        %v1259 = vmul.f32 %v1258, %v1257
        %v1260 = vmul.f32 0.5, %v1259
        %v1261 = vsub.f32 1.5, %v1260
        %v1262 = vmul.f32 %v1257, %v1261
        %vm1263 = vweird.f32 %v1157
        %vm1264 = vweird.f32 %v1257
        %vm1265 = vmor %vm1263, %vm1264
        %v1266 = vsel %vm1265, %v1257, %v1262
        %v1267 = vrsqrt.pop %v1158
        %v1268 = vmul.f32 %v1267, %v1158
        %v1269 = vmul.f32 %v1268, %v1267
        %v1270 = vmul.f32 0.5, %v1269
        %v1271 = vsub.f32 1.5, %v1270
        %v1272 = vmul.f32 %v1267, %v1271
        %vm1273 = vweird.f32 %v1158
        %vm1274 = vweird.f32 %v1267
        %vm1275 = vmor %vm1273, %vm1274
        %v1276 = vsel %vm1275, %v1267, %v1272
        %v1277 = vrsqrt.pop %v1159
        %v1278 = vmul.f32 %v1277, %v1159
        %v1279 = vmul.f32 %v1278, %v1277
        %v1280 = vmul.f32 0.5, %v1279
        %v1281 = vsub.f32 1.5, %v1280
        %v1282 = vmul.f32 %v1277, %v1281
        %vm1283 = vweird.f32 %v1159
        %vm1284 = vweird.f32 %v1277
        %vm1285 = vmor %vm1283, %vm1284
        %v1286 = vsel %vm1285, %v1277, %v1282
        %v1287 = vrsqrt.pop %v1160
        %v1288 = vmul.f32 %v1287, %v1160
        %v1289 = vmul.f32 %v1288, %v1287
        %v1290 = vmul.f32 0.5, %v1289
        %v1291 = vsub.f32 1.5, %v1290
        %v1292 = vmul.f32 %v1287, %v1291
        %vm1293 = vweird.f32 %v1160
        %vm1294 = vweird.f32 %v1287
        %vm1295 = vmor %vm1293, %vm1294
        %v1296 = vsel %vm1295, %v1287, %v1292
        %v1297 = vrsqrt.pop %v1161
        %v1298 = vmul.f32 %v1297, %v1161
        %v1299 = vmul.f32 %v1298, %v1297
        %v1300 = vmul.f32 0.5, %v1299
        %v1301 = vsub.f32 1.5, %v1300
        %v1302 = vmul.f32 %v1297, %v1301
        %vm1303 = vweird.f32 %v1161
        %vm1304 = vweird.f32 %v1297
        %vm1305 = vmor %vm1303, %vm1304
        %v1306 = vsel %vm1305, %v1297, %v1302
        %v1307 = vrsqrt.pop %v1162
        %v1308 = vmul.f32 %v1307, %v1162
        %v1309 = vmul.f32 %v1308, %v1307
        %v1310 = vmul.f32 0.5, %v1309
        %v1311 = vsub.f32 1.5, %v1310
        %v1312 = vmul.f32 %v1307, %v1311
        %vm1313 = vweird.f32 %v1162
        %vm1314 = vweird.f32 %v1307
        %vm1315 = vmor %vm1313, %vm1314
        %v1316 = vsel %vm1315, %v1307, %v1312
        %v1317 = vrsqrt.pop %v1163
        %v1318 = vmul.f32 %v1317, %v1163
        %v1319 = vmul.f32 %v1318, %v1317
        %v1320 = vmul.f32 0.5, %v1319
        %v1321 = vsub.f32 1.5, %v1320
        %v1322 = vmul.f32 %v1317, %v1321
        %vm1323 = vweird.f32 %v1163
        %vm1324 = vweird.f32 %v1317
        %vm1325 = vmor %vm1323, %vm1324
        %v1326 = vsel %vm1325, %v1317, %v1322
        %v1327 = vrsqrt.pop %v1164
        %v1328 = vmul.f32 %v1327, %v1164
        %v1329 = vmul.f32 %v1328, %v1327
        %v1330 = vmul.f32 0.5, %v1329
        %v1331 = vsub.f32 1.5, %v1330
        %v1332 = vmul.f32 %v1327, %v1331
        %vm1333 = vweird.f32 %v1164
        %vm1334 = vweird.f32 %v1327
        %vm1335 = vmor %vm1333, %vm1334
        %v1336 = vsel %vm1335, %v1327, %v1332
        %v1337 = vrsqrt.pop %v1165
        %v1338 = vmul.f32 %v1337, %v1165
        %v1339 = vmul.f32 %v1338, %v1337
        %v1340 = vmul.f32 0.5, %v1339
        %v1341 = vsub.f32 1.5, %v1340
        %v1342 = vmul.f32 %v1337, %v1341
        %vm1343 = vweird.f32 %v1165
        %vm1344 = vweird.f32 %v1337
        %vm1345 = vmor %vm1343, %vm1344
        %v1346 = vsel %vm1345, %v1337, %v1342
        %v1347 = vrsqrt.pop %v1166
        %v1348 = vmul.f32 %v1347, %v1166
        %v1349 = vmul.f32 %v1348, %v1347
        %v1350 = vmul.f32 0.5, %v1349
        %v1351 = vsub.f32 1.5, %v1350
        %v1352 = vmul.f32 %v1347, %v1351
        %vm1353 = vweird.f32 %v1166
        %vm1354 = vweird.f32 %v1347
        %vm1355 = vmor %vm1353, %vm1354
        %v1356 = vsel %vm1355, %v1347, %v1352
        %v1357 = vrsqrt.pop %v1167
        %v1358 = vmul.f32 %v1357, %v1167
        %v1359 = vmul.f32 %v1358, %v1357
        %v1360 = vmul.f32 0.5, %v1359
        %v1361 = vsub.f32 1.5, %v1360
        %v1362 = vmul.f32 %v1357, %v1361
        %vm1363 = vweird.f32 %v1167
        %vm1364 = vweird.f32 %v1357
        %vm1365 = vmor %vm1363, %vm1364
        %v1366 = vsel %vm1365, %v1357, %v1362
        %v1367 = vrsqrt.pop %v1168
        %v1368 = vmul.f32 %v1367, %v1168
        %v1369 = vmul.f32 %v1368, %v1367
        %v1370 = vmul.f32 0.5, %v1369
        %v1371 = vsub.f32 1.5, %v1370
        %v1372 = vmul.f32 %v1367, %v1371
        %vm1373 = vweird.f32 %v1168
        %vm1374 = vweird.f32 %v1367
        %vm1375 = vmor %vm1373, %vm1374
        %v1376 = vsel %vm1375, %v1367, %v1372
        %v1377 = vrsqrt.pop %v1169
        %v1378 = vmul.f32 %v1377, %v1169
        %v1379 = vmul.f32 %v1378, %v1377
        %v1380 = vmul.f32 0.5, %v1379
        %v1381 = vsub.f32 1.5, %v1380
        %v1382 = vmul.f32 %v1377, %v1381
        %vm1383 = vweird.f32 %v1169
        %vm1384 = vweird.f32 %v1377
        %vm1385 = vmor %vm1383, %vm1384
        %v1386 = vsel %vm1385, %v1377, %v1382
        %v1387 = vrsqrt.pop %v1170
        %v1388 = vmul.f32 %v1387, %v1170
        %v1389 = vmul.f32 %v1388, %v1387
        %v1390 = vmul.f32 0.5, %v1389
        %v1391 = vsub.f32 1.5, %v1390
        %v1392 = vmul.f32 %v1387, %v1391
        %vm1393 = vweird.f32 %v1170
        %vm1394 = vweird.f32 %v1387
        %vm1395 = vmor %vm1393, %vm1394
        %v1396 = vsel %vm1395, %v1387, %v1392
        %v1397 = vrsqrt.pop %v1171
        %v1398 = vmul.f32 %v1397, %v1171
        %v1399 = vmul.f32 %v1398, %v1397
        %v1400 = vmul.f32 0.5, %v1399
        %v1401 = vsub.f32 1.5, %v1400
        %v1402 = vmul.f32 %v1397, %v1401
        %vm1403 = vweird.f32 %v1171
        %vm1404 = vweird.f32 %v1397
        %vm1405 = vmor %vm1403, %vm1404
        %v1406 = vsel %vm1405, %v1397, %v1402
        %v1407 = vrsqrt.pop %v1172
        %v1408 = vmul.f32 %v1407, %v1172
        %v1409 = vmul.f32 %v1408, %v1407
        %v1410 = vmul.f32 0.5, %v1409
        %v1411 = vsub.f32 1.5, %v1410
        %v1412 = vmul.f32 %v1407, %v1411
        %vm1413 = vweird.f32 %v1172
        %vm1414 = vweird.f32 %v1407
        %vm1415 = vmor %vm1413, %vm1414
        %v1416 = vsel %vm1415, %v1407, %v1412
        %v1417 = vrsqrt.pop %v1173
        %v1418 = vmul.f32 %v1417, %v1173
        %v1419 = vmul.f32 %v1418, %v1417
        %v1420 = vmul.f32 0.5, %v1419
        %v1421 = vsub.f32 1.5, %v1420
        %v1422 = vmul.f32 %v1417, %v1421
        %vm1423 = vweird.f32 %v1173
        %vm1424 = vweird.f32 %v1417
        %vm1425 = vmor %vm1423, %vm1424
        %v1426 = vsel %vm1425, %v1417, %v1422
        %v1427 = vrsqrt.pop %v1174
        %v1428 = vmul.f32 %v1427, %v1174
        %v1429 = vmul.f32 %v1428, %v1427
        %v1430 = vmul.f32 0.5, %v1429
        %v1431 = vsub.f32 1.5, %v1430
        %v1432 = vmul.f32 %v1427, %v1431
        %vm1433 = vweird.f32 %v1174
        %vm1434 = vweird.f32 %v1427
        %vm1435 = vmor %vm1433, %vm1434
        %v1436 = vsel %vm1435, %v1427, %v1432
        %v1437 = vrsqrt.pop %v1175
        %v1438 = vmul.f32 %v1437, %v1175
        %v1439 = vmul.f32 %v1438, %v1437
        %v1440 = vmul.f32 0.5, %v1439
        %v1441 = vsub.f32 1.5, %v1440
        %v1442 = vmul.f32 %v1437, %v1441
        %vm1443 = vweird.f32 %v1175
        %vm1444 = vweird.f32 %v1437
        %vm1445 = vmor %vm1443, %vm1444
        %v1446 = vsel %vm1445, %v1437, %v1442
        %v1447 = vrsqrt.pop %v1176
        %v1448 = vmul.f32 %v1447, %v1176
        %v1449 = vmul.f32 %v1448, %v1447
        %v1450 = vmul.f32 0.5, %v1449
        %v1451 = vsub.f32 1.5, %v1450
        %v1452 = vmul.f32 %v1447, %v1451
        %vm1453 = vweird.f32 %v1176
        %vm1454 = vweird.f32 %v1447
        %vm1455 = vmor %vm1453, %vm1454
        %v1456 = vsel %vm1455, %v1447, %v1452
        %v1457 = vrsqrt.pop %v1177
        %v1458 = vmul.f32 %v1457, %v1177
        %v1459 = vmul.f32 %v1458, %v1457
        %v1460 = vmul.f32 0.5, %v1459
        %v1461 = vsub.f32 1.5, %v1460
        %v1462 = vmul.f32 %v1457, %v1461
        %vm1463 = vweird.f32 %v1177
        %vm1464 = vweird.f32 %v1457
        %vm1465 = vmor %vm1463, %vm1464
        %v1466 = vsel %vm1465, %v1457, %v1462
        %v1467 = vrsqrt.pop %v1178
        %v1468 = vmul.f32 %v1467, %v1178
        %v1469 = vmul.f32 %v1468, %v1467
        %v1470 = vmul.f32 0.5, %v1469
        %v1471 = vsub.f32 1.5, %v1470
        %v1472 = vmul.f32 %v1467, %v1471
        %vm1473 = vweird.f32 %v1178
        %vm1474 = vweird.f32 %v1467
        %vm1475 = vmor %vm1473, %vm1474
        %v1476 = vsel %vm1475, %v1467, %v1472
        %v1477 = vrsqrt.pop %v1179
        %v1478 = vmul.f32 %v1477, %v1179
        %v1479 = vmul.f32 %v1478, %v1477
        %v1480 = vmul.f32 0.5, %v1479
        %v1481 = vsub.f32 1.5, %v1480
        %v1482 = vmul.f32 %v1477, %v1481
        %vm1483 = vweird.f32 %v1179
        %vm1484 = vweird.f32 %v1477
        %vm1485 = vmor %vm1483, %vm1484
        %v1486 = vsel %vm1485, %v1477, %v1482
        %v1487 = vrsqrt.pop %v1180
        %v1488 = vmul.f32 %v1487, %v1180
        %v1489 = vmul.f32 %v1488, %v1487
        %v1490 = vmul.f32 0.5, %v1489
        %v1491 = vsub.f32 1.5, %v1490
        %v1492 = vmul.f32 %v1487, %v1491
        %vm1493 = vweird.f32 %v1180
        %vm1494 = vweird.f32 %v1487
        %vm1495 = vmor %vm1493, %vm1494
        %v1496 = vsel %vm1495, %v1487, %v1492
        %v1497 = vrsqrt.pop %v1181
        %v1498 = vmul.f32 %v1497, %v1181
        %v1499 = vmul.f32 %v1498, %v1497
        %v1500 = vmul.f32 0.5, %v1499
        %v1501 = vsub.f32 1.5, %v1500
        %v1502 = vmul.f32 %v1497, %v1501
        %vm1503 = vweird.f32 %v1181
        %vm1504 = vweird.f32 %v1497
        %vm1505 = vmor %vm1503, %vm1504
        %v1506 = vsel %vm1505, %v1497, %v1502
        %v1507 = vrsqrt.pop %v1182
        %v1508 = vmul.f32 %v1507, %v1182
        %v1509 = vmul.f32 %v1508, %v1507
        %v1510 = vmul.f32 0.5, %v1509
        %v1511 = vsub.f32 1.5, %v1510
        %v1512 = vmul.f32 %v1507, %v1511
        %vm1513 = vweird.f32 %v1182
        %vm1514 = vweird.f32 %v1507
        %vm1515 = vmor %vm1513, %vm1514
        %v1516 = vsel %vm1515, %v1507, %v1512
        %v1517 = vrsqrt.pop %v1183
        %v1518 = vmul.f32 %v1517, %v1183
        %v1519 = vmul.f32 %v1518, %v1517
        %v1520 = vmul.f32 0.5, %v1519
        %v1521 = vsub.f32 1.5, %v1520
        %v1522 = vmul.f32 %v1517, %v1521
        %vm1523 = vweird.f32 %v1183
        %vm1524 = vweird.f32 %v1517
        %vm1525 = vmor %vm1523, %vm1524
        %v1526 = vsel %vm1525, %v1517, %v1522
        %v1527 = vrsqrt.pop %v1184
        %v1528 = vmul.f32 %v1527, %v1184
        %v1529 = vmul.f32 %v1528, %v1527
        %v1530 = vmul.f32 0.5, %v1529
        %v1531 = vsub.f32 1.5, %v1530
        %v1532 = vmul.f32 %v1527, %v1531
        %vm1533 = vweird.f32 %v1184
        %vm1534 = vweird.f32 %v1527
        %vm1535 = vmor %vm1533, %vm1534
        %v1536 = vsel %vm1535, %v1527, %v1532
        %v1537 = vrsqrt.pop %v1185
        %v1538 = vmul.f32 %v1537, %v1185
        %v1539 = vmul.f32 %v1538, %v1537
        %v1540 = vmul.f32 0.5, %v1539
        %v1541 = vsub.f32 1.5, %v1540
        %v1542 = vmul.f32 %v1537, %v1541
        %vm1543 = vweird.f32 %v1185
        %vm1544 = vweird.f32 %v1537
        %vm1545 = vmor %vm1543, %vm1544
        %v1546 = vsel %vm1545, %v1537, %v1542
        %v1547 = vrsqrt.pop %v1186
        %v1548 = vmul.f32 %v1547, %v1186
        %v1549 = vmul.f32 %v1548, %v1547
        %v1550 = vmul.f32 0.5, %v1549
        %v1551 = vsub.f32 1.5, %v1550
        %v1552 = vmul.f32 %v1547, %v1551
        %vm1553 = vweird.f32 %v1186
        %vm1554 = vweird.f32 %v1547
        %vm1555 = vmor %vm1553, %vm1554
        %v1556 = vsel %vm1555, %v1547, %v1552
        %v1557 = vrsqrt.pop %v1187
        %v1558 = vmul.f32 %v1557, %v1187
        %v1559 = vmul.f32 %v1558, %v1557
        %v1560 = vmul.f32 0.5, %v1559
        %v1561 = vsub.f32 1.5, %v1560
        %v1562 = vmul.f32 %v1557, %v1561
        %vm1563 = vweird.f32 %v1187
        %vm1564 = vweird.f32 %v1557
        %vm1565 = vmor %vm1563, %vm1564
        %v1566 = vsel %vm1565, %v1557, %v1562
        %v1567 = vrsqrt.pop %v1188
        %v1568 = vmul.f32 %v1567, %v1188
        %v1569 = vmul.f32 %v1568, %v1567
        %v1570 = vmul.f32 0.5, %v1569
        %v1571 = vsub.f32 1.5, %v1570
        %v1572 = vmul.f32 %v1567, %v1571
        %vm1573 = vweird.f32 %v1188
        %vm1574 = vweird.f32 %v1567
        %vm1575 = vmor %vm1573, %vm1574
        %v1576 = vsel %vm1575, %v1567, %v1572
        %v1577 = vrsqrt.pop %v1189
        %v1578 = vmul.f32 %v1577, %v1189
        %v1579 = vmul.f32 %v1578, %v1577
        %v1580 = vmul.f32 0.5, %v1579
        %v1581 = vsub.f32 1.5, %v1580
        %v1582 = vmul.f32 %v1577, %v1581
        %vm1583 = vweird.f32 %v1189
        %vm1584 = vweird.f32 %v1577
        %vm1585 = vmor %vm1583, %vm1584
        %v1586 = vsel %vm1585, %v1577, %v1582
        %v1587 = vrsqrt.pop %v1190
        %v1588 = vmul.f32 %v1587, %v1190
        %v1589 = vmul.f32 %v1588, %v1587
        %v1590 = vmul.f32 0.5, %v1589
        %v1591 = vsub.f32 1.5, %v1590
        %v1592 = vmul.f32 %v1587, %v1591
        %vm1593 = vweird.f32 %v1190
        %vm1594 = vweird.f32 %v1587
        %vm1595 = vmor %vm1593, %vm1594
        %v1596 = vsel %vm1595, %v1587, %v1592
        %v1597 = vrsqrt.pop %v1191
        %v1598 = vmul.f32 %v1597, %v1191
        %v1599 = vmul.f32 %v1598, %v1597
        %v1600 = vmul.f32 0.5, %v1599
        %v1601 = vsub.f32 1.5, %v1600
        %v1602 = vmul.f32 %v1597, %v1601
        %vm1603 = vweird.f32 %v1191
        %vm1604 = vweird.f32 %v1597
        %vm1605 = vmor %vm1603, %vm1604
        %v1606 = vsel %vm1605, %v1597, %v1602
        %v1607 = vrsqrt.pop %v1192
        %v1608 = vmul.f32 %v1607, %v1192
        %v1609 = vmul.f32 %v1608, %v1607
        %v1610 = vmul.f32 0.5, %v1609
        %v1611 = vsub.f32 1.5, %v1610
        %v1612 = vmul.f32 %v1607, %v1611
        %vm1613 = vweird.f32 %v1192
        %vm1614 = vweird.f32 %v1607
        %vm1615 = vmor %vm1613, %vm1614
        %v1616 = vsel %vm1615, %v1607, %v1612
        %v1617 = vrsqrt.pop %v1193
        %v1618 = vmul.f32 %v1617, %v1193
        %v1619 = vmul.f32 %v1618, %v1617
        %v1620 = vmul.f32 0.5, %v1619
        %v1621 = vsub.f32 1.5, %v1620
        %v1622 = vmul.f32 %v1617, %v1621
        %vm1623 = vweird.f32 %v1193
        %vm1624 = vweird.f32 %v1617
        %vm1625 = vmor %vm1623, %vm1624
        %v1626 = vsel %vm1625, %v1617, %v1622
        %v1627 = vrsqrt.pop %v1194
        %v1628 = vmul.f32 %v1627, %v1194
        %v1629 = vmul.f32 %v1628, %v1627
        %v1630 = vmul.f32 0.5, %v1629
        %v1631 = vsub.f32 1.5, %v1630
        %v1632 = vmul.f32 %v1627, %v1631
        %vm1633 = vweird.f32 %v1194
        %vm1634 = vweird.f32 %v1627
        %vm1635 = vmor %vm1633, %vm1634
        %v1636 = vsel %vm1635, %v1627, %v1632
        %v1637 = vrsqrt.pop %v1195
        %v1638 = vmul.f32 %v1637, %v1195
        %v1639 = vmul.f32 %v1638, %v1637
        %v1640 = vmul.f32 0.5, %v1639
        %v1641 = vsub.f32 1.5, %v1640
        %v1642 = vmul.f32 %v1637, %v1641
        %vm1643 = vweird.f32 %v1195
        %vm1644 = vweird.f32 %v1637
        %vm1645 = vmor %vm1643, %vm1644
        %v1646 = vsel %vm1645, %v1637, %v1642
        %v1647 = vrsqrt.pop %v1196
        %v1648 = vmul.f32 %v1647, %v1196
        %v1649 = vmul.f32 %v1648, %v1647
        %v1650 = vmul.f32 0.5, %v1649
        %v1651 = vsub.f32 1.5, %v1650
        %v1652 = vmul.f32 %v1647, %v1651
        %vm1653 = vweird.f32 %v1196
        %vm1654 = vweird.f32 %v1647
        %vm1655 = vmor %vm1653, %vm1654
        %v1656 = vsel %vm1655, %v1647, %v1652
        %v1657 = vrsqrt.pop %v1197
        %v1658 = vmul.f32 %v1657, %v1197
        %v1659 = vmul.f32 %v1658, %v1657
        %v1660 = vmul.f32 0.5, %v1659
        %v1661 = vsub.f32 1.5, %v1660
        %v1662 = vmul.f32 %v1657, %v1661
        %vm1663 = vweird.f32 %v1197
        %vm1664 = vweird.f32 %v1657
        %vm1665 = vmor %vm1663, %vm1664
        %v1666 = vsel %vm1665, %v1657, %v1662
        %v1667 = vrsqrt.pop %v1198
        %v1668 = vmul.f32 %v1667, %v1198
        %v1669 = vmul.f32 %v1668, %v1667
        %v1670 = vmul.f32 0.5, %v1669
        %v1671 = vsub.f32 1.5, %v1670
        %v1672 = vmul.f32 %v1667, %v1671
        %vm1673 = vweird.f32 %v1198
        %vm1674 = vweird.f32 %v1667
        %vm1675 = vmor %vm1673, %vm1674
        %v1676 = vsel %vm1675, %v1667, %v1672
        %v1677 = vrsqrt.pop %v1199
        %v1678 = vmul.f32 %v1677, %v1199
        %v1679 = vmul.f32 %v1678, %v1677
        %v1680 = vmul.f32 0.5, %v1679
        %v1681 = vsub.f32 1.5, %v1680
        %v1682 = vmul.f32 %v1677, %v1681
        %vm1683 = vweird.f32 %v1199
        %vm1684 = vweird.f32 %v1677
        %vm1685 = vmor %vm1683, %vm1684
        %v1686 = vsel %vm1685, %v1677, %v1682
        %v1687 = vrsqrt.pop %v1200
        %v1688 = vmul.f32 %v1687, %v1200
        %v1689 = vmul.f32 %v1688, %v1687
        %v1690 = vmul.f32 0.5, %v1689
        %v1691 = vsub.f32 1.5, %v1690
        %v1692 = vmul.f32 %v1687, %v1691
        %vm1693 = vweird.f32 %v1200
        %vm1694 = vweird.f32 %v1687
        %vm1695 = vmor %vm1693, %vm1694
        %v1696 = vsel %vm1695, %v1687, %v1692
        %v1697 = vrsqrt.pop %v1201
        %v1698 = vmul.f32 %v1697, %v1201
        %v1699 = vmul.f32 %v1698, %v1697
        %v1700 = vmul.f32 0.5, %v1699
        %v1701 = vsub.f32 1.5, %v1700
        %v1702 = vmul.f32 %v1697, %v1701
        %vm1703 = vweird.f32 %v1201
        %vm1704 = vweird.f32 %v1697
        %vm1705 = vmor %vm1703, %vm1704
        %v1706 = vsel %vm1705, %v1697, %v1702
        %v1707 = vrsqrt.pop %v1202
        %v1708 = vmul.f32 %v1707, %v1202
        %v1709 = vmul.f32 %v1708, %v1707
        %v1710 = vmul.f32 0.5, %v1709
        %v1711 = vsub.f32 1.5, %v1710
        %v1712 = vmul.f32 %v1707, %v1711
        %vm1713 = vweird.f32 %v1202
        %vm1714 = vweird.f32 %v1707
        %vm1715 = vmor %vm1713, %vm1714
        %v1716 = vsel %vm1715, %v1707, %v1712
        %v1717 = vrsqrt.pop %v1203
        %v1718 = vmul.f32 %v1717, %v1203
        %v1719 = vmul.f32 %v1718, %v1717
        %v1720 = vmul.f32 0.5, %v1719
        %v1721 = vsub.f32 1.5, %v1720
        %v1722 = vmul.f32 %v1717, %v1721
        %vm1723 = vweird.f32 %v1203
        %vm1724 = vweird.f32 %v1717
        %vm1725 = vmor %vm1723, %vm1724
        %v1726 = vsel %vm1725, %v1717, %v1722
        %v1727 = vrsqrt.pop %v1204
        %v1728 = vmul.f32 %v1727, %v1204
        %v1729 = vmul.f32 %v1728, %v1727
        %v1730 = vmul.f32 0.5, %v1729
        %v1731 = vsub.f32 1.5, %v1730
        %v1732 = vmul.f32 %v1727, %v1731
        %vm1733 = vweird.f32 %v1204
        %vm1734 = vweird.f32 %v1727
        %vm1735 = vmor %vm1733, %vm1734
        %v1736 = vsel %vm1735, %v1727, %v1732
        %v1737 = vrsqrt.pop %v1205
        %v1738 = vmul.f32 %v1737, %v1205
        %v1739 = vmul.f32 %v1738, %v1737
        %v1740 = vmul.f32 0.5, %v1739
        %v1741 = vsub.f32 1.5, %v1740
        %v1742 = vmul.f32 %v1737, %v1741
        %vm1743 = vweird.f32 %v1205
        %vm1744 = vweird.f32 %v1737
        %vm1745 = vmor %vm1743, %vm1744
        %v1746 = vsel %vm1745, %v1737, %v1742
        %v1747 = vrsqrt.pop %v1206
        %v1748 = vmul.f32 %v1747, %v1206
        %v1749 = vmul.f32 %v1748, %v1747
        %v1750 = vmul.f32 0.5, %v1749
        %v1751 = vsub.f32 1.5, %v1750
        %v1752 = vmul.f32 %v1747, %v1751
        %vm1753 = vweird.f32 %v1206
        %vm1754 = vweird.f32 %v1747
        %vm1755 = vmor %vm1753, %vm1754
        %v1756 = vsel %vm1755, %v1747, %v1752
        %v1757 = vrsqrt.pop %v1207
        %v1758 = vmul.f32 %v1757, %v1207
        %v1759 = vmul.f32 %v1758, %v1757
        %v1760 = vmul.f32 0.5, %v1759
        %v1761 = vsub.f32 1.5, %v1760
        %v1762 = vmul.f32 %v1757, %v1761
        %vm1763 = vweird.f32 %v1207
        %vm1764 = vweird.f32 %v1757
        %vm1765 = vmor %vm1763, %vm1764
        %v1766 = vsel %vm1765, %v1757, %v1762
        %v1767 = vrsqrt.pop %v1208
        %v1768 = vmul.f32 %v1767, %v1208
        %v1769 = vmul.f32 %v1768, %v1767
        %v1770 = vmul.f32 0.5, %v1769
        %v1771 = vsub.f32 1.5, %v1770
        %v1772 = vmul.f32 %v1767, %v1771
        %vm1773 = vweird.f32 %v1208
        %vm1774 = vweird.f32 %v1767
        %vm1775 = vmor %vm1773, %vm1774
        %v1776 = vsel %vm1775, %v1767, %v1772
        %v1777 = vrsqrt.pop %v1209
        %v1778 = vmul.f32 %v1777, %v1209
        %v1779 = vmul.f32 %v1778, %v1777
        %v1780 = vmul.f32 0.5, %v1779
        %v1781 = vsub.f32 1.5, %v1780
        %v1782 = vmul.f32 %v1777, %v1781
        %vm1783 = vweird.f32 %v1209
        %vm1784 = vweird.f32 %v1777
        %vm1785 = vmor %vm1783, %vm1784
        %v1786 = vsel %vm1785, %v1777, %v1782
        %v1787 = vrsqrt.pop %v1210
        %v1788 = vmul.f32 %v1787, %v1210
        %v1789 = vmul.f32 %v1788, %v1787
        %v1790 = vmul.f32 0.5, %v1789
        %v1791 = vsub.f32 1.5, %v1790
        %v1792 = vmul.f32 %v1787, %v1791
        %vm1793 = vweird.f32 %v1210
        %vm1794 = vweird.f32 %v1787
        %vm1795 = vmor %vm1793, %vm1794
        %v1796 = vsel %vm1795, %v1787, %v1792
        %v1797 = vrsqrt.pop %v1211
        %v1798 = vmul.f32 %v1797, %v1211
        %v1799 = vmul.f32 %v1798, %v1797
        %v1800 = vmul.f32 0.5, %v1799
        %v1801 = vsub.f32 1.5, %v1800
        %v1802 = vmul.f32 %v1797, %v1801
        %vm1803 = vweird.f32 %v1211
        %vm1804 = vweird.f32 %v1797
        %vm1805 = vmor %vm1803, %vm1804
        %v1806 = vsel %vm1805, %v1797, %v1802
        %v1807 = vrsqrt.pop %v1212
        %v1808 = vmul.f32 %v1807, %v1212
        %v1809 = vmul.f32 %v1808, %v1807
        %v1810 = vmul.f32 0.5, %v1809
        %v1811 = vsub.f32 1.5, %v1810
        %v1812 = vmul.f32 %v1807, %v1811
        %vm1813 = vweird.f32 %v1212
        %vm1814 = vweird.f32 %v1807
        %vm1815 = vmor %vm1813, %vm1814
        %v1816 = vsel %vm1815, %v1807, %v1812
        %v1817 = vrsqrt.pop %v1213
        %v1818 = vmul.f32 %v1817, %v1213
        %v1819 = vmul.f32 %v1818, %v1817
        %v1820 = vmul.f32 0.5, %v1819
        %v1821 = vsub.f32 1.5, %v1820
        %v1822 = vmul.f32 %v1817, %v1821
        %vm1823 = vweird.f32 %v1213
        %vm1824 = vweird.f32 %v1817
        %vm1825 = vmor %vm1823, %vm1824
        %v1826 = vsel %vm1825, %v1817, %v1822
        %v1827 = vrsqrt.pop %v1214
        %v1828 = vmul.f32 %v1827, %v1214
        %v1829 = vmul.f32 %v1828, %v1827
        %v1830 = vmul.f32 0.5, %v1829
        %v1831 = vsub.f32 1.5, %v1830
        %v1832 = vmul.f32 %v1827, %v1831
        %vm1833 = vweird.f32 %v1214
        %vm1834 = vweird.f32 %v1827
        %vm1835 = vmor %vm1833, %vm1834
        %v1836 = vsel %vm1835, %v1827, %v1832
        %v1837 = vrsqrt.pop %v1215
        %v1838 = vmul.f32 %v1837, %v1215
        %v1839 = vmul.f32 %v1838, %v1837
        %v1840 = vmul.f32 0.5, %v1839
        %v1841 = vsub.f32 1.5, %v1840
        %v1842 = vmul.f32 %v1837, %v1841
        %vm1843 = vweird.f32 %v1215
        %vm1844 = vweird.f32 %v1837
        %vm1845 = vmor %vm1843, %vm1844
        %v1846 = vsel %vm1845, %v1837, %v1842
        %v1847 = vrsqrt.pop %v1216
        %v1848 = vmul.f32 %v1847, %v1216
        %v1849 = vmul.f32 %v1848, %v1847
        %v1850 = vmul.f32 0.5, %v1849
        %v1851 = vsub.f32 1.5, %v1850
        %v1852 = vmul.f32 %v1847, %v1851
        %vm1853 = vweird.f32 %v1216
        %vm1854 = vweird.f32 %v1847
        %vm1855 = vmor %vm1853, %vm1854
        %v1856 = vsel %vm1855, %v1847, %v1852
        %v1857 = vmul.f32 %v833, %v1226
        %v1858 = vmul.f32 %v834, %v1236
        %v1859 = vmul.f32 %v835, %v1246
        %v1860 = vmul.f32 %v836, %v1256
        %v1861 = vmul.f32 %v837, %v1266
        %v1862 = vmul.f32 %v838, %v1276
        %v1863 = vmul.f32 %v839, %v1286
        %v1864 = vmul.f32 %v840, %v1296
        %v1865 = vmul.f32 %v841, %v1306
        %v1866 = vmul.f32 %v842, %v1316
        %v1867 = vmul.f32 %v843, %v1326
        %v1868 = vmul.f32 %v844, %v1336
        %v1869 = vmul.f32 %v845, %v1346
        %v1870 = vmul.f32 %v846, %v1356
        %v1871 = vmul.f32 %v847, %v1366
        %v1872 = vmul.f32 %v848, %v1376
        %v1873 = vmul.f32 %v849, %v1386
        %v1874 = vmul.f32 %v850, %v1396
        %v1875 = vmul.f32 %v851, %v1406
        %v1876 = vmul.f32 %v852, %v1416
        %v1877 = vmul.f32 %v853, %v1426
        %v1878 = vmul.f32 %v854, %v1436
        %v1879 = vmul.f32 %v855, %v1446
        %v1880 = vmul.f32 %v856, %v1456
        %v1881 = vmul.f32 %v857, %v1466
        %v1882 = vmul.f32 %v858, %v1476
        %v1883 = vmul.f32 %v859, %v1486
        %v1884 = vmul.f32 %v860, %v1496
        %v1885 = vmul.f32 %v861, %v1506
        %v1886 = vmul.f32 %v862, %v1516
        %v1887 = vmul.f32 %v863, %v1526
        %v1888 = vmul.f32 %v864, %v1536
        %v1889 = vmul.f32 %v865, %v1546
        %v1890 = vmul.f32 %v866, %v1556
        %v1891 = vmul.f32 %v867, %v1566
        %v1892 = vmul.f32 %v868, %v1576
        %v1893 = vmul.f32 %v869, %v1586
        %v1894 = vmul.f32 %v870, %v1596
        %v1895 = vmul.f32 %v871, %v1606
        %v1896 = vmul.f32 %v872, %v1616
        %v1897 = vmul.f32 %v873, %v1626
        %v1898 = vmul.f32 %v874, %v1636
        %v1899 = vmul.f32 %v875, %v1646
        %v1900 = vmul.f32 %v876, %v1656
        %v1901 = vmul.f32 %v877, %v1666
        %v1902 = vmul.f32 %v878, %v1676
        %v1903 = vmul.f32 %v879, %v1686
        %v1904 = vmul.f32 %v880, %v1696
        %v1905 = vmul.f32 %v881, %v1706
        %v1906 = vmul.f32 %v882, %v1716
        %v1907 = vmul.f32 %v883, %v1726
        %v1908 = vmul.f32 %v884, %v1736
        %v1909 = vmul.f32 %v885, %v1746
        %v1910 = vmul.f32 %v886, %v1756
        %v1911 = vmul.f32 %v887, %v1766
        %v1912 = vmul.f32 %v888, %v1776
        %v1913 = vmul.f32 %v889, %v1786
        %v1914 = vmul.f32 %v890, %v1796
        %v1915 = vmul.f32 %v891, %v1806
        %v1916 = vmul.f32 %v892, %v1816
        %v1917 = vmul.f32 %v893, %v1826
        %v1918 = vmul.f32 %v894, %v1836
        %v1919 = vmul.f32 %v895, %v1846
        %v1920 = vmul.f32 %v896, %v1856
        %v1921 = vadd.f32 %v633, 1.0
        %v1923 = vperm.slane %v1921, 0
        %v1925 = vmul.f32 %v1857, %v1923
        %v1926 = vmul.f32 %v1858, %v1923
        %v1927 = vmul.f32 %v1859, %v1923
        %v1928 = vmul.f32 %v1860, %v1923
        %v1929 = vmul.f32 %v1861, %v1923
        %v1930 = vmul.f32 %v1862, %v1923
        %v1931 = vmul.f32 %v1863, %v1923
        %v1932 = vmul.f32 %v1864, %v1923
        %v1933 = vmul.f32 %v1865, %v1923
        %v1934 = vmul.f32 %v1866, %v1923
        %v1935 = vmul.f32 %v1867, %v1923
        %v1936 = vmul.f32 %v1868, %v1923
        %v1937 = vmul.f32 %v1869, %v1923
        %v1938 = vmul.f32 %v1870, %v1923
        %v1939 = vmul.f32 %v1871, %v1923
        %v1940 = vmul.f32 %v1872, %v1923
        %v1941 = vmul.f32 %v1873, %v1923
        %v1942 = vmul.f32 %v1874, %v1923
        %v1943 = vmul.f32 %v1875, %v1923
        %v1944 = vmul.f32 %v1876, %v1923
        %v1945 = vmul.f32 %v1877, %v1923
        %v1946 = vmul.f32 %v1878, %v1923
        %v1947 = vmul.f32 %v1879, %v1923
        %v1948 = vmul.f32 %v1880, %v1923
        %v1949 = vmul.f32 %v1881, %v1923
        %v1950 = vmul.f32 %v1882, %v1923
        %v1951 = vmul.f32 %v1883, %v1923
        %v1952 = vmul.f32 %v1884, %v1923
        %v1953 = vmul.f32 %v1885, %v1923
        %v1954 = vmul.f32 %v1886, %v1923
        %v1955 = vmul.f32 %v1887, %v1923
        %v1956 = vmul.f32 %v1888, %v1923
        %v1957 = vmul.f32 %v1889, %v1923
        %v1958 = vmul.f32 %v1890, %v1923
        %v1959 = vmul.f32 %v1891, %v1923
        %v1960 = vmul.f32 %v1892, %v1923
        %v1961 = vmul.f32 %v1893, %v1923
        %v1962 = vmul.f32 %v1894, %v1923
        %v1963 = vmul.f32 %v1895, %v1923
        %v1964 = vmul.f32 %v1896, %v1923
        %v1965 = vmul.f32 %v1897, %v1923
        %v1966 = vmul.f32 %v1898, %v1923
        %v1967 = vmul.f32 %v1899, %v1923
        %v1968 = vmul.f32 %v1900, %v1923
        %v1969 = vmul.f32 %v1901, %v1923
        %v1970 = vmul.f32 %v1902, %v1923
        %v1971 = vmul.f32 %v1903, %v1923
        %v1972 = vmul.f32 %v1904, %v1923
        %v1973 = vmul.f32 %v1905, %v1923
        %v1974 = vmul.f32 %v1906, %v1923
        %v1975 = vmul.f32 %v1907, %v1923
        %v1976 = vmul.f32 %v1908, %v1923
        %v1977 = vmul.f32 %v1909, %v1923
        %v1978 = vmul.f32 %v1910, %v1923
        %v1979 = vmul.f32 %v1911, %v1923
        %v1980 = vmul.f32 %v1912, %v1923
        %v1981 = vmul.f32 %v1913, %v1923
        %v1982 = vmul.f32 %v1914, %v1923
        %v1983 = vmul.f32 %v1915, %v1923
        %v1984 = vmul.f32 %v1916, %v1923
        %v1985 = vmul.f32 %v1917, %v1923
        %v1986 = vmul.f32 %v1918, %v1923
        %v1987 = vmul.f32 %v1919, %v1923
        %v1988 = vmul.f32 %v1920, %v1923
        %v1990 = vperm.slane %v632, 0
        %v1992 = vadd.f32 %v1925, %v1990
        %v1993 = vadd.f32 %v1926, %v1990
        %v1994 = vadd.f32 %v1927, %v1990
        %v1995 = vadd.f32 %v1928, %v1990
        %v1996 = vadd.f32 %v1929, %v1990
        %v1997 = vadd.f32 %v1930, %v1990
        %v1998 = vadd.f32 %v1931, %v1990
        %v1999 = vadd.f32 %v1932, %v1990
        %v2000 = vadd.f32 %v1933, %v1990
        %v2001 = vadd.f32 %v1934, %v1990
        %v2002 = vadd.f32 %v1935, %v1990
        %v2003 = vadd.f32 %v1936, %v1990
        %v2004 = vadd.f32 %v1937, %v1990
        %v2005 = vadd.f32 %v1938, %v1990
        %v2006 = vadd.f32 %v1939, %v1990
        %v2007 = vadd.f32 %v1940, %v1990
        %v2008 = vadd.f32 %v1941, %v1990
        %v2009 = vadd.f32 %v1942, %v1990
        %v2010 = vadd.f32 %v1943, %v1990
        %v2011 = vadd.f32 %v1944, %v1990
        %v2012 = vadd.f32 %v1945, %v1990
        %v2013 = vadd.f32 %v1946, %v1990
        %v2014 = vadd.f32 %v1947, %v1990
        %v2015 = vadd.f32 %v1948, %v1990
        %v2016 = vadd.f32 %v1949, %v1990
        %v2017 = vadd.f32 %v1950, %v1990
        %v2018 = vadd.f32 %v1951, %v1990
        %v2019 = vadd.f32 %v1952, %v1990
        %v2020 = vadd.f32 %v1953, %v1990
        %v2021 = vadd.f32 %v1954, %v1990
        %v2022 = vadd.f32 %v1955, %v1990
        %v2023 = vadd.f32 %v1956, %v1990
        %v2024 = vadd.f32 %v1957, %v1990
        %v2025 = vadd.f32 %v1958, %v1990
        %v2026 = vadd.f32 %v1959, %v1990
        %v2027 = vadd.f32 %v1960, %v1990
        %v2028 = vadd.f32 %v1961, %v1990
        %v2029 = vadd.f32 %v1962, %v1990
        %v2030 = vadd.f32 %v1963, %v1990
        %v2031 = vadd.f32 %v1964, %v1990
        %v2032 = vadd.f32 %v1965, %v1990
        %v2033 = vadd.f32 %v1966, %v1990
        %v2034 = vadd.f32 %v1967, %v1990
        %v2035 = vadd.f32 %v1968, %v1990
        %v2036 = vadd.f32 %v1969, %v1990
        %v2037 = vadd.f32 %v1970, %v1990
        %v2038 = vadd.f32 %v1971, %v1990
        %v2039 = vadd.f32 %v1972, %v1990
        %v2040 = vadd.f32 %v1973, %v1990
        %v2041 = vadd.f32 %v1974, %v1990
        %v2042 = vadd.f32 %v1975, %v1990
        %v2043 = vadd.f32 %v1976, %v1990
        %v2044 = vadd.f32 %v1977, %v1990
        %v2045 = vadd.f32 %v1978, %v1990
        %v2046 = vadd.f32 %v1979, %v1990
        %v2047 = vadd.f32 %v1980, %v1990
        %v2048 = vadd.f32 %v1981, %v1990
        %v2049 = vadd.f32 %v1982, %v1990
        %v2050 = vadd.f32 %v1983, %v1990
        %v2051 = vadd.f32 %v1984, %v1990
        %v2052 = vadd.f32 %v1985, %v1990
        %v2053 = vadd.f32 %v1986, %v1990
        %v2054 = vadd.f32 %v1987, %v1990
        %v2055 = vadd.f32 %v1988, %v1990
        %v2056 = vpack.c.bf16 %v1993, %v1992
        %v2057 = vpack.c.bf16 %v1995, %v1994
        %v2058 = vpack.c.bf16 %v1997, %v1996
        %v2059 = vpack.c.bf16 %v1999, %v1998
        %v2060 = vpack.c.bf16 %v2001, %v2000
        %v2061 = vpack.c.bf16 %v2003, %v2002
        %v2062 = vpack.c.bf16 %v2005, %v2004
        %v2063 = vpack.c.bf16 %v2007, %v2006
        %v2064 = vpack.c.bf16 %v2009, %v2008
        %v2065 = vpack.c.bf16 %v2011, %v2010
        %v2066 = vpack.c.bf16 %v2013, %v2012
        %v2067 = vpack.c.bf16 %v2015, %v2014
        %v2068 = vpack.c.bf16 %v2017, %v2016
        %v2069 = vpack.c.bf16 %v2019, %v2018
        %v2070 = vpack.c.bf16 %v2021, %v2020
        %v2071 = vpack.c.bf16 %v2023, %v2022
        %v2072 = vpack.c.bf16 %v2025, %v2024
        %v2073 = vpack.c.bf16 %v2027, %v2026
        %v2074 = vpack.c.bf16 %v2029, %v2028
        %v2075 = vpack.c.bf16 %v2031, %v2030
        %v2076 = vpack.c.bf16 %v2033, %v2032
        %v2077 = vpack.c.bf16 %v2035, %v2034
        %v2078 = vpack.c.bf16 %v2037, %v2036
        %v2079 = vpack.c.bf16 %v2039, %v2038
        %v2080 = vpack.c.bf16 %v2041, %v2040
        %v2081 = vpack.c.bf16 %v2043, %v2042
        %v2082 = vpack.c.bf16 %v2045, %v2044
        %v2083 = vpack.c.bf16 %v2047, %v2046
        %v2084 = vpack.c.bf16 %v2049, %v2048
        %v2085 = vpack.c.bf16 %v2051, %v2050
        %v2086 = vpack.c.bf16 %v2053, %v2052
        %v2087 = vpack.c.bf16 %v2055, %v2054
        %v2088 = vld [vmem:[#allocation8] sm:$0xf]
        %v2089 = vld [vmem:[#allocation8 + $0x4] sm:$0xf]
        %v2090 = vld [vmem:[#allocation8 + $0x8] sm:$0xf]
        %v2091 = vld [vmem:[#allocation8 + $0xc] sm:$0xf]
        %v2092 = vld [vmem:[#allocation8 + $0x10] sm:$0xf]
        %v2093 = vld [vmem:[#allocation8 + $0x14] sm:$0xf]
        %v2094 = vld [vmem:[#allocation8 + $0x18] sm:$0xf]
        %v2095 = vld [vmem:[#allocation8 + $0x1c] sm:$0xf]
        %v2096 = vld [vmem:[#allocation8 + $0x20] sm:$0xf]
        %v2097 = vld [vmem:[#allocation8 + $0x24] sm:$0xf]
        %v2098 = vld [vmem:[#allocation8 + $0x28] sm:$0xf]
        %v2099 = vld [vmem:[#allocation8 + $0x2c] sm:$0xf]
        %v2100 = vld [vmem:[#allocation8 + $0x30] sm:$0xf]
        %v2101 = vld [vmem:[#allocation8 + $0x34] sm:$0xf]
        %v2102 = vld [vmem:[#allocation8 + $0x38] sm:$0xf]
        %v2103 = vld [vmem:[#allocation8 + $0x3c] sm:$0xf]
        %v2104 = vld [vmem:[%s6] sm:$0x1]
        %v2106 = vperm.slane %v2104, 0
        %v2124 = vunpack.c.l.b16 %v2088
        %v2125 = vunpack.c.l.b16 %v2089
        %v2126 = vunpack.c.l.b16 %v2090
        %v2127 = vunpack.c.l.b16 %v2091
        %v2128 = vunpack.c.l.b16 %v2092
        %v2129 = vunpack.c.l.b16 %v2093
        %v2130 = vunpack.c.l.b16 %v2094
        %v2131 = vunpack.c.l.b16 %v2095
        %v2132 = vunpack.c.l.b16 %v2096
        %v2133 = vunpack.c.l.b16 %v2097
        %v2134 = vunpack.c.l.b16 %v2098
        %v2135 = vunpack.c.l.b16 %v2099
        %v2136 = vunpack.c.l.b16 %v2100
        %v2137 = vunpack.c.l.b16 %v2101
        %v2138 = vunpack.c.l.b16 %v2102
        %v2139 = vunpack.c.l.b16 %v2103
        %v2140 = vpack.c.b16 %v2125, %v2124
        %v2141 = vpack.c.b16 %v2127, %v2126
        %v2142 = vpack.c.b16 %v2129, %v2128
        %v2143 = vpack.c.b16 %v2131, %v2130
        %v2144 = vpack.c.b16 %v2133, %v2132
        %v2145 = vpack.c.b16 %v2135, %v2134
        %v2146 = vpack.c.b16 %v2137, %v2136
        %v2147 = vpack.c.b16 %v2139, %v2138
        %2156 = vmatpush.bf16.msra.mxu0 %v2147
        %2157 = vmatpush.bf16.msra.mxu0 %v2146
        %2158 = vmatpush.bf16.msra.mxu0 %v2145
        %2159 = vmatpush.bf16.msra.mxu0 %v2144
        %2160 = vmatpush.bf16.msra.mxu0 %v2143
        %2161 = vmatpush.bf16.msra.mxu0 %v2142
        %2162 = vmatpush.bf16.msra.mxu0 %v2141
        %2163 = vmatpush.bf16.msra.mxu0 %v2140
        %2164 = vmatmul.bf16.gmra.mxu0 %v2056
        %v2165 = vpop.f32.mrf.mxu0
        %v2166 = vadd.f32 %v2106, %v2165
        %v2167 = vpop.f32.mrf.mxu0
        %v2168 = vadd.f32 %v2106, %v2167
        %2169 = vmatmul.bf16.gmra.mxu0 %v2057
        %v2170 = vpop.f32.mrf.mxu0
        %v2171 = vadd.f32 %v2106, %v2170
        %v2172 = vpop.f32.mrf.mxu0
        %v2173 = vadd.f32 %v2106, %v2172
        %2174 = vmatmul.bf16.gmra.mxu0 %v2058
        %v2175 = vpop.f32.mrf.mxu0
        %v2176 = vadd.f32 %v2106, %v2175
        %v2177 = vpop.f32.mrf.mxu0
        %v2178 = vadd.f32 %v2106, %v2177
        %2179 = vmatmul.bf16.gmra.mxu0 %v2059
        %v2180 = vpop.f32.mrf.mxu0
        %v2181 = vadd.f32 %v2106, %v2180
        %v2182 = vpop.f32.mrf.mxu0
        %v2183 = vadd.f32 %v2106, %v2182
        %2184 = vmatmul.bf16.gmra.mxu0 %v2060
        %v2185 = vpop.f32.mrf.mxu0
        %v2186 = vadd.f32 %v2106, %v2185
        %v2187 = vpop.f32.mrf.mxu0
        %v2188 = vadd.f32 %v2106, %v2187
        %2189 = vmatmul.bf16.gmra.mxu0 %v2061
        %v2190 = vpop.f32.mrf.mxu0
        %v2191 = vadd.f32 %v2106, %v2190
        %v2192 = vpop.f32.mrf.mxu0
        %v2193 = vadd.f32 %v2106, %v2192
        %2194 = vmatmul.bf16.gmra.mxu0 %v2062
        %v2195 = vpop.f32.mrf.mxu0
        %v2196 = vadd.f32 %v2106, %v2195
        %v2197 = vpop.f32.mrf.mxu0
        %v2198 = vadd.f32 %v2106, %v2197
        %2199 = vmatmul.bf16.gmra.mxu0 %v2063
        %v2200 = vpop.f32.mrf.mxu0
        %v2201 = vadd.f32 %v2106, %v2200
        %v2202 = vpop.f32.mrf.mxu0
        %v2203 = vadd.f32 %v2106, %v2202
        %2204 = vmatmul.bf16.gmra.mxu0 %v2064
        %v2205 = vpop.f32.mrf.mxu0
        %v2206 = vadd.f32 %v2106, %v2205
        %v2207 = vpop.f32.mrf.mxu0
        %v2208 = vadd.f32 %v2106, %v2207
        %2209 = vmatmul.bf16.gmra.mxu0 %v2065
        %v2210 = vpop.f32.mrf.mxu0
        %v2211 = vadd.f32 %v2106, %v2210
        %v2212 = vpop.f32.mrf.mxu0
        %v2213 = vadd.f32 %v2106, %v2212
        %2214 = vmatmul.bf16.gmra.mxu0 %v2066
        %v2215 = vpop.f32.mrf.mxu0
        %v2216 = vadd.f32 %v2106, %v2215
        %v2217 = vpop.f32.mrf.mxu0
        %v2218 = vadd.f32 %v2106, %v2217
        %2219 = vmatmul.bf16.gmra.mxu0 %v2067
        %v2220 = vpop.f32.mrf.mxu0
        %v2221 = vadd.f32 %v2106, %v2220
        %v2222 = vpop.f32.mrf.mxu0
        %v2223 = vadd.f32 %v2106, %v2222
        %2224 = vmatmul.bf16.gmra.mxu0 %v2068
        %v2225 = vpop.f32.mrf.mxu0
        %v2226 = vadd.f32 %v2106, %v2225
        %v2227 = vpop.f32.mrf.mxu0
        %v2228 = vadd.f32 %v2106, %v2227
        %2229 = vmatmul.bf16.gmra.mxu0 %v2069
        %v2230 = vpop.f32.mrf.mxu0
        %v2231 = vadd.f32 %v2106, %v2230
        %v2232 = vpop.f32.mrf.mxu0
        %v2233 = vadd.f32 %v2106, %v2232
        %2234 = vmatmul.bf16.gmra.mxu0 %v2070
        %v2235 = vpop.f32.mrf.mxu0
        %v2236 = vadd.f32 %v2106, %v2235
        %v2237 = vpop.f32.mrf.mxu0
        %v2238 = vadd.f32 %v2106, %v2237
        %2239 = vmatmul.bf16.gmra.mxu0 %v2071
        %v2240 = vpop.f32.mrf.mxu0
        %v2241 = vadd.f32 %v2106, %v2240
        %v2242 = vpop.f32.mrf.mxu0
        %v2243 = vadd.f32 %v2106, %v2242
        %2244 = vmatmul.bf16.gmra.mxu0 %v2072
        %v2245 = vpop.f32.mrf.mxu0
        %v2246 = vadd.f32 %v2106, %v2245
        %v2247 = vpop.f32.mrf.mxu0
        %v2248 = vadd.f32 %v2106, %v2247
        %2249 = vmatmul.bf16.gmra.mxu0 %v2073
        %v2250 = vpop.f32.mrf.mxu0
        %v2251 = vadd.f32 %v2106, %v2250
        %v2252 = vpop.f32.mrf.mxu0
        %v2253 = vadd.f32 %v2106, %v2252
        %2254 = vmatmul.bf16.gmra.mxu0 %v2074
        %v2255 = vpop.f32.mrf.mxu0
        %v2256 = vadd.f32 %v2106, %v2255
        %v2257 = vpop.f32.mrf.mxu0
        %v2258 = vadd.f32 %v2106, %v2257
        %2259 = vmatmul.bf16.gmra.mxu0 %v2075
        %v2260 = vpop.f32.mrf.mxu0
        %v2261 = vadd.f32 %v2106, %v2260
        %v2262 = vpop.f32.mrf.mxu0
        %v2263 = vadd.f32 %v2106, %v2262
        %2264 = vmatmul.bf16.gmra.mxu0 %v2076
        %v2265 = vpop.f32.mrf.mxu0
        %v2266 = vadd.f32 %v2106, %v2265
        %v2267 = vpop.f32.mrf.mxu0
        %v2268 = vadd.f32 %v2106, %v2267
        %2269 = vmatmul.bf16.gmra.mxu0 %v2077
        %v2270 = vpop.f32.mrf.mxu0
        %v2271 = vadd.f32 %v2106, %v2270
        %v2272 = vpop.f32.mrf.mxu0
        %v2273 = vadd.f32 %v2106, %v2272
        %2274 = vmatmul.bf16.gmra.mxu0 %v2078
        %v2275 = vpop.f32.mrf.mxu0
        %v2276 = vadd.f32 %v2106, %v2275
        %v2277 = vpop.f32.mrf.mxu0
        %v2278 = vadd.f32 %v2106, %v2277
        %2279 = vmatmul.bf16.gmra.mxu0 %v2079
        %v2280 = vpop.f32.mrf.mxu0
        %v2281 = vadd.f32 %v2106, %v2280
        %v2282 = vpop.f32.mrf.mxu0
        %v2283 = vadd.f32 %v2106, %v2282
        %2284 = vmatmul.bf16.gmra.mxu0 %v2080
        %v2285 = vpop.f32.mrf.mxu0
        %v2286 = vadd.f32 %v2106, %v2285
        %v2287 = vpop.f32.mrf.mxu0
        %v2288 = vadd.f32 %v2106, %v2287
        %2289 = vmatmul.bf16.gmra.mxu0 %v2081
        %v2290 = vpop.f32.mrf.mxu0
        %v2291 = vadd.f32 %v2106, %v2290
        %v2292 = vpop.f32.mrf.mxu0
        %v2293 = vadd.f32 %v2106, %v2292
        %2294 = vmatmul.bf16.gmra.mxu0 %v2082
        %v2295 = vpop.f32.mrf.mxu0
        %v2296 = vadd.f32 %v2106, %v2295
        %v2297 = vpop.f32.mrf.mxu0
        %v2298 = vadd.f32 %v2106, %v2297
        %2299 = vmatmul.bf16.gmra.mxu0 %v2083
        %v2300 = vpop.f32.mrf.mxu0
        %v2301 = vadd.f32 %v2106, %v2300
        %v2302 = vpop.f32.mrf.mxu0
        %v2303 = vadd.f32 %v2106, %v2302
        %2304 = vmatmul.bf16.gmra.mxu0 %v2084
        %v2305 = vpop.f32.mrf.mxu0
        %v2306 = vadd.f32 %v2106, %v2305
        %v2307 = vpop.f32.mrf.mxu0
        %v2308 = vadd.f32 %v2106, %v2307
        %2309 = vmatmul.bf16.gmra.mxu0 %v2085
        %v2310 = vpop.f32.mrf.mxu0
        %v2311 = vadd.f32 %v2106, %v2310
        %v2312 = vpop.f32.mrf.mxu0
        %v2313 = vadd.f32 %v2106, %v2312
        %2314 = vmatmul.bf16.gmra.mxu0 %v2086
        %v2315 = vpop.f32.mrf.mxu0
        %v2316 = vadd.f32 %v2106, %v2315
        %v2317 = vpop.f32.mrf.mxu0
        %v2318 = vadd.f32 %v2106, %v2317
        %2319 = vmatmul.bf16.gmra.mxu0 %v2087
        %v2320 = vpop.f32.mrf.mxu0
        %v2321 = vadd.f32 %v2106, %v2320
        %v2322 = vpop.f32.mrf.mxu0
        %v2323 = vadd.f32 %v2106, %v2322
        %2324 = vdwg.mxu0
        %v2325 = vld [vmem:[#allocation10] sm:$0xf]
        %v2326 = vld [vmem:[#allocation10 + $0x4] sm:$0xf]
        %v2327 = vld [vmem:[#allocation10 + $0x8] sm:$0xf]
        %v2328 = vld [vmem:[#allocation10 + $0xc] sm:$0xf]
        %v2329 = vld [vmem:[#allocation10 + $0x10] sm:$0xf]
        %v2330 = vld [vmem:[#allocation10 + $0x14] sm:$0xf]
        %v2331 = vld [vmem:[#allocation10 + $0x18] sm:$0xf]
        %v2332 = vld [vmem:[#allocation10 + $0x1c] sm:$0xf]
        %v2333 = vld [vmem:[#allocation10 + $0x20] sm:$0xf]
        %v2334 = vld [vmem:[#allocation10 + $0x24] sm:$0xf]
        %v2335 = vld [vmem:[#allocation10 + $0x28] sm:$0xf]
        %v2336 = vld [vmem:[#allocation10 + $0x2c] sm:$0xf]
        %v2337 = vld [vmem:[#allocation10 + $0x30] sm:$0xf]
        %v2338 = vld [vmem:[#allocation10 + $0x34] sm:$0xf]
        %v2339 = vld [vmem:[#allocation10 + $0x38] sm:$0xf]
        %v2340 = vld [vmem:[#allocation10 + $0x3c] sm:$0xf]
        %v2341 = vld [vmem:[%s7] sm:$0x1]
        %v2343 = vperm.slane %v2341, 0
        %v2361 = vunpack.c.l.b16 %v2325
        %v2362 = vunpack.c.l.b16 %v2326
        %v2363 = vunpack.c.l.b16 %v2327
        %v2364 = vunpack.c.l.b16 %v2328
        %v2365 = vunpack.c.l.b16 %v2329
        %v2366 = vunpack.c.l.b16 %v2330
        %v2367 = vunpack.c.l.b16 %v2331
        %v2368 = vunpack.c.l.b16 %v2332
        %v2369 = vunpack.c.l.b16 %v2333
        %v2370 = vunpack.c.l.b16 %v2334
        %v2371 = vunpack.c.l.b16 %v2335
        %v2372 = vunpack.c.l.b16 %v2336
        %v2373 = vunpack.c.l.b16 %v2337
        %v2374 = vunpack.c.l.b16 %v2338
        %v2375 = vunpack.c.l.b16 %v2339
        %v2376 = vunpack.c.l.b16 %v2340
        %v2377 = vpack.c.b16 %v2362, %v2361
        %v2378 = vpack.c.b16 %v2364, %v2363
        %v2379 = vpack.c.b16 %v2366, %v2365
        %v2380 = vpack.c.b16 %v2368, %v2367
        %v2381 = vpack.c.b16 %v2370, %v2369
        %v2382 = vpack.c.b16 %v2372, %v2371
        %v2383 = vpack.c.b16 %v2374, %v2373
        %v2384 = vpack.c.b16 %v2376, %v2375
        %2393 = vmatpush.bf16.msra.mxu0 %v2384
        %2394 = vmatpush.bf16.msra.mxu0 %v2383
        %2395 = vmatpush.bf16.msra.mxu0 %v2382
        %2396 = vmatpush.bf16.msra.mxu0 %v2381
        %2397 = vmatpush.bf16.msra.mxu0 %v2380
        %2398 = vmatpush.bf16.msra.mxu0 %v2379
        %2399 = vmatpush.bf16.msra.mxu0 %v2378
        %2400 = vmatpush.bf16.msra.mxu0 %v2377
        %2401 = vmatmul.bf16.gmra.mxu0 %v2056
        %v2402 = vpop.f32.mrf.mxu0
        %v2403 = vadd.f32 %v2343, %v2402
        %v2404 = vpop.f32.mrf.mxu0
        %v2405 = vadd.f32 %v2343, %v2404
        %2406 = vmatmul.bf16.gmra.mxu0 %v2057
        %v2407 = vpop.f32.mrf.mxu0
        %v2408 = vadd.f32 %v2343, %v2407
        %v2409 = vpop.f32.mrf.mxu0
        %v2410 = vadd.f32 %v2343, %v2409
        %2411 = vmatmul.bf16.gmra.mxu0 %v2058
        %v2412 = vpop.f32.mrf.mxu0
        %v2413 = vadd.f32 %v2343, %v2412
        %v2414 = vpop.f32.mrf.mxu0
        %v2415 = vadd.f32 %v2343, %v2414
        %2416 = vmatmul.bf16.gmra.mxu0 %v2059
        %v2417 = vpop.f32.mrf.mxu0
        %v2418 = vadd.f32 %v2343, %v2417
        %v2419 = vpop.f32.mrf.mxu0
        %v2420 = vadd.f32 %v2343, %v2419
        %2421 = vmatmul.bf16.gmra.mxu0 %v2060
        %v2422 = vpop.f32.mrf.mxu0
        %v2423 = vadd.f32 %v2343, %v2422
        %v2424 = vpop.f32.mrf.mxu0
        %v2425 = vadd.f32 %v2343, %v2424
        %2426 = vmatmul.bf16.gmra.mxu0 %v2061
        %v2427 = vpop.f32.mrf.mxu0
        %v2428 = vadd.f32 %v2343, %v2427
        %v2429 = vpop.f32.mrf.mxu0
        %v2430 = vadd.f32 %v2343, %v2429
        %2431 = vmatmul.bf16.gmra.mxu0 %v2062
        %v2432 = vpop.f32.mrf.mxu0
        %v2433 = vadd.f32 %v2343, %v2432
        %v2434 = vpop.f32.mrf.mxu0
        %v2435 = vadd.f32 %v2343, %v2434
        %2436 = vmatmul.bf16.gmra.mxu0 %v2063
        %v2437 = vpop.f32.mrf.mxu0
        %v2438 = vadd.f32 %v2343, %v2437
        %v2439 = vpop.f32.mrf.mxu0
        %v2440 = vadd.f32 %v2343, %v2439
        %2441 = vmatmul.bf16.gmra.mxu0 %v2064
        %v2442 = vpop.f32.mrf.mxu0
        %v2443 = vadd.f32 %v2343, %v2442
        %v2444 = vpop.f32.mrf.mxu0
        %v2445 = vadd.f32 %v2343, %v2444
        %2446 = vmatmul.bf16.gmra.mxu0 %v2065
        %v2447 = vpop.f32.mrf.mxu0
        %v2448 = vadd.f32 %v2343, %v2447
        %v2449 = vpop.f32.mrf.mxu0
        %v2450 = vadd.f32 %v2343, %v2449
        %2451 = vmatmul.bf16.gmra.mxu0 %v2066
        %v2452 = vpop.f32.mrf.mxu0
        %v2453 = vadd.f32 %v2343, %v2452
        %v2454 = vpop.f32.mrf.mxu0
        %v2455 = vadd.f32 %v2343, %v2454
        %2456 = vmatmul.bf16.gmra.mxu0 %v2067
        %v2457 = vpop.f32.mrf.mxu0
        %v2458 = vadd.f32 %v2343, %v2457
        %v2459 = vpop.f32.mrf.mxu0
        %v2460 = vadd.f32 %v2343, %v2459
        %2461 = vmatmul.bf16.gmra.mxu0 %v2068
        %v2462 = vpop.f32.mrf.mxu0
        %v2463 = vadd.f32 %v2343, %v2462
        %v2464 = vpop.f32.mrf.mxu0
        %v2465 = vadd.f32 %v2343, %v2464
        %2466 = vmatmul.bf16.gmra.mxu0 %v2069
        %v2467 = vpop.f32.mrf.mxu0
        %v2468 = vadd.f32 %v2343, %v2467
        %v2469 = vpop.f32.mrf.mxu0
        %v2470 = vadd.f32 %v2343, %v2469
        %2471 = vmatmul.bf16.gmra.mxu0 %v2070
        %v2472 = vpop.f32.mrf.mxu0
        %v2473 = vadd.f32 %v2343, %v2472
        %v2474 = vpop.f32.mrf.mxu0
        %v2475 = vadd.f32 %v2343, %v2474
        %2476 = vmatmul.bf16.gmra.mxu0 %v2071
        %v2477 = vpop.f32.mrf.mxu0
        %v2478 = vadd.f32 %v2343, %v2477
        %v2479 = vpop.f32.mrf.mxu0
        %v2480 = vadd.f32 %v2343, %v2479
        %2481 = vmatmul.bf16.gmra.mxu0 %v2072
        %v2482 = vpop.f32.mrf.mxu0
        %v2483 = vadd.f32 %v2343, %v2482
        %v2484 = vpop.f32.mrf.mxu0
        %v2485 = vadd.f32 %v2343, %v2484
        %2486 = vmatmul.bf16.gmra.mxu0 %v2073
        %v2487 = vpop.f32.mrf.mxu0
        %v2488 = vadd.f32 %v2343, %v2487
        %v2489 = vpop.f32.mrf.mxu0
        %v2490 = vadd.f32 %v2343, %v2489
        %2491 = vmatmul.bf16.gmra.mxu0 %v2074
        %v2492 = vpop.f32.mrf.mxu0
        %v2493 = vadd.f32 %v2343, %v2492
        %v2494 = vpop.f32.mrf.mxu0
        %v2495 = vadd.f32 %v2343, %v2494
        %2496 = vmatmul.bf16.gmra.mxu0 %v2075
        %v2497 = vpop.f32.mrf.mxu0
        %v2498 = vadd.f32 %v2343, %v2497
        %v2499 = vpop.f32.mrf.mxu0
        %v2500 = vadd.f32 %v2343, %v2499
        %2501 = vmatmul.bf16.gmra.mxu0 %v2076
        %v2502 = vpop.f32.mrf.mxu0
        %v2503 = vadd.f32 %v2343, %v2502
        %v2504 = vpop.f32.mrf.mxu0
        %v2505 = vadd.f32 %v2343, %v2504
        %2506 = vmatmul.bf16.gmra.mxu0 %v2077
        %v2507 = vpop.f32.mrf.mxu0
        %v2508 = vadd.f32 %v2343, %v2507
        %v2509 = vpop.f32.mrf.mxu0
        %v2510 = vadd.f32 %v2343, %v2509
        %2511 = vmatmul.bf16.gmra.mxu0 %v2078
        %v2512 = vpop.f32.mrf.mxu0
        %v2513 = vadd.f32 %v2343, %v2512
        %v2514 = vpop.f32.mrf.mxu0
        %v2515 = vadd.f32 %v2343, %v2514
        %2516 = vmatmul.bf16.gmra.mxu0 %v2079
        %v2517 = vpop.f32.mrf.mxu0
        %v2518 = vadd.f32 %v2343, %v2517
        %v2519 = vpop.f32.mrf.mxu0
        %v2520 = vadd.f32 %v2343, %v2519
        %2521 = vmatmul.bf16.gmra.mxu0 %v2080
        %v2522 = vpop.f32.mrf.mxu0
        %v2523 = vadd.f32 %v2343, %v2522
        %v2524 = vpop.f32.mrf.mxu0
        %v2525 = vadd.f32 %v2343, %v2524
        %2526 = vmatmul.bf16.gmra.mxu0 %v2081
        %v2527 = vpop.f32.mrf.mxu0
        %v2528 = vadd.f32 %v2343, %v2527
        %v2529 = vpop.f32.mrf.mxu0
        %v2530 = vadd.f32 %v2343, %v2529
        %2531 = vmatmul.bf16.gmra.mxu0 %v2082
        %v2532 = vpop.f32.mrf.mxu0
        %v2533 = vadd.f32 %v2343, %v2532
        %v2534 = vpop.f32.mrf.mxu0
        %v2535 = vadd.f32 %v2343, %v2534
        %2536 = vmatmul.bf16.gmra.mxu0 %v2083
        %v2537 = vpop.f32.mrf.mxu0
        %v2538 = vadd.f32 %v2343, %v2537
        %v2539 = vpop.f32.mrf.mxu0
        %v2540 = vadd.f32 %v2343, %v2539
        %2541 = vmatmul.bf16.gmra.mxu0 %v2084
        %v2542 = vpop.f32.mrf.mxu0
        %v2543 = vadd.f32 %v2343, %v2542
        %v2544 = vpop.f32.mrf.mxu0
        %v2545 = vadd.f32 %v2343, %v2544
        %2546 = vmatmul.bf16.gmra.mxu0 %v2085
        %v2547 = vpop.f32.mrf.mxu0
        %v2548 = vadd.f32 %v2343, %v2547
        %v2549 = vpop.f32.mrf.mxu0
        %v2550 = vadd.f32 %v2343, %v2549
        %2551 = vmatmul.bf16.gmra.mxu0 %v2086
        %v2552 = vpop.f32.mrf.mxu0
        %v2553 = vadd.f32 %v2343, %v2552
        %v2554 = vpop.f32.mrf.mxu0
        %v2555 = vadd.f32 %v2343, %v2554
        %2556 = vmatmul.bf16.gmra.mxu0 %v2087
        %v2557 = vpop.f32.mrf.mxu0
        %v2558 = vadd.f32 %v2343, %v2557
        %v2559 = vpop.f32.mrf.mxu0
        %v2560 = vadd.f32 %v2343, %v2559
        %2561 = vdwg.mxu0
        %v2562 = vld [vmem:[#allocation11] sm:$0xf]
        %v2563 = vld [vmem:[#allocation11 + $0x4] sm:$0xf]
        %v2564 = vld [vmem:[#allocation11 + $0x8] sm:$0xf]
        %v2565 = vld [vmem:[#allocation11 + $0xc] sm:$0xf]
        %v2566 = vld [vmem:[#allocation11 + $0x10] sm:$0xf]
        %v2567 = vld [vmem:[#allocation11 + $0x14] sm:$0xf]
        %v2568 = vld [vmem:[#allocation11 + $0x18] sm:$0xf]
        %v2569 = vld [vmem:[#allocation11 + $0x1c] sm:$0xf]
        %v2570 = vld [vmem:[#allocation11 + $0x20] sm:$0xf]
        %v2571 = vld [vmem:[#allocation11 + $0x24] sm:$0xf]
        %v2572 = vld [vmem:[#allocation11 + $0x28] sm:$0xf]
        %v2573 = vld [vmem:[#allocation11 + $0x2c] sm:$0xf]
        %v2574 = vld [vmem:[#allocation11 + $0x30] sm:$0xf]
        %v2575 = vld [vmem:[#allocation11 + $0x34] sm:$0xf]
        %v2576 = vld [vmem:[#allocation11 + $0x38] sm:$0xf]
        %v2577 = vld [vmem:[#allocation11 + $0x3c] sm:$0xf]
        %v2578 = vld [vmem:[%s8] sm:$0x1]
        %v2580 = vperm.slane %v2578, 0
        %v2598 = vunpack.c.l.b16 %v2562
        %v2599 = vunpack.c.l.b16 %v2563
        %v2600 = vunpack.c.l.b16 %v2564
        %v2601 = vunpack.c.l.b16 %v2565
        %v2602 = vunpack.c.l.b16 %v2566
        %v2603 = vunpack.c.l.b16 %v2567
        %v2604 = vunpack.c.l.b16 %v2568
        %v2605 = vunpack.c.l.b16 %v2569
        %v2606 = vunpack.c.l.b16 %v2570
        %v2607 = vunpack.c.l.b16 %v2571
        %v2608 = vunpack.c.l.b16 %v2572
        %v2609 = vunpack.c.l.b16 %v2573
        %v2610 = vunpack.c.l.b16 %v2574
        %v2611 = vunpack.c.l.b16 %v2575
        %v2612 = vunpack.c.l.b16 %v2576
        %v2613 = vunpack.c.l.b16 %v2577
        %v2614 = vpack.c.b16 %v2599, %v2598
        %v2615 = vpack.c.b16 %v2601, %v2600
        %v2616 = vpack.c.b16 %v2603, %v2602
        %v2617 = vpack.c.b16 %v2605, %v2604
        %v2618 = vpack.c.b16 %v2607, %v2606
        %v2619 = vpack.c.b16 %v2609, %v2608
        %v2620 = vpack.c.b16 %v2611, %v2610
        %v2621 = vpack.c.b16 %v2613, %v2612
        %2630 = vmatpush.bf16.msra.mxu0 %v2621
        %2631 = vmatpush.bf16.msra.mxu0 %v2620
        %2632 = vmatpush.bf16.msra.mxu0 %v2619
        %2633 = vmatpush.bf16.msra.mxu0 %v2618
        %2634 = vmatpush.bf16.msra.mxu0 %v2617
        %2635 = vmatpush.bf16.msra.mxu0 %v2616
        %2636 = vmatpush.bf16.msra.mxu0 %v2615
        %2637 = vmatpush.bf16.msra.mxu0 %v2614
        %2638 = vmatmul.bf16.gmra.mxu0 %v2056
        %v2639 = vpop.f32.mrf.mxu0
        %v2640 = vadd.f32 %v2580, %v2639
        %v2641 = vpop.f32.mrf.mxu0
        %v2642 = vadd.f32 %v2580, %v2641
        %2643 = vmatmul.bf16.gmra.mxu0 %v2057
        %v2644 = vpop.f32.mrf.mxu0
        %v2645 = vadd.f32 %v2580, %v2644
        %v2646 = vpop.f32.mrf.mxu0
        %v2647 = vadd.f32 %v2580, %v2646
        %2648 = vmatmul.bf16.gmra.mxu0 %v2058
        %v2649 = vpop.f32.mrf.mxu0
        %v2650 = vadd.f32 %v2580, %v2649
        %v2651 = vpop.f32.mrf.mxu0
        %v2652 = vadd.f32 %v2580, %v2651
        %2653 = vmatmul.bf16.gmra.mxu0 %v2059
        %v2654 = vpop.f32.mrf.mxu0
        %v2655 = vadd.f32 %v2580, %v2654
        %v2656 = vpop.f32.mrf.mxu0
        %v2657 = vadd.f32 %v2580, %v2656
        %2658 = vmatmul.bf16.gmra.mxu0 %v2060
        %v2659 = vpop.f32.mrf.mxu0
        %v2660 = vadd.f32 %v2580, %v2659
        %v2661 = vpop.f32.mrf.mxu0
        %v2662 = vadd.f32 %v2580, %v2661
        %2663 = vmatmul.bf16.gmra.mxu0 %v2061
        %v2664 = vpop.f32.mrf.mxu0
        %v2665 = vadd.f32 %v2580, %v2664
        %v2666 = vpop.f32.mrf.mxu0
        %v2667 = vadd.f32 %v2580, %v2666
        %2668 = vmatmul.bf16.gmra.mxu0 %v2062
        %v2669 = vpop.f32.mrf.mxu0
        %v2670 = vadd.f32 %v2580, %v2669
        %v2671 = vpop.f32.mrf.mxu0
        %v2672 = vadd.f32 %v2580, %v2671
        %2673 = vmatmul.bf16.gmra.mxu0 %v2063
        %v2674 = vpop.f32.mrf.mxu0
        %v2675 = vadd.f32 %v2580, %v2674
        %v2676 = vpop.f32.mrf.mxu0
        %v2677 = vadd.f32 %v2580, %v2676
        %2678 = vmatmul.bf16.gmra.mxu0 %v2064
        %v2679 = vpop.f32.mrf.mxu0
        %v2680 = vadd.f32 %v2580, %v2679
        %v2681 = vpop.f32.mrf.mxu0
        %v2682 = vadd.f32 %v2580, %v2681
        %2683 = vmatmul.bf16.gmra.mxu0 %v2065
        %v2684 = vpop.f32.mrf.mxu0
        %v2685 = vadd.f32 %v2580, %v2684
        %v2686 = vpop.f32.mrf.mxu0
        %v2687 = vadd.f32 %v2580, %v2686
        %2688 = vmatmul.bf16.gmra.mxu0 %v2066
        %v2689 = vpop.f32.mrf.mxu0
        %v2690 = vadd.f32 %v2580, %v2689
        %v2691 = vpop.f32.mrf.mxu0
        %v2692 = vadd.f32 %v2580, %v2691
        %2693 = vmatmul.bf16.gmra.mxu0 %v2067
        %v2694 = vpop.f32.mrf.mxu0
        %v2695 = vadd.f32 %v2580, %v2694
        %v2696 = vpop.f32.mrf.mxu0
        %v2697 = vadd.f32 %v2580, %v2696
        %2698 = vmatmul.bf16.gmra.mxu0 %v2068
        %v2699 = vpop.f32.mrf.mxu0
        %v2700 = vadd.f32 %v2580, %v2699
        %v2701 = vpop.f32.mrf.mxu0
        %v2702 = vadd.f32 %v2580, %v2701
        %2703 = vmatmul.bf16.gmra.mxu0 %v2069
        %v2704 = vpop.f32.mrf.mxu0
        %v2705 = vadd.f32 %v2580, %v2704
        %v2706 = vpop.f32.mrf.mxu0
        %v2707 = vadd.f32 %v2580, %v2706
        %2708 = vmatmul.bf16.gmra.mxu0 %v2070
        %v2709 = vpop.f32.mrf.mxu0
        %v2710 = vadd.f32 %v2580, %v2709
        %v2711 = vpop.f32.mrf.mxu0
        %v2712 = vadd.f32 %v2580, %v2711
        %2713 = vmatmul.bf16.gmra.mxu0 %v2071
        %v2714 = vpop.f32.mrf.mxu0
        %v2715 = vadd.f32 %v2580, %v2714
        %v2716 = vpop.f32.mrf.mxu0
        %v2717 = vadd.f32 %v2580, %v2716
        %2718 = vmatmul.bf16.gmra.mxu0 %v2072
        %v2719 = vpop.f32.mrf.mxu0
        %v2720 = vadd.f32 %v2580, %v2719
        %v2721 = vpop.f32.mrf.mxu0
        %v2722 = vadd.f32 %v2580, %v2721
        %2723 = vmatmul.bf16.gmra.mxu0 %v2073
        %v2724 = vpop.f32.mrf.mxu0
        %v2725 = vadd.f32 %v2580, %v2724
        %v2726 = vpop.f32.mrf.mxu0
        %v2727 = vadd.f32 %v2580, %v2726
        %2728 = vmatmul.bf16.gmra.mxu0 %v2074
        %v2729 = vpop.f32.mrf.mxu0
        %v2730 = vadd.f32 %v2580, %v2729
        %v2731 = vpop.f32.mrf.mxu0
        %v2732 = vadd.f32 %v2580, %v2731
        %2733 = vmatmul.bf16.gmra.mxu0 %v2075
        %v2734 = vpop.f32.mrf.mxu0
        %v2735 = vadd.f32 %v2580, %v2734
        %v2736 = vpop.f32.mrf.mxu0
        %v2737 = vadd.f32 %v2580, %v2736
        %2738 = vmatmul.bf16.gmra.mxu0 %v2076
        %v2739 = vpop.f32.mrf.mxu0
        %v2740 = vadd.f32 %v2580, %v2739
        %v2741 = vpop.f32.mrf.mxu0
        %v2742 = vadd.f32 %v2580, %v2741
        %2743 = vmatmul.bf16.gmra.mxu0 %v2077
        %v2744 = vpop.f32.mrf.mxu0
        %v2745 = vadd.f32 %v2580, %v2744
        %v2746 = vpop.f32.mrf.mxu0
        %v2747 = vadd.f32 %v2580, %v2746
        %2748 = vmatmul.bf16.gmra.mxu0 %v2078
        %v2749 = vpop.f32.mrf.mxu0
        %v2750 = vadd.f32 %v2580, %v2749
        %v2751 = vpop.f32.mrf.mxu0
        %v2752 = vadd.f32 %v2580, %v2751
        %2753 = vmatmul.bf16.gmra.mxu0 %v2079
        %v2754 = vpop.f32.mrf.mxu0
        %v2755 = vadd.f32 %v2580, %v2754
        %v2756 = vpop.f32.mrf.mxu0
        %v2757 = vadd.f32 %v2580, %v2756
        %2758 = vmatmul.bf16.gmra.mxu0 %v2080
        %v2759 = vpop.f32.mrf.mxu0
        %v2760 = vadd.f32 %v2580, %v2759
        %v2761 = vpop.f32.mrf.mxu0
        %v2762 = vadd.f32 %v2580, %v2761
        %2763 = vmatmul.bf16.gmra.mxu0 %v2081
        %v2764 = vpop.f32.mrf.mxu0
        %v2765 = vadd.f32 %v2580, %v2764
        %v2766 = vpop.f32.mrf.mxu0
        %v2767 = vadd.f32 %v2580, %v2766
        %2768 = vmatmul.bf16.gmra.mxu0 %v2082
        %v2769 = vpop.f32.mrf.mxu0
        %v2770 = vadd.f32 %v2580, %v2769
        %v2771 = vpop.f32.mrf.mxu0
        %v2772 = vadd.f32 %v2580, %v2771
        %2773 = vmatmul.bf16.gmra.mxu0 %v2083
        %v2774 = vpop.f32.mrf.mxu0
        %v2775 = vadd.f32 %v2580, %v2774
        %v2776 = vpop.f32.mrf.mxu0
        %v2777 = vadd.f32 %v2580, %v2776
        %2778 = vmatmul.bf16.gmra.mxu0 %v2084
        %v2779 = vpop.f32.mrf.mxu0
        %v2780 = vadd.f32 %v2580, %v2779
        %v2781 = vpop.f32.mrf.mxu0
        %v2782 = vadd.f32 %v2580, %v2781
        %2783 = vmatmul.bf16.gmra.mxu0 %v2085
        %v2784 = vpop.f32.mrf.mxu0
        %v2785 = vadd.f32 %v2580, %v2784
        %v2786 = vpop.f32.mrf.mxu0
        %v2787 = vadd.f32 %v2580, %v2786
        %2788 = vmatmul.bf16.gmra.mxu0 %v2086
        %v2789 = vpop.f32.mrf.mxu0
        %v2790 = vadd.f32 %v2580, %v2789
        %v2791 = vpop.f32.mrf.mxu0
        %v2792 = vadd.f32 %v2580, %v2791
        %2793 = vmatmul.bf16.gmra.mxu0 %v2087
        %v2794 = vpop.f32.mrf.mxu0
        %v2795 = vadd.f32 %v2580, %v2794
        %v2796 = vpop.f32.mrf.mxu0
        %v2797 = vadd.f32 %v2580, %v2796
        %2798 = vdwg.mxu0
        %v2799 = vmul.f32 %v2166, 0.17677669
        %v2800 = vmul.f32 %v2168, 0.17677669
        %v2801 = vmul.f32 %v2171, 0.17677669
        %v2802 = vmul.f32 %v2173, 0.17677669
        %v2803 = vmul.f32 %v2176, 0.17677669
        %v2804 = vmul.f32 %v2178, 0.17677669
        %v2805 = vmul.f32 %v2181, 0.17677669
        %v2806 = vmul.f32 %v2183, 0.17677669
        %v2807 = vmul.f32 %v2186, 0.17677669
        %v2808 = vmul.f32 %v2188, 0.17677669
        %v2809 = vmul.f32 %v2191, 0.17677669
        %v2810 = vmul.f32 %v2193, 0.17677669
        %v2811 = vmul.f32 %v2196, 0.17677669
        %v2812 = vmul.f32 %v2198, 0.17677669
        %v2813 = vmul.f32 %v2201, 0.17677669
        %v2814 = vmul.f32 %v2203, 0.17677669
        %v2815 = vmul.f32 %v2206, 0.17677669
        %v2816 = vmul.f32 %v2208, 0.17677669
        %v2817 = vmul.f32 %v2211, 0.17677669
        %v2818 = vmul.f32 %v2213, 0.17677669
        %v2819 = vmul.f32 %v2216, 0.17677669
        %v2820 = vmul.f32 %v2218, 0.17677669
        %v2821 = vmul.f32 %v2221, 0.17677669
        %v2822 = vmul.f32 %v2223, 0.17677669
        %v2823 = vmul.f32 %v2226, 0.17677669
        %v2824 = vmul.f32 %v2228, 0.17677669
        %v2825 = vmul.f32 %v2231, 0.17677669
        %v2826 = vmul.f32 %v2233, 0.17677669
        %v2827 = vmul.f32 %v2236, 0.17677669
        %v2828 = vmul.f32 %v2238, 0.17677669
        %v2829 = vmul.f32 %v2241, 0.17677669
        %v2830 = vmul.f32 %v2243, 0.17677669
        %v2831 = vmul.f32 %v2246, 0.17677669
        %v2832 = vmul.f32 %v2248, 0.17677669
        %v2833 = vmul.f32 %v2251, 0.17677669
        %v2834 = vmul.f32 %v2253, 0.17677669
        %v2835 = vmul.f32 %v2256, 0.17677669
        %v2836 = vmul.f32 %v2258, 0.17677669
        %v2837 = vmul.f32 %v2261, 0.17677669
        %v2838 = vmul.f32 %v2263, 0.17677669
        %v2839 = vmul.f32 %v2266, 0.17677669
        %v2840 = vmul.f32 %v2268, 0.17677669
        %v2841 = vmul.f32 %v2271, 0.17677669
        %v2842 = vmul.f32 %v2273, 0.17677669
        %v2843 = vmul.f32 %v2276, 0.17677669
        %v2844 = vmul.f32 %v2278, 0.17677669
        %v2845 = vmul.f32 %v2281, 0.17677669
        %v2846 = vmul.f32 %v2283, 0.17677669
        %v2847 = vmul.f32 %v2286, 0.17677669
        %v2848 = vmul.f32 %v2288, 0.17677669
        %v2849 = vmul.f32 %v2291, 0.17677669
        %v2850 = vmul.f32 %v2293, 0.17677669
        %v2851 = vmul.f32 %v2296, 0.17677669
        %v2852 = vmul.f32 %v2298, 0.17677669
        %v2853 = vmul.f32 %v2301, 0.17677669
        %v2854 = vmul.f32 %v2303, 0.17677669
        %v2855 = vmul.f32 %v2306, 0.17677669
        %v2856 = vmul.f32 %v2308, 0.17677669
        %v2857 = vmul.f32 %v2311, 0.17677669
        %v2858 = vmul.f32 %v2313, 0.17677669
        %v2859 = vmul.f32 %v2316, 0.17677669
        %v2860 = vmul.f32 %v2318, 0.17677669
        %v2861 = vmul.f32 %v2321, 0.17677669
        %v2862 = vmul.f32 %v2323, 0.17677669
        %v2863 = vpack.c.bf16 %v2799, %v2799
        %v2864 = vpack.c.bf16 %v2800, %v2800
        %v2865 = vpack.c.bf16 %v2801, %v2801
        %v2866 = vpack.c.bf16 %v2802, %v2802
        %v2867 = vpack.c.bf16 %v2803, %v2803
        %v2868 = vpack.c.bf16 %v2804, %v2804
        %v2869 = vpack.c.bf16 %v2805, %v2805
        %v2870 = vpack.c.bf16 %v2806, %v2806
        %v2871 = vpack.c.bf16 %v2807, %v2807
        %v2872 = vpack.c.bf16 %v2808, %v2808
        %v2873 = vpack.c.bf16 %v2809, %v2809
        %v2874 = vpack.c.bf16 %v2810, %v2810
        %v2875 = vpack.c.bf16 %v2811, %v2811
        %v2876 = vpack.c.bf16 %v2812, %v2812
        %v2877 = vpack.c.bf16 %v2813, %v2813
        %v2878 = vpack.c.bf16 %v2814, %v2814
        %v2879 = vpack.c.bf16 %v2815, %v2815
        %v2880 = vpack.c.bf16 %v2816, %v2816
        %v2881 = vpack.c.bf16 %v2817, %v2817
        %v2882 = vpack.c.bf16 %v2818, %v2818
        %v2883 = vpack.c.bf16 %v2819, %v2819
        %v2884 = vpack.c.bf16 %v2820, %v2820
        %v2885 = vpack.c.bf16 %v2821, %v2821
        %v2886 = vpack.c.bf16 %v2822, %v2822
        %v2887 = vpack.c.bf16 %v2823, %v2823
        %v2888 = vpack.c.bf16 %v2824, %v2824
        %v2889 = vpack.c.bf16 %v2825, %v2825
        %v2890 = vpack.c.bf16 %v2826, %v2826
        %v2891 = vpack.c.bf16 %v2827, %v2827
        %v2892 = vpack.c.bf16 %v2828, %v2828
        %v2893 = vpack.c.bf16 %v2829, %v2829
        %v2894 = vpack.c.bf16 %v2830, %v2830
        %v2895 = vpack.c.bf16 %v2831, %v2831
        %v2896 = vpack.c.bf16 %v2832, %v2832
        %v2897 = vpack.c.bf16 %v2833, %v2833
        %v2898 = vpack.c.bf16 %v2834, %v2834
        %v2899 = vpack.c.bf16 %v2835, %v2835
        %v2900 = vpack.c.bf16 %v2836, %v2836
        %v2901 = vpack.c.bf16 %v2837, %v2837
        %v2902 = vpack.c.bf16 %v2838, %v2838
        %v2903 = vpack.c.bf16 %v2839, %v2839
        %v2904 = vpack.c.bf16 %v2840, %v2840
        %v2905 = vpack.c.bf16 %v2841, %v2841
        %v2906 = vpack.c.bf16 %v2842, %v2842
        %v2907 = vpack.c.bf16 %v2843, %v2843
        %v2908 = vpack.c.bf16 %v2844, %v2844
        %v2909 = vpack.c.bf16 %v2845, %v2845
        %v2910 = vpack.c.bf16 %v2846, %v2846
        %v2911 = vpack.c.bf16 %v2847, %v2847
        %v2912 = vpack.c.bf16 %v2848, %v2848
        %v2913 = vpack.c.bf16 %v2849, %v2849
        %v2914 = vpack.c.bf16 %v2850, %v2850
        %v2915 = vpack.c.bf16 %v2851, %v2851
        %v2916 = vpack.c.bf16 %v2852, %v2852
        %v2917 = vpack.c.bf16 %v2853, %v2853
        %v2918 = vpack.c.bf16 %v2854, %v2854
        %v2919 = vpack.c.bf16 %v2855, %v2855
        %v2920 = vpack.c.bf16 %v2856, %v2856
        %v2921 = vpack.c.bf16 %v2857, %v2857
        %v2922 = vpack.c.bf16 %v2858, %v2858
        %v2923 = vpack.c.bf16 %v2859, %v2859
        %v2924 = vpack.c.bf16 %v2860, %v2860
        %v2925 = vpack.c.bf16 %v2861, %v2861
        %v2926 = vpack.c.bf16 %v2862, %v2862
        %2927 = vst [vmem:[%s549] sm:$0xf] %v2863
        %2928 = vst [vmem:[%s549 + $0x4] sm:$0xf] %v2864
        %2929 = vst [vmem:[%s549 + $0x8] sm:$0xf] %v2865
        %2930 = vst [vmem:[%s549 + $0xc] sm:$0xf] %v2866
        %2931 = vst [vmem:[%s549 + $0x10] sm:$0xf] %v2867
        %2932 = vst [vmem:[%s549 + $0x14] sm:$0xf] %v2868
        %2933 = vst [vmem:[%s549 + $0x18] sm:$0xf] %v2869
        %2934 = vst [vmem:[%s549 + $0x1c] sm:$0xf] %v2870
        %2935 = vst [vmem:[%s549 + $0x20] sm:$0xf] %v2871
        %2936 = vst [vmem:[%s549 + $0x24] sm:$0xf] %v2872
        %2937 = vst [vmem:[%s549 + $0x28] sm:$0xf] %v2873
        %2938 = vst [vmem:[%s549 + $0x2c] sm:$0xf] %v2874
        %2939 = vst [vmem:[%s549 + $0x30] sm:$0xf] %v2875
        %2940 = vst [vmem:[%s549 + $0x34] sm:$0xf] %v2876
        %2941 = vst [vmem:[%s549 + $0x38] sm:$0xf] %v2877
        %2942 = vst [vmem:[%s549 + $0x3c] sm:$0xf] %v2878
        %2943 = vst [vmem:[%s549 + $0x40] sm:$0xf] %v2879
        %2944 = vst [vmem:[%s549 + $0x44] sm:$0xf] %v2880
        %2945 = vst [vmem:[%s549 + $0x48] sm:$0xf] %v2881
        %2946 = vst [vmem:[%s549 + $0x4c] sm:$0xf] %v2882
        %2947 = vst [vmem:[%s549 + $0x50] sm:$0xf] %v2883
        %2948 = vst [vmem:[%s549 + $0x54] sm:$0xf] %v2884
        %2949 = vst [vmem:[%s549 + $0x58] sm:$0xf] %v2885
        %2950 = vst [vmem:[%s549 + $0x5c] sm:$0xf] %v2886
        %2951 = vst [vmem:[%s549 + $0x60] sm:$0xf] %v2887
        %2952 = vst [vmem:[%s549 + $0x64] sm:$0xf] %v2888
        %2953 = vst [vmem:[%s549 + $0x68] sm:$0xf] %v2889
        %2954 = vst [vmem:[%s549 + $0x6c] sm:$0xf] %v2890
        %2955 = vst [vmem:[%s549 + $0x70] sm:$0xf] %v2891
        %2956 = vst [vmem:[%s549 + $0x74] sm:$0xf] %v2892
        %2957 = vst [vmem:[%s549 + $0x78] sm:$0xf] %v2893
        %2958 = vst [vmem:[%s549 + $0x7c] sm:$0xf] %v2894
        %2959 = vst [vmem:[%s549 + $0x80] sm:$0xf] %v2895
        %2960 = vst [vmem:[%s549 + $0x84] sm:$0xf] %v2896
        %2961 = vst [vmem:[%s549 + $0x88] sm:$0xf] %v2897
        %2962 = vst [vmem:[%s549 + $0x8c] sm:$0xf] %v2898
        %2963 = vst [vmem:[%s549 + $0x90] sm:$0xf] %v2899
        %2964 = vst [vmem:[%s549 + $0x94] sm:$0xf] %v2900
        %2965 = vst [vmem:[%s549 + $0x98] sm:$0xf] %v2901
        %2966 = vst [vmem:[%s549 + $0x9c] sm:$0xf] %v2902
        %2967 = vst [vmem:[%s549 + $0xa0] sm:$0xf] %v2903
        %2968 = vst [vmem:[%s549 + $0xa4] sm:$0xf] %v2904
        %2969 = vst [vmem:[%s549 + $0xa8] sm:$0xf] %v2905
        %2970 = vst [vmem:[%s549 + $0xac] sm:$0xf] %v2906
        %2971 = vst [vmem:[%s549 + $0xb0] sm:$0xf] %v2907
        %2972 = vst [vmem:[%s549 + $0xb4] sm:$0xf] %v2908
        %2973 = vst [vmem:[%s549 + $0xb8] sm:$0xf] %v2909
        %2974 = vst [vmem:[%s549 + $0xbc] sm:$0xf] %v2910
        %2975 = vst [vmem:[%s549 + $0xc0] sm:$0xf] %v2911
        %2976 = vst [vmem:[%s549 + $0xc4] sm:$0xf] %v2912
        %2977 = vst [vmem:[%s549 + $0xc8] sm:$0xf] %v2913
        %2978 = vst [vmem:[%s549 + $0xcc] sm:$0xf] %v2914
        %2979 = vst [vmem:[%s549 + $0xd0] sm:$0xf] %v2915
        %2980 = vst [vmem:[%s549 + $0xd4] sm:$0xf] %v2916
        %2981 = vst [vmem:[%s549 + $0xd8] sm:$0xf] %v2917
        %2982 = vst [vmem:[%s549 + $0xdc] sm:$0xf] %v2918
        %2983 = vst [vmem:[%s549 + $0xe0] sm:$0xf] %v2919
        %2984 = vst [vmem:[%s549 + $0xe4] sm:$0xf] %v2920
        %2985 = vst [vmem:[%s549 + $0xe8] sm:$0xf] %v2921
        %2986 = vst [vmem:[%s549 + $0xec] sm:$0xf] %v2922
        %2987 = vst [vmem:[%s549 + $0xf0] sm:$0xf] %v2923
        %2988 = vst [vmem:[%s549 + $0xf4] sm:$0xf] %v2924
        %2989 = vst [vmem:[%s549 + $0xf8] sm:$0xf] %v2925
        %2990 = vst [vmem:[%s549 + $0xfc] sm:$0xf] %v2926
        %v2991 = vpack.c.bf16 %v2403, %v2403
        %v2992 = vpack.c.bf16 %v2405, %v2405
        %v2993 = vpack.c.bf16 %v2408, %v2408
        %v2994 = vpack.c.bf16 %v2410, %v2410
        %v2995 = vpack.c.bf16 %v2413, %v2413
        %v2996 = vpack.c.bf16 %v2415, %v2415
        %v2997 = vpack.c.bf16 %v2418, %v2418
        %v2998 = vpack.c.bf16 %v2420, %v2420
        %v2999 = vpack.c.bf16 %v2423, %v2423
        %v3000 = vpack.c.bf16 %v2425, %v2425
        %v3001 = vpack.c.bf16 %v2428, %v2428
        %v3002 = vpack.c.bf16 %v2430, %v2430
        %v3003 = vpack.c.bf16 %v2433, %v2433
        %v3004 = vpack.c.bf16 %v2435, %v2435
        %v3005 = vpack.c.bf16 %v2438, %v2438
        %v3006 = vpack.c.bf16 %v2440, %v2440
        %v3007 = vpack.c.bf16 %v2443, %v2443
        %v3008 = vpack.c.bf16 %v2445, %v2445
        %v3009 = vpack.c.bf16 %v2448, %v2448
        %v3010 = vpack.c.bf16 %v2450, %v2450
        %v3011 = vpack.c.bf16 %v2453, %v2453
        %v3012 = vpack.c.bf16 %v2455, %v2455
        %v3013 = vpack.c.bf16 %v2458, %v2458
        %v3014 = vpack.c.bf16 %v2460, %v2460
        %v3015 = vpack.c.bf16 %v2463, %v2463
        %v3016 = vpack.c.bf16 %v2465, %v2465
        %v3017 = vpack.c.bf16 %v2468, %v2468
        %v3018 = vpack.c.bf16 %v2470, %v2470
        %v3019 = vpack.c.bf16 %v2473, %v2473
        %v3020 = vpack.c.bf16 %v2475, %v2475
        %v3021 = vpack.c.bf16 %v2478, %v2478
        %v3022 = vpack.c.bf16 %v2480, %v2480
        %v3023 = vpack.c.bf16 %v2483, %v2483
        %v3024 = vpack.c.bf16 %v2485, %v2485
        %v3025 = vpack.c.bf16 %v2488, %v2488
        %v3026 = vpack.c.bf16 %v2490, %v2490
        %v3027 = vpack.c.bf16 %v2493, %v2493
        %v3028 = vpack.c.bf16 %v2495, %v2495
        %v3029 = vpack.c.bf16 %v2498, %v2498
        %v3030 = vpack.c.bf16 %v2500, %v2500
        %v3031 = vpack.c.bf16 %v2503, %v2503
        %v3032 = vpack.c.bf16 %v2505, %v2505
        %v3033 = vpack.c.bf16 %v2508, %v2508
        %v3034 = vpack.c.bf16 %v2510, %v2510
        %v3035 = vpack.c.bf16 %v2513, %v2513
        %v3036 = vpack.c.bf16 %v2515, %v2515
        %v3037 = vpack.c.bf16 %v2518, %v2518
        %v3038 = vpack.c.bf16 %v2520, %v2520
        %v3039 = vpack.c.bf16 %v2523, %v2523
        %v3040 = vpack.c.bf16 %v2525, %v2525
        %v3041 = vpack.c.bf16 %v2528, %v2528
        %v3042 = vpack.c.bf16 %v2530, %v2530
        %v3043 = vpack.c.bf16 %v2533, %v2533
        %v3044 = vpack.c.bf16 %v2535, %v2535
        %v3045 = vpack.c.bf16 %v2538, %v2538
        %v3046 = vpack.c.bf16 %v2540, %v2540
        %v3047 = vpack.c.bf16 %v2543, %v2543
        %v3048 = vpack.c.bf16 %v2545, %v2545
        %v3049 = vpack.c.bf16 %v2548, %v2548
        %v3050 = vpack.c.bf16 %v2550, %v2550
        %v3051 = vpack.c.bf16 %v2553, %v2553
        %v3052 = vpack.c.bf16 %v2555, %v2555
        %v3053 = vpack.c.bf16 %v2558, %v2558
        %v3054 = vpack.c.bf16 %v2560, %v2560
        %3055 = vst [vmem:[%s556] sm:$0xf] %v2991
        %3056 = vst [vmem:[%s556 + $0x4] sm:$0xf] %v2992
        %3057 = vst [vmem:[%s556 + $0x8] sm:$0xf] %v2993
        %3058 = vst [vmem:[%s556 + $0xc] sm:$0xf] %v2994
        %3059 = vst [vmem:[%s556 + $0x10] sm:$0xf] %v2995
        %3060 = vst [vmem:[%s556 + $0x14] sm:$0xf] %v2996
        %3061 = vst [vmem:[%s556 + $0x18] sm:$0xf] %v2997
        %3062 = vst [vmem:[%s556 + $0x1c] sm:$0xf] %v2998
        %3063 = vst [vmem:[%s556 + $0x20] sm:$0xf] %v2999
        %3064 = vst [vmem:[%s556 + $0x24] sm:$0xf] %v3000
        %3065 = vst [vmem:[%s556 + $0x28] sm:$0xf] %v3001
        %3066 = vst [vmem:[%s556 + $0x2c] sm:$0xf] %v3002
        %3067 = vst [vmem:[%s556 + $0x30] sm:$0xf] %v3003
        %3068 = vst [vmem:[%s556 + $0x34] sm:$0xf] %v3004
        %3069 = vst [vmem:[%s556 + $0x38] sm:$0xf] %v3005
        %3070 = vst [vmem:[%s556 + $0x3c] sm:$0xf] %v3006
        %3071 = vst [vmem:[%s556 + $0x40] sm:$0xf] %v3007
        %3072 = vst [vmem:[%s556 + $0x44] sm:$0xf] %v3008
        %3073 = vst [vmem:[%s556 + $0x48] sm:$0xf] %v3009
        %3074 = vst [vmem:[%s556 + $0x4c] sm:$0xf] %v3010
        %3075 = vst [vmem:[%s556 + $0x50] sm:$0xf] %v3011
        %3076 = vst [vmem:[%s556 + $0x54] sm:$0xf] %v3012
        %3077 = vst [vmem:[%s556 + $0x58] sm:$0xf] %v3013
        %3078 = vst [vmem:[%s556 + $0x5c] sm:$0xf] %v3014
        %3079 = vst [vmem:[%s556 + $0x60] sm:$0xf] %v3015
        %3080 = vst [vmem:[%s556 + $0x64] sm:$0xf] %v3016
        %3081 = vst [vmem:[%s556 + $0x68] sm:$0xf] %v3017
        %3082 = vst [vmem:[%s556 + $0x6c] sm:$0xf] %v3018
        %3083 = vst [vmem:[%s556 + $0x70] sm:$0xf] %v3019
        %3084 = vst [vmem:[%s556 + $0x74] sm:$0xf] %v3020
        %3085 = vst [vmem:[%s556 + $0x78] sm:$0xf] %v3021
        %3086 = vst [vmem:[%s556 + $0x7c] sm:$0xf] %v3022
        %3087 = vst [vmem:[%s556 + $0x80] sm:$0xf] %v3023
        %3088 = vst [vmem:[%s556 + $0x84] sm:$0xf] %v3024
        %3089 = vst [vmem:[%s556 + $0x88] sm:$0xf] %v3025
        %3090 = vst [vmem:[%s556 + $0x8c] sm:$0xf] %v3026
        %3091 = vst [vmem:[%s556 + $0x90] sm:$0xf] %v3027
        %3092 = vst [vmem:[%s556 + $0x94] sm:$0xf] %v3028
        %3093 = vst [vmem:[%s556 + $0x98] sm:$0xf] %v3029
        %3094 = vst [vmem:[%s556 + $0x9c] sm:$0xf] %v3030
        %3095 = vst [vmem:[%s556 + $0xa0] sm:$0xf] %v3031
        %3096 = vst [vmem:[%s556 + $0xa4] sm:$0xf] %v3032
        %3097 = vst [vmem:[%s556 + $0xa8] sm:$0xf] %v3033
        %3098 = vst [vmem:[%s556 + $0xac] sm:$0xf] %v3034
        %3099 = vst [vmem:[%s556 + $0xb0] sm:$0xf] %v3035
        %3100 = vst [vmem:[%s556 + $0xb4] sm:$0xf] %v3036
        %3101 = vst [vmem:[%s556 + $0xb8] sm:$0xf] %v3037
        %3102 = vst [vmem:[%s556 + $0xbc] sm:$0xf] %v3038
        %3103 = vst [vmem:[%s556 + $0xc0] sm:$0xf] %v3039
        %3104 = vst [vmem:[%s556 + $0xc4] sm:$0xf] %v3040
        %3105 = vst [vmem:[%s556 + $0xc8] sm:$0xf] %v3041
        %3106 = vst [vmem:[%s556 + $0xcc] sm:$0xf] %v3042
        %3107 = vst [vmem:[%s556 + $0xd0] sm:$0xf] %v3043
        %3108 = vst [vmem:[%s556 + $0xd4] sm:$0xf] %v3044
        %3109 = vst [vmem:[%s556 + $0xd8] sm:$0xf] %v3045
        %3110 = vst [vmem:[%s556 + $0xdc] sm:$0xf] %v3046
        %3111 = vst [vmem:[%s556 + $0xe0] sm:$0xf] %v3047
        %3112 = vst [vmem:[%s556 + $0xe4] sm:$0xf] %v3048
        %3113 = vst [vmem:[%s556 + $0xe8] sm:$0xf] %v3049
        %3114 = vst [vmem:[%s556 + $0xec] sm:$0xf] %v3050
        %3115 = vst [vmem:[%s556 + $0xf0] sm:$0xf] %v3051
        %3116 = vst [vmem:[%s556 + $0xf4] sm:$0xf] %v3052
        %3117 = vst [vmem:[%s556 + $0xf8] sm:$0xf] %v3053
        %3118 = vst [vmem:[%s556 + $0xfc] sm:$0xf] %v3054
        %v3119 = vpack.c.bf16 %v2640, %v2640
        %v3120 = vpack.c.bf16 %v2642, %v2642
        %v3121 = vpack.c.bf16 %v2645, %v2645
        %v3122 = vpack.c.bf16 %v2647, %v2647
        %v3123 = vpack.c.bf16 %v2650, %v2650
        %v3124 = vpack.c.bf16 %v2652, %v2652
        %v3125 = vpack.c.bf16 %v2655, %v2655
        %v3126 = vpack.c.bf16 %v2657, %v2657
        %v3127 = vpack.c.bf16 %v2660, %v2660
        %v3128 = vpack.c.bf16 %v2662, %v2662
        %v3129 = vpack.c.bf16 %v2665, %v2665
        %v3130 = vpack.c.bf16 %v2667, %v2667
        %v3131 = vpack.c.bf16 %v2670, %v2670
        %v3132 = vpack.c.bf16 %v2672, %v2672
        %v3133 = vpack.c.bf16 %v2675, %v2675
        %v3134 = vpack.c.bf16 %v2677, %v2677
        %v3135 = vpack.c.bf16 %v2680, %v2680
        %v3136 = vpack.c.bf16 %v2682, %v2682
        %v3137 = vpack.c.bf16 %v2685, %v2685
        %v3138 = vpack.c.bf16 %v2687, %v2687
        %v3139 = vpack.c.bf16 %v2690, %v2690
        %v3140 = vpack.c.bf16 %v2692, %v2692
        %v3141 = vpack.c.bf16 %v2695, %v2695
        %v3142 = vpack.c.bf16 %v2697, %v2697
        %v3143 = vpack.c.bf16 %v2700, %v2700
        %v3144 = vpack.c.bf16 %v2702, %v2702
        %v3145 = vpack.c.bf16 %v2705, %v2705
        %v3146 = vpack.c.bf16 %v2707, %v2707
        %v3147 = vpack.c.bf16 %v2710, %v2710
        %v3148 = vpack.c.bf16 %v2712, %v2712
        %v3149 = vpack.c.bf16 %v2715, %v2715
        %v3150 = vpack.c.bf16 %v2717, %v2717
        %v3151 = vpack.c.bf16 %v2720, %v2720
        %v3152 = vpack.c.bf16 %v2722, %v2722
        %v3153 = vpack.c.bf16 %v2725, %v2725
        %v3154 = vpack.c.bf16 %v2727, %v2727
        %v3155 = vpack.c.bf16 %v2730, %v2730
        %v3156 = vpack.c.bf16 %v2732, %v2732
        %v3157 = vpack.c.bf16 %v2735, %v2735
        %v3158 = vpack.c.bf16 %v2737, %v2737
        %v3159 = vpack.c.bf16 %v2740, %v2740
        %v3160 = vpack.c.bf16 %v2742, %v2742
        %v3161 = vpack.c.bf16 %v2745, %v2745
        %v3162 = vpack.c.bf16 %v2747, %v2747
        %v3163 = vpack.c.bf16 %v2750, %v2750
        %v3164 = vpack.c.bf16 %v2752, %v2752
        %v3165 = vpack.c.bf16 %v2755, %v2755
        %v3166 = vpack.c.bf16 %v2757, %v2757
        %v3167 = vpack.c.bf16 %v2760, %v2760
        %v3168 = vpack.c.bf16 %v2762, %v2762
        %v3169 = vpack.c.bf16 %v2765, %v2765
        %v3170 = vpack.c.bf16 %v2767, %v2767
        %v3171 = vpack.c.bf16 %v2770, %v2770
        %v3172 = vpack.c.bf16 %v2772, %v2772
        %v3173 = vpack.c.bf16 %v2775, %v2775
        %v3174 = vpack.c.bf16 %v2777, %v2777
        %v3175 = vpack.c.bf16 %v2780, %v2780
        %v3176 = vpack.c.bf16 %v2782, %v2782
        %v3177 = vpack.c.bf16 %v2785, %v2785
        %v3178 = vpack.c.bf16 %v2787, %v2787
        %v3179 = vpack.c.bf16 %v2790, %v2790
        %v3180 = vpack.c.bf16 %v2792, %v2792
        %v3181 = vpack.c.bf16 %v2795, %v2795
        %v3182 = vpack.c.bf16 %v2797, %v2797
        %3183 = vst [vmem:[%s563] sm:$0xf] %v3119
        %3184 = vst [vmem:[%s563 + $0x4] sm:$0xf] %v3120
        %3185 = vst [vmem:[%s563 + $0x8] sm:$0xf] %v3121
        %3186 = vst [vmem:[%s563 + $0xc] sm:$0xf] %v3122
        %3187 = vst [vmem:[%s563 + $0x10] sm:$0xf] %v3123
        %3188 = vst [vmem:[%s563 + $0x14] sm:$0xf] %v3124
        %3189 = vst [vmem:[%s563 + $0x18] sm:$0xf] %v3125
        %3190 = vst [vmem:[%s563 + $0x1c] sm:$0xf] %v3126
        %3191 = vst [vmem:[%s563 + $0x20] sm:$0xf] %v3127
        %3192 = vst [vmem:[%s563 + $0x24] sm:$0xf] %v3128
        %3193 = vst [vmem:[%s563 + $0x28] sm:$0xf] %v3129
        %3194 = vst [vmem:[%s563 + $0x2c] sm:$0xf] %v3130
        %3195 = vst [vmem:[%s563 + $0x30] sm:$0xf] %v3131
        %3196 = vst [vmem:[%s563 + $0x34] sm:$0xf] %v3132
        %3197 = vst [vmem:[%s563 + $0x38] sm:$0xf] %v3133
        %3198 = vst [vmem:[%s563 + $0x3c] sm:$0xf] %v3134
        %3199 = vst [vmem:[%s563 + $0x40] sm:$0xf] %v3135
        %3200 = vst [vmem:[%s563 + $0x44] sm:$0xf] %v3136
        %3201 = vst [vmem:[%s563 + $0x48] sm:$0xf] %v3137
        %3202 = vst [vmem:[%s563 + $0x4c] sm:$0xf] %v3138
        %3203 = vst [vmem:[%s563 + $0x50] sm:$0xf] %v3139
        %3204 = vst [vmem:[%s563 + $0x54] sm:$0xf] %v3140
        %3205 = vst [vmem:[%s563 + $0x58] sm:$0xf] %v3141
        %3206 = vst [vmem:[%s563 + $0x5c] sm:$0xf] %v3142
        %3207 = vst [vmem:[%s563 + $0x60] sm:$0xf] %v3143
        %3208 = vst [vmem:[%s563 + $0x64] sm:$0xf] %v3144
        %3209 = vst [vmem:[%s563 + $0x68] sm:$0xf] %v3145
        %3210 = vst [vmem:[%s563 + $0x6c] sm:$0xf] %v3146
        %3211 = vst [vmem:[%s563 + $0x70] sm:$0xf] %v3147
        %3212 = vst [vmem:[%s563 + $0x74] sm:$0xf] %v3148
        %3213 = vst [vmem:[%s563 + $0x78] sm:$0xf] %v3149
        %3214 = vst [vmem:[%s563 + $0x7c] sm:$0xf] %v3150
        %3215 = vst [vmem:[%s563 + $0x80] sm:$0xf] %v3151
        %3216 = vst [vmem:[%s563 + $0x84] sm:$0xf] %v3152
        %3217 = vst [vmem:[%s563 + $0x88] sm:$0xf] %v3153
        %3218 = vst [vmem:[%s563 + $0x8c] sm:$0xf] %v3154
        %3219 = vst [vmem:[%s563 + $0x90] sm:$0xf] %v3155
        %3220 = vst [vmem:[%s563 + $0x94] sm:$0xf] %v3156
        %3221 = vst [vmem:[%s563 + $0x98] sm:$0xf] %v3157
        %3222 = vst [vmem:[%s563 + $0x9c] sm:$0xf] %v3158
        %3223 = vst [vmem:[%s563 + $0xa0] sm:$0xf] %v3159
        %3224 = vst [vmem:[%s563 + $0xa4] sm:$0xf] %v3160
        %3225 = vst [vmem:[%s563 + $0xa8] sm:$0xf] %v3161
        %3226 = vst [vmem:[%s563 + $0xac] sm:$0xf] %v3162
        %3227 = vst [vmem:[%s563 + $0xb0] sm:$0xf] %v3163
        %3228 = vst [vmem:[%s563 + $0xb4] sm:$0xf] %v3164
        %3229 = vst [vmem:[%s563 + $0xb8] sm:$0xf] %v3165
        %3230 = vst [vmem:[%s563 + $0xbc] sm:$0xf] %v3166
        %3231 = vst [vmem:[%s563 + $0xc0] sm:$0xf] %v3167
        %3232 = vst [vmem:[%s563 + $0xc4] sm:$0xf] %v3168
        %3233 = vst [vmem:[%s563 + $0xc8] sm:$0xf] %v3169
        %3234 = vst [vmem:[%s563 + $0xcc] sm:$0xf] %v3170
        %3235 = vst [vmem:[%s563 + $0xd0] sm:$0xf] %v3171
        %3236 = vst [vmem:[%s563 + $0xd4] sm:$0xf] %v3172
        %3237 = vst [vmem:[%s563 + $0xd8] sm:$0xf] %v3173
        %3238 = vst [vmem:[%s563 + $0xdc] sm:$0xf] %v3174
        %3239 = vst [vmem:[%s563 + $0xe0] sm:$0xf] %v3175
        %3240 = vst [vmem:[%s563 + $0xe4] sm:$0xf] %v3176
        %3241 = vst [vmem:[%s563 + $0xe8] sm:$0xf] %v3177
        %3242 = vst [vmem:[%s563 + $0xec] sm:$0xf] %v3178
        %3243 = vst [vmem:[%s563 + $0xf0] sm:$0xf] %v3179
        %3244 = vst [vmem:[%s563 + $0xf4] sm:$0xf] %v3180
        %3245 = vst [vmem:[%s563 + $0xf8] sm:$0xf] %v3181
        %3246 = vst [vmem:[%s563 + $0xfc] sm:$0xf] %v3182
        %s3247 = sand.u32 %s265, 1
        %s3248 = scalar_lea.sflag [#allocation4], %s3247
        %s3249 = sand.u32 %s265, 1
        %s3250 = smul.addr %s3249, 256
        %s3251 = scalar_lea.vmem [#allocation13], %s3250
        %s3252 = sand.u32 %s37, 1
        %s3253 = scalar_lea.sflag [#allocation15], %s3252
        %s3254 = sand.u32 %s293, 1
        %s3255 = smul.addr %s3254, 256
        %s3256 = scalar_lea.vmem [#allocation14], %s3255
        %s3257 = sand.u32 %s37, 1
        %s3258 = scalar_lea.sflag [#allocation15], %s3257
        %s3259 = sand.u32 %s321, 1
        %s3260 = smul.addr %s3259, 256
        %s3261 = scalar_lea.vmem [#allocation16], %s3260
        // Predicated region
        $region81: #{tpu_custom_call.1} parent=55 // pred_check
          %p3262 = pneg %p275
        $region82: #{tpu_custom_call.1} parent=55 // pred_check_branch
          %3264 = sbr.rel (%p3262) target = $region84
        $region83: #{tpu_custom_call.1} parent=55 // pred_region
          %s3265 = smul.u32 64, %s42
          %3267 = vsyncadd %s3248, 0
          %s3268 = smul.addr %s41, 64
          %s3269 = sadd.s32 %s3265, %s3268
          %s3270 = smul.addr %s3269, 4
          %s3271 = scalar_lea.hbm %s9, %s3270
          %s3272 = sshll.u32 %s3251, 4
          %s3273 = int_to_ptr.vmem [resolvable:$true] %s3272
          %s3274 = sshll.u32 %s3271, 4
          %s3275 = int_to_ptr.hbm [resolvable:$true] %s3274
          %3280 = dma.vmem_to_hbm [thread:$0]  %s3273, 4096, %s3275, %s3248, 64, 64, 4
        $region84: #{tpu_custom_call.1} parent=55 // pred_fallthru
          _
        // Predicated region
        $region85: #{tpu_custom_call.1} parent=55 // pred_check
          %p3281 = pneg %p303
        $region86: #{tpu_custom_call.1} parent=55 // pred_check_branch
          %3283 = sbr.rel (%p3281) target = $region88
        $region87: #{tpu_custom_call.1} parent=55 // pred_region
          %s3284 = smul.u32 64, %s42
          %3286 = vsyncadd %s3253, 0
          %s3287 = smul.addr %s41, 64
          %s3288 = sadd.s32 %s3284, %s3287
          %s3289 = smul.addr %s3288, 4
          %s3290 = scalar_lea.hbm %s10, %s3289
          %s3291 = sshll.u32 %s3256, 4
          %s3292 = int_to_ptr.vmem [resolvable:$true] %s3291
          %s3293 = sshll.u32 %s3290, 4
          %s3294 = int_to_ptr.hbm [resolvable:$true] %s3293
          %3299 = dma.vmem_to_hbm [thread:$0]  %s3292, 4096, %s3294, %s3253, 64, 64, 4
        $region88: #{tpu_custom_call.1} parent=55 // pred_fallthru
          _
        // Predicated region
        $region89: #{tpu_custom_call.1} parent=55 // pred_check
          %p3300 = pneg %p331
        $region90: #{tpu_custom_call.1} parent=55 // pred_check_branch
          %3302 = sbr.rel (%p3300) target = $region92
        $region91: #{tpu_custom_call.1} parent=55 // pred_region
          %s3303 = smul.u32 64, %s42
          %3305 = vsyncadd %s3258, 0
          %s3306 = smul.addr %s41, 64
          %s3307 = sadd.s32 %s3303, %s3306
          %s3308 = smul.addr %s3307, 4
          %s3309 = scalar_lea.hbm %s11, %s3308
          %s3310 = sshll.u32 %s3261, 4
          %s3311 = int_to_ptr.vmem [resolvable:$true] %s3310
          %s3312 = sshll.u32 %s3309, 4
          %s3313 = int_to_ptr.hbm [resolvable:$true] %s3312
          %3318 = dma.vmem_to_hbm [thread:$0]  %s3311, 4096, %s3313, %s3258, 64, 64, 4
        $region92: #{tpu_custom_call.1} parent=55 // pred_fallthru
          _
      $region56: #{tpu_custom_call.1} parent=5 // pred_fallthru
        _
      %p3319 = scmp.le.s32.totalorder 2, %s32
      // Predicated region
      $region93: #{tpu_custom_call.1} parent=5 // pred_check
        %p3320 = pneg %p3319
      $region94: #{tpu_custom_call.1} parent=5 // pred_check_branch
        %3322 = sbr.rel (%p3320) target = $region96
      $region95: #{tpu_custom_call.1} parent=5 // pred_region
        %s3323 = ssub.s32 %s32, 2
        // Predicated region
        $region97: #{tpu_custom_call.1} parent=95 // pred_check
          %p3324 = pneg %p281
        $region98: #{tpu_custom_call.1} parent=95 // pred_check_branch
          %3326 = sbr.rel (%p3324) target = $region100
        $region99: #{tpu_custom_call.1} parent=95 // pred_region
          %s3327 = sand.u32 %s266, 1
          %s3328 = scalar_lea.sflag [#allocation4], %s3327
          %s3329 = sand.u32 %s266, 1
          %s3330 = smul.addr %s3329, 256
          %s3331 = scalar_lea.vmem [#allocation13], %s3330
          %3333 = dma.done %s3328, 4096
        $region100: #{tpu_custom_call.1} parent=95 // pred_fallthru
          _
        // Predicated region
        $region101: #{tpu_custom_call.1} parent=95 // pred_check
          %p3334 = pneg %p309
        $region102: #{tpu_custom_call.1} parent=95 // pred_check_branch
          %3336 = sbr.rel (%p3334) target = $region104
        $region103: #{tpu_custom_call.1} parent=95 // pred_region
          %s3337 = sand.u32 %s38, 1
          %s3338 = scalar_lea.sflag [#allocation15], %s3337
          %s3339 = sand.u32 %s294, 1
          %s3340 = smul.addr %s3339, 256
          %s3341 = scalar_lea.vmem [#allocation14], %s3340
          %3343 = dma.done %s3338, 4096
        $region104: #{tpu_custom_call.1} parent=95 // pred_fallthru
          _
        // Predicated region
        $region105: #{tpu_custom_call.1} parent=95 // pred_check
          %p3344 = pneg %p337
        $region106: #{tpu_custom_call.1} parent=95 // pred_check_branch
          %3346 = sbr.rel (%p3344) target = $region108
        $region107: #{tpu_custom_call.1} parent=95 // pred_region
          %s3347 = sand.u32 %s38, 1
          %s3348 = scalar_lea.sflag [#allocation15], %s3347
          %s3349 = sand.u32 %s322, 1
          %s3350 = smul.addr %s3349, 256
          %s3351 = scalar_lea.vmem [#allocation16], %s3350
          %3353 = dma.done %s3348, 4096
        $region108: #{tpu_custom_call.1} parent=95 // pred_fallthru
          _
      $region96: #{tpu_custom_call.1} parent=5 // pred_fallthru
        _
    $region6: #{tpu_custom_call.1} parent=1 // loop_footer
      %s36 = sadd.s32 1, %s32
    $region7: #{tpu_custom_call.1} parent=1 // loop_footer_branch
      %31 = sbr.rel target = $region3
    $region8: #{tpu_custom_call.1} parent=1 // loop_exit
      _
    %3354 = vsyncpa [#allocation3], 1
    %s3355 = scalar_lea.sflag [#allocation3], 1
    %3356 = vsyncpa %s3355, 1
    %3357 = vsyncpa [#allocation6], 1
    %s3358 = scalar_lea.sflag [#allocation6], 1
    %3359 = vsyncpa %s3358, 1
    %3360 = vsyncpa [#allocation9], 1
    %3361 = vsyncpa [#allocation12], 1
    %3362 = vsyncpa [#allocation4], 1
    %s3363 = scalar_lea.sflag [#allocation4], 1
    %3364 = vsyncpa %s3363, 1
    %3365 = vsyncpa [#allocation15], 1
    %s3366 = scalar_lea.sflag [#allocation15], 1
    %3367 = vsyncpa %s3366, 1

</llo_original>
